<compile_context>
chip_gen: v7x
topology: tpu7x:2x2x1
jax: 0.10.0
libtpu: 0.0.40
codegen_flags: <defaults>
</compile_context>

<pallas_src>
import numpy as np
import jax
import jax.numpy as jnp
from jax import lax
from jax.experimental import pallas as pl
from jax.experimental.pallas import tpu as pltpu

# ----------------------------- configuration --------------------------------
N_BRANCH_CHANNELS = 4
KERNEL_SIZE = 3
P = 16                      # DeepONet basis size p (branch/trunk output = 2p)
L = 101                     # spatial length of the forcing signal
LPAD = 128                  # lane-padded length used inside the kernel
TRUNK_HIDDEN = 256
BETA = 6.0
E_TRAIN = 1.0
NU = 0.3
PREF = E_TRAIN / (1.0 - NU ** 2)
W_INT = 1.0
W_FORCING = 1.0
F32 = jnp.float32
BF16 = jnp.bfloat16

# packed conv-parameter offsets inside the single SMEM vector
_WC1_OFF = 0
_BC1_OFF = _WC1_OFF + N_BRANCH_CHANNELS * 3 * KERNEL_SIZE            # 36
_WC2_OFF = _BC1_OFF + N_BRANCH_CHANNELS                              # 40
_BC2_OFF = _WC2_OFF + N_BRANCH_CHANNELS * N_BRANCH_CHANNELS * KERNEL_SIZE  # 88
_CP_LEN = _BC2_OFF + N_BRANCH_CHANNELS                               # 92


# ----------------------------- pallas plumbing -------------------------------
def _vmem_spec(shape):
    return pl.BlockSpec(shape, lambda i: (0,) * len(shape))


def _smem_spec():
    return pl.BlockSpec(memory_space=pltpu.MemorySpace.SMEM)


# ----------------------------- fused kernel ----------------------------------
def make_physics_loss_kernel(B, nt, ni, ni_rows, nf, pref, nu, beta,
                             w_int, w_forcing):
    """Builds the fused PhysicsLoss kernel (all sizes are compile-time)."""
    p = P
    inv_beta = 1.0 / beta
    denom_int = float(B * max(ni, 1))
    denom_f = float(B * max(nf, 1))
    c_plus = 0.5 * (1.0 + nu)
    c_minus = 0.5 * (1.0 - nu)
    cin, cmid, ks = 3, N_BRANCH_CHANNELS, KERNEL_SIZE

    def kernel(gxy_ref, resid_ref, xy_ref, cp_ref,
               wl1_ref, wl23_ref, bsm_ref,
               wt1_ref, bt12_ref, wt2_ref, wt3_ref,
               out_ref):
        # ---------------- branch network (conv as shifted-accumulate) --------
        lane = lax.broadcasted_iota(jnp.int32, (1, LPAD), 1)
        in_bounds = lane < L                                   # valid lanes
        yc = jnp.where(in_bounds, lane.astype(F32) * (1.0 / (L - 1)), 0.0)
        yc = jnp.broadcast_to(yc, (B, LPAD))
        chans = [gxy_ref[0:B, :], gxy_ref[B:2 * B, :], yc]     # zero beyond L-1

        def conv_same(chs, w_off, b_off, n_in, n_out):
            # PyTorch Conv1d 'same' zero padding: out[l] = b + sum_j w[j]*in[l+j-1].
            # Inputs are zeroed at lanes >= L, so the circular rolls reproduce
            # exact zero padding at both logical boundaries.
            taps = []
            for ch in chs:
                left = pltpu.roll(ch, shift=1, axis=1)          # out[l] = ch[l-1]
                right = pltpu.roll(ch, shift=LPAD - 1, axis=1)  # out[l] = ch[l+1]
                taps.append((left, ch, right))                  # taps j = 0,1,2
            outs = []
            for o in range(n_out):
                # one partial sum per input channel -> short, parallel FMA chains
                parts = []
                for c in range(n_in):
                    base = w_off + (o * n_in + c) * ks
                    parts.append(cp_ref[base + 0] * taps[c][0]
                                 + cp_ref[base + 1] * taps[c][1]
                                 + cp_ref[base + 2] * taps[c][2])
                acc = parts[0]
                for pa in parts[1:]:
                    acc = acc + pa
                outs.append(acc + cp_ref[b_off + o])            # bias added once
            return outs

        h1 = conv_same(chans, _WC1_OFF, _BC1_OFF, cin, cmid)
        h1 = [jnp.where(in_bounds, jnp.tanh(h), 0.0) for h in h1]
        h2 = [jnp.tanh(h) for h in conv_same(h1, _WC2_OFF, _BC2_OFF, cmid, cmid)]

        # Flatten + Linear1 as ONE matmul: channels concatenated along lanes,
        # Wl1 stored as (cmid*LPAD, 2p) with zero rows for padded lanes, so
        # garbage lanes >= L contribute nothing.
        h2cat = jnp.concatenate(h2, axis=1)                     # (B, cmid*LPAD)
        bl1, bl2 = bsm_ref[0:1, :], bsm_ref[1:2, :]
        bl3, bt3 = bsm_ref[2:3, :], bsm_ref[3:4, :]
        zb = jnp.tanh(jnp.dot(h2cat, wl1_ref[...],
                              preferred_element_type=F32) + bl1)
        zb = jnp.tanh(jnp.dot(zb, wl23_ref[0:2 * p, :],
                              preferred_element_type=F32) + bl2)
        b_out = (jnp.dot(zb, wl23_ref[2 * p:4 * p, :],
                         preferred_element_type=F32) + bl3)     # (B, 2p)

        # ------------- trunk MLP + analytic 1st/2nd derivatives --------------
        # Layer 1: exploit seed structure -> only the value stream needs a
        # matmul; d/dx,d/dy pre-activations are Wt1 rows, Hessian seeds are 0.
        w0 = wt1_ref[0:1, :]                                    # (1, 256)
        w1 = wt1_ref[1:2, :]
        bt1, bt2 = bt12_ref[0:1, :], bt12_ref[1:2, :]
        pre_v = jnp.dot(xy_ref[...], wt1_ref[...],
                        preferred_element_type=F32)             # (nt, 256)
        z = jnp.tanh(pre_v + bt1)
        s = 1.0 - z * z                                         # tanh'
        cd = -2.0 * z * s                                       # tanh''
        w00, w01, w11 = w0 * w0, w0 * w1, w1 * w1
        stacked = jnp.concatenate(
            [z, s * w0, s * w1, cd * w00, cd * w01, cd * w11], axis=0)  # (6nt,256)

        # Layer 2 (hidden, tanh) -- bf16 MXU matmul, f32 accumulation.
        pre = jnp.dot(stacked.astype(BF16), wt2_ref[...],
                      preferred_element_type=F32)               # (6nt, 256)
        z = jnp.tanh(pre[0:nt] + bt2)
        s = 1.0 - z * z
        cd = -2.0 * z * s
        px, py = pre[nt:2 * nt], pre[2 * nt:3 * nt]
        pxx, pxy, pyy = pre[3 * nt:4 * nt], pre[4 * nt:5 * nt], pre[5 * nt:6 * nt]
        stacked = jnp.concatenate(
            [z, s * px, s * py,
             s * pxx + cd * px * px,
             s * pxy + cd * px * py,
             s * pyy + cd * py * py], axis=0)

        # Layer 3 (linear output) -- bf16 MXU matmul; bt3 handled later as a
        # per-row correction on the value stream only.
        pre3 = jnp.dot(stacked.astype(BF16), wt3_ref[...],
                       preferred_element_type=F32)              # (6nt, 2p)

        # ------------------- merged DeepONet contraction ---------------------
        lane_p = lax.broadcasted_iota(jnp.int32, (B, 2 * p), 1)
        bu = jnp.where(lane_p < p, b_out, 0.0)                  # keeps u-basis cols
        bv = jnp.where(lane_p >= p, b_out, 0.0)                 # keeps v-basis cols
        buv = jnp.concatenate([bu, bv], axis=0)                 # (2B, 2p)
        dn = (((1,), (1,)), ((), ()))
        h_all = lax.dot_general(buv, pre3, dn,
                                preferred_element_type=F32)     # (2B, 6nt)
        corr = jnp.sum(buv * bt3, axis=1, keepdims=True)        # (2B, 1) bias term

        def st(k):                                              # 128-aligned slices
            return h_all[:, k * nt:(k + 1) * nt]

        h0 = st(0) + corr                                       # value (u rows; v rows)
        hx, hy = st(1), st(2)
        hxx, hxy, hyy = st(3), st(4), st(5)

        # r(x) = 1 - exp(-x/beta) factors, computed once for both residuals.
        x = resid_ref[2 * B:2 * B + 1, :]                       # (1, nt)
        e = jnp.exp(-x * inv_beta)
        R = 1.0 - e
        Rx = e * inv_beta
        Rxx = -e * (inv_beta * inv_beta)

        # combined u/v product-rule slabs (2B, nt)
        w_xx = Rxx * h0 + 2.0 * Rx * hx + R * hxx
        w_xy = Rx * hy + R * hxy
        w_yy = R * hyy
        w_x = Rx * h0 + R * hx
        w_y = R * hy

        u_xx, v_xx = w_xx[0:B], w_xx[B:2 * B]
        u_xy, v_xy = w_xy[0:B], w_xy[B:2 * B]
        u_yy, v_yy = w_yy[0:B], w_yy[B:2 * B]
        u_x, v_x = w_x[0:B], w_x[B:2 * B]
        u_y, v_y = w_y[0:B], w_y[B:2 * B]

        # interior (Hessian) residuals
        li_u = pref * (u_xx + c_plus * v_xy + c_minus * u_yy)
        li_v = pref * (v_yy + c_plus * u_xy + c_minus * v_xx)

        # forcing (Jacobian) residuals
        lf_u = pref * (u_x + nu * v_y) + resid_ref[0:B, :]
        lf_v = pref * c_minus * (u_y + v_x) + resid_ref[B:2 * B, :]

        # masked mean-of-squares over the respective point subsets
        lane_nt = lax.broadcasted_iota(jnp.int32, (1, nt), 1)
        m_int = lane_nt < ni
        m_f = (lane_nt >= ni_rows) & (lane_nt < ni_rows + nf)
        s_int = jnp.sum(jnp.where(m_int, li_u * li_u + li_v * li_v, 0.0),
                        axis=(0, 1), keepdims=True)
        s_f = jnp.sum(jnp.where(m_f, lf_u * lf_u + lf_v * lf_v, 0.0),
                      axis=(0, 1), keepdims=True)
        out_ref[...] = (w_int / denom_int) * s_int + (w_forcing / denom_f) * s_f

    return kernel


# ----------------------------- host glue: params -----------------------------
def init_params(key):
    def uinit(k, shape, fan_in):
        bound = 1.0 / np.sqrt(fan_in)
        return jax.random.uniform(k, shape, F32, -bound, bound)

    keys = jax.random.split(key, 16)
    p = {}
    # Conv1d weights (PyTorch layout (out_ch, in_ch, K)) packed into one SMEM vector
    wc1 = uinit(keys[0], (N_BRANCH_CHANNELS, 3, KERNEL_SIZE), 3 * KERNEL_SIZE)
    bc1 = uinit(keys[1], (N_BRANCH_CHANNELS,), 3 * KERNEL_SIZE)
    wc2 = uinit(keys[2], (N_BRANCH_CHANNELS, N_BRANCH_CHANNELS, KERNEL_SIZE),
                N_BRANCH_CHANNELS * KERNEL_SIZE)
    bc2 = uinit(keys[3], (N_BRANCH_CHANNELS,), N_BRANCH_CHANNELS * KERNEL_SIZE)
    p['conv'] = jnp.concatenate(
        [wc1.reshape(-1), bc1, wc2.reshape(-1), bc2])           # (_CP_LEN,)
    assert p['conv'].shape[0] == _CP_LEN

    # Branch MLP (PyTorch Linear weight (out, in) -> stored transposed (in, out));
    # Linear1 reshaped per conv channel, lane-padded to LPAD, flattened to one matrix.
    nh = N_BRANCH_CHANNELS * L
    wl1 = uinit(keys[4], (2 * P, nh), nh)
    wl1_t = wl1.T.reshape(N_BRANCH_CHANNELS, L, 2 * P)
    wl1_pad = jnp.pad(wl1_t, ((0, 0), (0, LPAD - L), (0, 0)))   # zero padded rows!
    p['Wl1'] = wl1_pad.reshape(N_BRANCH_CHANNELS * LPAD, 2 * P)
    bl1 = uinit(keys[5], (2 * P,), nh)[None, :]
    wl2 = uinit(keys[6], (2 * P, 2 * P), 2 * P).T
    bl2 = uinit(keys[7], (2 * P,), 2 * P)[None, :]
    wl3 = uinit(keys[8], (2 * P, 2 * P), 2 * P).T
    bl3 = uinit(keys[9], (2 * P,), 2 * P)[None, :]
    p['Wl23'] = jnp.concatenate([wl2, wl3], axis=0)             # (4p, 2p)

    # Trunk MLP (big hidden layers stored in bf16 for MXU-native matmuls)
    p['Wt1'] = uinit(keys[10], (TRUNK_HIDDEN, 2), 2).T          # (2, 256) f32
    bt1 = uinit(keys[11], (TRUNK_HIDDEN,), 2)[None, :]
    p['Wt2'] = uinit(keys[12], (TRUNK_HIDDEN, TRUNK_HIDDEN), TRUNK_HIDDEN).T.astype(BF16)
    bt2 = uinit(keys[13], (TRUNK_HIDDEN,), TRUNK_HIDDEN)[None, :]
    p['Wt3'] = uinit(keys[14], (2 * P, TRUNK_HIDDEN), TRUNK_HIDDEN).T.astype(BF16)
    bt3 = uinit(keys[15], (2 * P,), TRUNK_HIDDEN)[None, :]
    p['bt12'] = jnp.concatenate([bt1, bt2], axis=0)             # (2, 256)
    p['b_small'] = jnp.concatenate([bl1, bl2, bl3, bt3], axis=0)  # (4, 2p)
    return p


# ----------------------------- loss wrapper ----------------------------------
def physics_loss(params, f_batch, xy_int, xy_forcing,
                 w_int=W_INT, w_forcing=W_FORCING):
    # TODO(synk): pl.pallas_call has no automatic VJP; wrap in custom_vjp (or add
    # a backward kernel) before using jax.grad for training.
    B = f_batch.shape[0]
    gx = f_batch[:, :L].astype(F32)
    gy = f_batch[:, L:].astype(F32)
    gxy_pad = jnp.pad(jnp.concatenate([gx, gy], axis=0),
                      ((0, 0), (0, LPAD - L)))                  # (2B, LPAD)

    ni = int(xy_int.shape[0]) if xy_int.size else 0
    nf = int(xy_forcing.shape[0]) if xy_forcing.size else 0
    if nf > 0 and nf != L:
        raise ValueError("forcing residual adds g_x/g_y of length 101, so "
                         "xy_forcing must contain exactly 101 points")
    w_int_eff = float(w_int) if ni > 0 else 0.0
    w_forcing_eff = float(w_forcing) if nf > 0 else 0.0
    xi = xy_int.astype(F32) if ni > 0 else jnp.full((1, 2), 0.5, F32)
    xf = xy_forcing.astype(F32) if nf > 0 else jnp.full((1, 2), 0.5, F32)
    ni_rows = xi.shape[0]
    nf_rows = xf.shape[0]
    nt = ((ni_rows + nf_rows + LPAD - 1) // LPAD) * LPAD        # 128-aligned point count
    pad_rows = nt - ni_rows - nf_rows
    parts = [xi, xf]
    if pad_rows:
        parts.append(jnp.full((pad_rows, 2), 0.5, F32))         # finite dummy points
    xy_all = jnp.concatenate(parts, axis=0)                     # (nt, 2)
    x_row = xy_all[:, 0].reshape(1, nt)

    # forcing g_x/g_y aligned to the forcing collocation lanes, packed with x_row
    gxp = jnp.zeros((B, nt), F32)
    gyp = jnp.zeros((B, nt), F32)
    if nf > 0:
        gxp = gxp.at[:, ni_rows:ni_rows + nf].set(gx)
        gyp = gyp.at[:, ni_rows:ni_rows + nf].set(gy)
    resid_slab = jnp.concatenate([gxp, gyp, x_row], axis=0)     # (2B+1, nt)

    # TODO(synk): the fused pass computes Hessian streams for the forcing points
    # too (unused there); negligible at these sizes vs. saved launch/DMA.
    kernel = make_physics_loss_kernel(B, nt, ni, ni_rows, nf, PREF, NU, BETA,
                                      w_int_eff, w_forcing_eff)

    inputs = [gxy_pad, resid_slab, xy_all, params['conv'],
              params['Wl1'], params['Wl23'], params['b_small'],
              params['Wt1'], params['bt12'], params['Wt2'], params['Wt3']]
    in_specs = [
        _vmem_spec(gxy_pad.shape),
        _vmem_spec(resid_slab.shape),
        _vmem_spec(xy_all.shape),
        _smem_spec(),                                           # packed conv scalars
        _vmem_spec(params['Wl1'].shape),
        _vmem_spec(params['Wl23'].shape),
        _vmem_spec(params['b_small'].shape),
        _vmem_spec(params['Wt1'].shape),
        _vmem_spec(params['bt12'].shape),
        _vmem_spec(params['Wt2'].shape),
        _vmem_spec(params['Wt3'].shape),
    ]

    out = pl.pallas_call(
        kernel,
        # TODO(synk): tile nt over a "parallel" grid axis with per-tile partial
        # sums once collocation counts grow (v7x second TensorCore / 64 MiB VMEM).
        grid=(1,),
        in_specs=in_specs,
        out_specs=pl.BlockSpec((1, 1), lambda i: (0, 0)),
        out_shape=jax.ShapeDtypeStruct((1, 1), F32),
        compiler_params=pltpu.CompilerParams(dimension_semantics=("arbitrary",)),
    )(*inputs)
    return out[0, 0]


# ----------------------------- main -------------------------------------------
if __name__ == "__main__":
    key = jax.random.PRNGKey(0)
    kp, kf, kxi = jax.random.split(key, 3)
    params = init_params(kp)

    B = 2
    NC_INT = 8
    f_batch = 0.1 * jax.random.normal(kf, (B, 2 * L), F32)        # (B, 202)
    xy_int = jax.random.uniform(kxi, (NC_INT, 2), F32)            # interior points
    xy_forcing = jnp.stack(                                       # 101 boundary pts
        [jnp.linspace(0.0, 1.0, L, dtype=F32), jnp.ones((L,), F32)], axis=1)

    loss = physics_loss(params, f_batch, xy_int, xy_forcing)
    loss = jax.block_until_ready(loss)
    assert bool(jnp.isfinite(loss)), "loss is not finite"
    print("KERNEL_OK")
</pallas_src>

<mosaic_0001>
module attributes {stable_mosaic.version = 11 : i64} {
  func.func @kernel(%arg0: i32, %arg1: memref<4x128xf32, #tpu.memory_space<vmem>>, %arg2: memref<5x128xf32, #tpu.memory_space<vmem>>, %arg3: memref<128x2xf32, #tpu.memory_space<vmem>>, %arg4: memref<92xf32, #tpu.memory_space<smem>>, %arg5: memref<512x32xf32, #tpu.memory_space<vmem>>, %arg6: memref<64x32xf32, #tpu.memory_space<vmem>>, %arg7: memref<4x32xf32, #tpu.memory_space<vmem>>, %arg8: memref<2x256xf32, #tpu.memory_space<vmem>>, %arg9: memref<2x256xf32, #tpu.memory_space<vmem>>, %arg10: memref<256x256xbf16, #tpu.memory_space<vmem>>, %arg11: memref<256x32xbf16, #tpu.memory_space<vmem>>, %arg12: memref<1x1xf32, #tpu.memory_space<vmem>>) attributes {dimension_semantics = [#tpu.dimension_semantics<arbitrary>], iteration_bounds = array<i64: 1>, scalar_prefetch = 0 : i64, scratch_operands = 0 : i64, tpu.core_type = #tpu.core_type<tc>, window_params = [{pipeline_mode = #tpu.pipeline_mode<synchronous>, transform_indices = @transform_0, window_bounds = array<i64: 4, 128>}, {pipeline_mode = #tpu.pipeline_mode<synchronous>, transform_indices = @transform_1, window_bounds = array<i64: 5, 128>}, {pipeline_mode = #tpu.pipeline_mode<synchronous>, transform_indices = @transform_2, window_bounds = array<i64: 128, 2>}, {transform_indices = @transform_3, window_bounds = array<i64: 92>}, {pipeline_mode = #tpu.pipeline_mode<synchronous>, transform_indices = @transform_4, window_bounds = array<i64: 512, 32>}, {pipeline_mode = #tpu.pipeline_mode<synchronous>, transform_indices = @transform_5, window_bounds = array<i64: 64, 32>}, {pipeline_mode = #tpu.pipeline_mode<synchronous>, transform_indices = @transform_6, window_bounds = array<i64: 4, 32>}, {pipeline_mode = #tpu.pipeline_mode<synchronous>, transform_indices = @transform_7, window_bounds = array<i64: 2, 256>}, {pipeline_mode = #tpu.pipeline_mode<synchronous>, transform_indices = @transform_8, window_bounds = array<i64: 2, 256>}, {pipeline_mode = #tpu.pipeline_mode<synchronous>, transform_indices = @transform_9, window_bounds = array<i64: 256, 256>}, {pipeline_mode = #tpu.pipeline_mode<synchronous>, transform_indices = @transform_10, window_bounds = array<i64: 256, 32>}, {pipeline_mode = #tpu.pipeline_mode<synchronous>, transform_indices = @transform_11, window_bounds = array<i64: 1, 1>}]} {
    %0 = tpu.iota {dimensions = array<i32: 1>} : vector<1x128xi32>
    %c101_i32 = arith.constant 101 : i32
    %1 = vector.broadcast %c101_i32 : i32 to vector<1x128xi32>
    %2 = arith.cmpi slt, %0, %1 : vector<1x128xi32>
    %3 = arith.sitofp %0 : vector<1x128xi32> to vector<1x128xf32>
    %cst = arith.constant 0.00999999977 : f32
    %4 = vector.broadcast %cst : f32 to vector<1x128xf32>
    %5 = arith.mulf %3, %4 : vector<1x128xf32>
    %cst_0 = arith.constant 0.000000e+00 : f32
    %6 = vector.broadcast %cst_0 : f32 to vector<1x128xf32>
    %7 = arith.select %2, %5, %6 : vector<1x128xi1>, vector<1x128xf32>
    %8 = vector.shape_cast %7 : vector<1x128xf32> to vector<1x128xf32>
    %9 = vector.broadcast %8 : vector<1x128xf32> to vector<2x128xf32>
    %c0 = arith.constant 0 : index
    %c0_1 = arith.constant 0 : index
    %10 = vector.load %arg1[%c0, %c0_1] : memref<4x128xf32, #tpu.memory_space<vmem>>, vector<2x128xf32>
    %c2 = arith.constant 2 : index
    %c0_2 = arith.constant 0 : index
    %11 = vector.load %arg1[%c2, %c0_2] : memref<4x128xf32, #tpu.memory_space<vmem>>, vector<2x128xf32>
    %c1_i32 = arith.constant 1 : i32
    %12 = tpu.dynamic_rotate %10 by %c1_i32 dim 1 : vector<2x128xf32>, i32 -> vector<2x128xf32>
    %c127_i32 = arith.constant 127 : i32
    %13 = tpu.dynamic_rotate %10 by %c127_i32 dim 1 : vector<2x128xf32>, i32 -> vector<2x128xf32>
    %c1_i32_3 = arith.constant 1 : i32
    %14 = tpu.dynamic_rotate %11 by %c1_i32_3 dim 1 : vector<2x128xf32>, i32 -> vector<2x128xf32>
    %c127_i32_4 = arith.constant 127 : i32
    %15 = tpu.dynamic_rotate %11 by %c127_i32_4 dim 1 : vector<2x128xf32>, i32 -> vector<2x128xf32>
    %c1_i32_5 = arith.constant 1 : i32
    %16 = tpu.dynamic_rotate %9 by %c1_i32_5 dim 1 : vector<2x128xf32>, i32 -> vector<2x128xf32>
    %c127_i32_6 = arith.constant 127 : i32
    %17 = tpu.dynamic_rotate %9 by %c127_i32_6 dim 1 : vector<2x128xf32>, i32 -> vector<2x128xf32>
    %c0_7 = arith.constant 0 : index
    %18 = memref.load %arg4[%c0_7] : memref<92xf32, #tpu.memory_space<smem>>
    %19 = vector.broadcast %18 : f32 to vector<2x128xf32>
    %20 = arith.mulf %19, %12 : vector<2x128xf32>
    %c1 = arith.constant 1 : index
    %21 = memref.load %arg4[%c1] : memref<92xf32, #tpu.memory_space<smem>>
    %22 = vector.broadcast %21 : f32 to vector<2x128xf32>
    %23 = arith.mulf %22, %10 : vector<2x128xf32>
    %24 = arith.addf %20, %23 : vector<2x128xf32>
    %c2_8 = arith.constant 2 : index
    %25 = memref.load %arg4[%c2_8] : memref<92xf32, #tpu.memory_space<smem>>
    %26 = vector.broadcast %25 : f32 to vector<2x128xf32>
    %27 = arith.mulf %26, %13 : vector<2x128xf32>
    %28 = arith.addf %24, %27 : vector<2x128xf32>
    %c3 = arith.constant 3 : index
    %29 = memref.load %arg4[%c3] : memref<92xf32, #tpu.memory_space<smem>>
    %30 = vector.broadcast %29 : f32 to vector<2x128xf32>
    %31 = arith.mulf %30, %14 : vector<2x128xf32>
    %c4 = arith.constant 4 : index
    %32 = memref.load %arg4[%c4] : memref<92xf32, #tpu.memory_space<smem>>
    %33 = vector.broadcast %32 : f32 to vector<2x128xf32>
    %34 = arith.mulf %33, %11 : vector<2x128xf32>
    %35 = arith.addf %31, %34 : vector<2x128xf32>
    %c5 = arith.constant 5 : index
    %36 = memref.load %arg4[%c5] : memref<92xf32, #tpu.memory_space<smem>>
    %37 = vector.broadcast %36 : f32 to vector<2x128xf32>
    %38 = arith.mulf %37, %15 : vector<2x128xf32>
    %39 = arith.addf %35, %38 : vector<2x128xf32>
    %c6 = arith.constant 6 : index
    %40 = memref.load %arg4[%c6] : memref<92xf32, #tpu.memory_space<smem>>
    %41 = vector.broadcast %40 : f32 to vector<2x128xf32>
    %42 = arith.mulf %41, %16 : vector<2x128xf32>
    %c7 = arith.constant 7 : index
    %43 = memref.load %arg4[%c7] : memref<92xf32, #tpu.memory_space<smem>>
    %44 = vector.broadcast %43 : f32 to vector<2x128xf32>
    %45 = arith.mulf %44, %9 : vector<2x128xf32>
    %46 = arith.addf %42, %45 : vector<2x128xf32>
    %c8 = arith.constant 8 : index
    %47 = memref.load %arg4[%c8] : memref<92xf32, #tpu.memory_space<smem>>
    %48 = vector.broadcast %47 : f32 to vector<2x128xf32>
    %49 = arith.mulf %48, %17 : vector<2x128xf32>
    %50 = arith.addf %46, %49 : vector<2x128xf32>
    %51 = arith.addf %28, %39 : vector<2x128xf32>
    %52 = arith.addf %51, %50 : vector<2x128xf32>
    %c36 = arith.constant 36 : index
    %53 = memref.load %arg4[%c36] : memref<92xf32, #tpu.memory_space<smem>>
    %54 = vector.broadcast %53 : f32 to vector<2x128xf32>
    %55 = arith.addf %52, %54 : vector<2x128xf32>
    %c9 = arith.constant 9 : index
    %56 = memref.load %arg4[%c9] : memref<92xf32, #tpu.memory_space<smem>>
    %57 = vector.broadcast %56 : f32 to vector<2x128xf32>
    %58 = arith.mulf %57, %12 : vector<2x128xf32>
    %c10 = arith.constant 10 : index
    %59 = memref.load %arg4[%c10] : memref<92xf32, #tpu.memory_space<smem>>
    %60 = vector.broadcast %59 : f32 to vector<2x128xf32>
    %61 = arith.mulf %60, %10 : vector<2x128xf32>
    %62 = arith.addf %58, %61 : vector<2x128xf32>
    %c11 = arith.constant 11 : index
    %63 = memref.load %arg4[%c11] : memref<92xf32, #tpu.memory_space<smem>>
    %64 = vector.broadcast %63 : f32 to vector<2x128xf32>
    %65 = arith.mulf %64, %13 : vector<2x128xf32>
    %66 = arith.addf %62, %65 : vector<2x128xf32>
    %c12 = arith.constant 12 : index
    %67 = memref.load %arg4[%c12] : memref<92xf32, #tpu.memory_space<smem>>
    %68 = vector.broadcast %67 : f32 to vector<2x128xf32>
    %69 = arith.mulf %68, %14 : vector<2x128xf32>
    %c13 = arith.constant 13 : index
    %70 = memref.load %arg4[%c13] : memref<92xf32, #tpu.memory_space<smem>>
    %71 = vector.broadcast %70 : f32 to vector<2x128xf32>
    %72 = arith.mulf %71, %11 : vector<2x128xf32>
    %73 = arith.addf %69, %72 : vector<2x128xf32>
    %c14 = arith.constant 14 : index
    %74 = memref.load %arg4[%c14] : memref<92xf32, #tpu.memory_space<smem>>
    %75 = vector.broadcast %74 : f32 to vector<2x128xf32>
    %76 = arith.mulf %75, %15 : vector<2x128xf32>
    %77 = arith.addf %73, %76 : vector<2x128xf32>
    %c15 = arith.constant 15 : index
    %78 = memref.load %arg4[%c15] : memref<92xf32, #tpu.memory_space<smem>>
    %79 = vector.broadcast %78 : f32 to vector<2x128xf32>
    %80 = arith.mulf %79, %16 : vector<2x128xf32>
    %c16 = arith.constant 16 : index
    %81 = memref.load %arg4[%c16] : memref<92xf32, #tpu.memory_space<smem>>
    %82 = vector.broadcast %81 : f32 to vector<2x128xf32>
    %83 = arith.mulf %82, %9 : vector<2x128xf32>
    %84 = arith.addf %80, %83 : vector<2x128xf32>
    %c17 = arith.constant 17 : index
    %85 = memref.load %arg4[%c17] : memref<92xf32, #tpu.memory_space<smem>>
    %86 = vector.broadcast %85 : f32 to vector<2x128xf32>
    %87 = arith.mulf %86, %17 : vector<2x128xf32>
    %88 = arith.addf %84, %87 : vector<2x128xf32>
    %89 = arith.addf %66, %77 : vector<2x128xf32>
    %90 = arith.addf %89, %88 : vector<2x128xf32>
    %c37 = arith.constant 37 : index
    %91 = memref.load %arg4[%c37] : memref<92xf32, #tpu.memory_space<smem>>
    %92 = vector.broadcast %91 : f32 to vector<2x128xf32>
    %93 = arith.addf %90, %92 : vector<2x128xf32>
    %c18 = arith.constant 18 : index
    %94 = memref.load %arg4[%c18] : memref<92xf32, #tpu.memory_space<smem>>
    %95 = vector.broadcast %94 : f32 to vector<2x128xf32>
    %96 = arith.mulf %95, %12 : vector<2x128xf32>
    %c19 = arith.constant 19 : index
    %97 = memref.load %arg4[%c19] : memref<92xf32, #tpu.memory_space<smem>>
    %98 = vector.broadcast %97 : f32 to vector<2x128xf32>
    %99 = arith.mulf %98, %10 : vector<2x128xf32>
    %100 = arith.addf %96, %99 : vector<2x128xf32>
    %c20 = arith.constant 20 : index
    %101 = memref.load %arg4[%c20] : memref<92xf32, #tpu.memory_space<smem>>
    %102 = vector.broadcast %101 : f32 to vector<2x128xf32>
    %103 = arith.mulf %102, %13 : vector<2x128xf32>
    %104 = arith.addf %100, %103 : vector<2x128xf32>
    %c21 = arith.constant 21 : index
    %105 = memref.load %arg4[%c21] : memref<92xf32, #tpu.memory_space<smem>>
    %106 = vector.broadcast %105 : f32 to vector<2x128xf32>
    %107 = arith.mulf %106, %14 : vector<2x128xf32>
    %c22 = arith.constant 22 : index
    %108 = memref.load %arg4[%c22] : memref<92xf32, #tpu.memory_space<smem>>
    %109 = vector.broadcast %108 : f32 to vector<2x128xf32>
    %110 = arith.mulf %109, %11 : vector<2x128xf32>
    %111 = arith.addf %107, %110 : vector<2x128xf32>
    %c23 = arith.constant 23 : index
    %112 = memref.load %arg4[%c23] : memref<92xf32, #tpu.memory_space<smem>>
    %113 = vector.broadcast %112 : f32 to vector<2x128xf32>
    %114 = arith.mulf %113, %15 : vector<2x128xf32>
    %115 = arith.addf %111, %114 : vector<2x128xf32>
    %c24 = arith.constant 24 : index
    %116 = memref.load %arg4[%c24] : memref<92xf32, #tpu.memory_space<smem>>
    %117 = vector.broadcast %116 : f32 to vector<2x128xf32>
    %118 = arith.mulf %117, %16 : vector<2x128xf32>
    %c25 = arith.constant 25 : index
    %119 = memref.load %arg4[%c25] : memref<92xf32, #tpu.memory_space<smem>>
    %120 = vector.broadcast %119 : f32 to vector<2x128xf32>
    %121 = arith.mulf %120, %9 : vector<2x128xf32>
    %122 = arith.addf %118, %121 : vector<2x128xf32>
    %c26 = arith.constant 26 : index
    %123 = memref.load %arg4[%c26] : memref<92xf32, #tpu.memory_space<smem>>
    %124 = vector.broadcast %123 : f32 to vector<2x128xf32>
    %125 = arith.mulf %124, %17 : vector<2x128xf32>
    %126 = arith.addf %122, %125 : vector<2x128xf32>
    %127 = arith.addf %104, %115 : vector<2x128xf32>
    %128 = arith.addf %127, %126 : vector<2x128xf32>
    %c38 = arith.constant 38 : index
    %129 = memref.load %arg4[%c38] : memref<92xf32, #tpu.memory_space<smem>>
    %130 = vector.broadcast %129 : f32 to vector<2x128xf32>
    %131 = arith.addf %128, %130 : vector<2x128xf32>
    %c27 = arith.constant 27 : index
    %132 = memref.load %arg4[%c27] : memref<92xf32, #tpu.memory_space<smem>>
    %133 = vector.broadcast %132 : f32 to vector<2x128xf32>
    %134 = arith.mulf %133, %12 : vector<2x128xf32>
    %c28 = arith.constant 28 : index
    %135 = memref.load %arg4[%c28] : memref<92xf32, #tpu.memory_space<smem>>
    %136 = vector.broadcast %135 : f32 to vector<2x128xf32>
    %137 = arith.mulf %136, %10 : vector<2x128xf32>
    %138 = arith.addf %134, %137 : vector<2x128xf32>
    %c29 = arith.constant 29 : index
    %139 = memref.load %arg4[%c29] : memref<92xf32, #tpu.memory_space<smem>>
    %140 = vector.broadcast %139 : f32 to vector<2x128xf32>
    %141 = arith.mulf %140, %13 : vector<2x128xf32>
    %142 = arith.addf %138, %141 : vector<2x128xf32>
    %c30 = arith.constant 30 : index
    %143 = memref.load %arg4[%c30] : memref<92xf32, #tpu.memory_space<smem>>
    %144 = vector.broadcast %143 : f32 to vector<2x128xf32>
    %145 = arith.mulf %144, %14 : vector<2x128xf32>
    %c31 = arith.constant 31 : index
    %146 = memref.load %arg4[%c31] : memref<92xf32, #tpu.memory_space<smem>>
    %147 = vector.broadcast %146 : f32 to vector<2x128xf32>
    %148 = arith.mulf %147, %11 : vector<2x128xf32>
    %149 = arith.addf %145, %148 : vector<2x128xf32>
    %c32 = arith.constant 32 : index
    %150 = memref.load %arg4[%c32] : memref<92xf32, #tpu.memory_space<smem>>
    %151 = vector.broadcast %150 : f32 to vector<2x128xf32>
    %152 = arith.mulf %151, %15 : vector<2x128xf32>
    %153 = arith.addf %149, %152 : vector<2x128xf32>
    %c33 = arith.constant 33 : index
    %154 = memref.load %arg4[%c33] : memref<92xf32, #tpu.memory_space<smem>>
    %155 = vector.broadcast %154 : f32 to vector<2x128xf32>
    %156 = arith.mulf %155, %16 : vector<2x128xf32>
    %c34 = arith.constant 34 : index
    %157 = memref.load %arg4[%c34] : memref<92xf32, #tpu.memory_space<smem>>
    %158 = vector.broadcast %157 : f32 to vector<2x128xf32>
    %159 = arith.mulf %158, %9 : vector<2x128xf32>
    %160 = arith.addf %156, %159 : vector<2x128xf32>
    %c35 = arith.constant 35 : index
    %161 = memref.load %arg4[%c35] : memref<92xf32, #tpu.memory_space<smem>>
    %162 = vector.broadcast %161 : f32 to vector<2x128xf32>
    %163 = arith.mulf %162, %17 : vector<2x128xf32>
    %164 = arith.addf %160, %163 : vector<2x128xf32>
    %165 = arith.addf %142, %153 : vector<2x128xf32>
    %166 = arith.addf %165, %164 : vector<2x128xf32>
    %c39 = arith.constant 39 : index
    %167 = memref.load %arg4[%c39] : memref<92xf32, #tpu.memory_space<smem>>
    %168 = vector.broadcast %167 : f32 to vector<2x128xf32>
    %169 = arith.addf %166, %168 : vector<2x128xf32>
    %170 = math.tanh %55 : vector<2x128xf32>
    %cst_9 = arith.constant 0.000000e+00 : f32
    %171 = vector.shape_cast %2 : vector<1x128xi1> to vector<1x128xi1>
    %172 = vector.broadcast %171 : vector<1x128xi1> to vector<2x128xi1>
    %173 = vector.broadcast %cst_9 : f32 to vector<2x128xf32>
    %174 = arith.select %172, %170, %173 : vector<2x128xi1>, vector<2x128xf32>
    %175 = math.tanh %93 : vector<2x128xf32>
    %cst_10 = arith.constant 0.000000e+00 : f32
    %176 = vector.shape_cast %2 : vector<1x128xi1> to vector<1x128xi1>
    %177 = vector.broadcast %176 : vector<1x128xi1> to vector<2x128xi1>
    %178 = vector.broadcast %cst_10 : f32 to vector<2x128xf32>
    %179 = arith.select %177, %175, %178 : vector<2x128xi1>, vector<2x128xf32>
    %180 = math.tanh %131 : vector<2x128xf32>
    %cst_11 = arith.constant 0.000000e+00 : f32
    %181 = vector.shape_cast %2 : vector<1x128xi1> to vector<1x128xi1>
    %182 = vector.broadcast %181 : vector<1x128xi1> to vector<2x128xi1>
    %183 = vector.broadcast %cst_11 : f32 to vector<2x128xf32>
    %184 = arith.select %182, %180, %183 : vector<2x128xi1>, vector<2x128xf32>
    %185 = math.tanh %169 : vector<2x128xf32>
    %cst_12 = arith.constant 0.000000e+00 : f32
    %186 = vector.shape_cast %2 : vector<1x128xi1> to vector<1x128xi1>
    %187 = vector.broadcast %186 : vector<1x128xi1> to vector<2x128xi1>
    %188 = vector.broadcast %cst_12 : f32 to vector<2x128xf32>
    %189 = arith.select %187, %185, %188 : vector<2x128xi1>, vector<2x128xf32>
    %c1_i32_13 = arith.constant 1 : i32
    %190 = tpu.dynamic_rotate %174 by %c1_i32_13 dim 1 : vector<2x128xf32>, i32 -> vector<2x128xf32>
    %c127_i32_14 = arith.constant 127 : i32
    %191 = tpu.dynamic_rotate %174 by %c127_i32_14 dim 1 : vector<2x128xf32>, i32 -> vector<2x128xf32>
    %c1_i32_15 = arith.constant 1 : i32
    %192 = tpu.dynamic_rotate %179 by %c1_i32_15 dim 1 : vector<2x128xf32>, i32 -> vector<2x128xf32>
    %c127_i32_16 = arith.constant 127 : i32
    %193 = tpu.dynamic_rotate %179 by %c127_i32_16 dim 1 : vector<2x128xf32>, i32 -> vector<2x128xf32>
    %c1_i32_17 = arith.constant 1 : i32
    %194 = tpu.dynamic_rotate %184 by %c1_i32_17 dim 1 : vector<2x128xf32>, i32 -> vector<2x128xf32>
    %c127_i32_18 = arith.constant 127 : i32
    %195 = tpu.dynamic_rotate %184 by %c127_i32_18 dim 1 : vector<2x128xf32>, i32 -> vector<2x128xf32>
    %c1_i32_19 = arith.constant 1 : i32
    %196 = tpu.dynamic_rotate %189 by %c1_i32_19 dim 1 : vector<2x128xf32>, i32 -> vector<2x128xf32>
    %c127_i32_20 = arith.constant 127 : i32
    %197 = tpu.dynamic_rotate %189 by %c127_i32_20 dim 1 : vector<2x128xf32>, i32 -> vector<2x128xf32>
    %c40 = arith.constant 40 : index
    %198 = memref.load %arg4[%c40] : memref<92xf32, #tpu.memory_space<smem>>
    %199 = vector.broadcast %198 : f32 to vector<2x128xf32>
    %200 = arith.mulf %199, %190 : vector<2x128xf32>
    %c41 = arith.constant 41 : index
    %201 = memref.load %arg4[%c41] : memref<92xf32, #tpu.memory_space<smem>>
    %202 = vector.broadcast %201 : f32 to vector<2x128xf32>
    %203 = arith.mulf %202, %174 : vector<2x128xf32>
    %204 = arith.addf %200, %203 : vector<2x128xf32>
    %c42 = arith.constant 42 : index
    %205 = memref.load %arg4[%c42] : memref<92xf32, #tpu.memory_space<smem>>
    %206 = vector.broadcast %205 : f32 to vector<2x128xf32>
    %207 = arith.mulf %206, %191 : vector<2x128xf32>
    %208 = arith.addf %204, %207 : vector<2x128xf32>
    %c43 = arith.constant 43 : index
    %209 = memref.load %arg4[%c43] : memref<92xf32, #tpu.memory_space<smem>>
    %210 = vector.broadcast %209 : f32 to vector<2x128xf32>
    %211 = arith.mulf %210, %192 : vector<2x128xf32>
    %c44 = arith.constant 44 : index
    %212 = memref.load %arg4[%c44] : memref<92xf32, #tpu.memory_space<smem>>
    %213 = vector.broadcast %212 : f32 to vector<2x128xf32>
    %214 = arith.mulf %213, %179 : vector<2x128xf32>
    %215 = arith.addf %211, %214 : vector<2x128xf32>
    %c45 = arith.constant 45 : index
    %216 = memref.load %arg4[%c45] : memref<92xf32, #tpu.memory_space<smem>>
    %217 = vector.broadcast %216 : f32 to vector<2x128xf32>
    %218 = arith.mulf %217, %193 : vector<2x128xf32>
    %219 = arith.addf %215, %218 : vector<2x128xf32>
    %c46 = arith.constant 46 : index
    %220 = memref.load %arg4[%c46] : memref<92xf32, #tpu.memory_space<smem>>
    %221 = vector.broadcast %220 : f32 to vector<2x128xf32>
    %222 = arith.mulf %221, %194 : vector<2x128xf32>
    %c47 = arith.constant 47 : index
    %223 = memref.load %arg4[%c47] : memref<92xf32, #tpu.memory_space<smem>>
    %224 = vector.broadcast %223 : f32 to vector<2x128xf32>
    %225 = arith.mulf %224, %184 : vector<2x128xf32>
    %226 = arith.addf %222, %225 : vector<2x128xf32>
    %c48 = arith.constant 48 : index
    %227 = memref.load %arg4[%c48] : memref<92xf32, #tpu.memory_space<smem>>
    %228 = vector.broadcast %227 : f32 to vector<2x128xf32>
    %229 = arith.mulf %228, %195 : vector<2x128xf32>
    %230 = arith.addf %226, %229 : vector<2x128xf32>
    %c49 = arith.constant 49 : index
    %231 = memref.load %arg4[%c49] : memref<92xf32, #tpu.memory_space<smem>>
    %232 = vector.broadcast %231 : f32 to vector<2x128xf32>
    %233 = arith.mulf %232, %196 : vector<2x128xf32>
    %c50 = arith.constant 50 : index
    %234 = memref.load %arg4[%c50] : memref<92xf32, #tpu.memory_space<smem>>
    %235 = vector.broadcast %234 : f32 to vector<2x128xf32>
    %236 = arith.mulf %235, %189 : vector<2x128xf32>
    %237 = arith.addf %233, %236 : vector<2x128xf32>
    %c51 = arith.constant 51 : index
    %238 = memref.load %arg4[%c51] : memref<92xf32, #tpu.memory_space<smem>>
    %239 = vector.broadcast %238 : f32 to vector<2x128xf32>
    %240 = arith.mulf %239, %197 : vector<2x128xf32>
    %241 = arith.addf %237, %240 : vector<2x128xf32>
    %242 = arith.addf %208, %219 : vector<2x128xf32>
    %243 = arith.addf %242, %230 : vector<2x128xf32>
    %244 = arith.addf %243, %241 : vector<2x128xf32>
    %c88 = arith.constant 88 : index
    %245 = memref.load %arg4[%c88] : memref<92xf32, #tpu.memory_space<smem>>
    %246 = vector.broadcast %245 : f32 to vector<2x128xf32>
    %247 = arith.addf %244, %246 : vector<2x128xf32>
    %c52 = arith.constant 52 : index
    %248 = memref.load %arg4[%c52] : memref<92xf32, #tpu.memory_space<smem>>
    %249 = vector.broadcast %248 : f32 to vector<2x128xf32>
    %250 = arith.mulf %249, %190 : vector<2x128xf32>
    %c53 = arith.constant 53 : index
    %251 = memref.load %arg4[%c53] : memref<92xf32, #tpu.memory_space<smem>>
    %252 = vector.broadcast %251 : f32 to vector<2x128xf32>
    %253 = arith.mulf %252, %174 : vector<2x128xf32>
    %254 = arith.addf %250, %253 : vector<2x128xf32>
    %c54 = arith.constant 54 : index
    %255 = memref.load %arg4[%c54] : memref<92xf32, #tpu.memory_space<smem>>
    %256 = vector.broadcast %255 : f32 to vector<2x128xf32>
    %257 = arith.mulf %256, %191 : vector<2x128xf32>
    %258 = arith.addf %254, %257 : vector<2x128xf32>
    %c55 = arith.constant 55 : index
    %259 = memref.load %arg4[%c55] : memref<92xf32, #tpu.memory_space<smem>>
    %260 = vector.broadcast %259 : f32 to vector<2x128xf32>
    %261 = arith.mulf %260, %192 : vector<2x128xf32>
    %c56 = arith.constant 56 : index
    %262 = memref.load %arg4[%c56] : memref<92xf32, #tpu.memory_space<smem>>
    %263 = vector.broadcast %262 : f32 to vector<2x128xf32>
    %264 = arith.mulf %263, %179 : vector<2x128xf32>
    %265 = arith.addf %261, %264 : vector<2x128xf32>
    %c57 = arith.constant 57 : index
    %266 = memref.load %arg4[%c57] : memref<92xf32, #tpu.memory_space<smem>>
    %267 = vector.broadcast %266 : f32 to vector<2x128xf32>
    %268 = arith.mulf %267, %193 : vector<2x128xf32>
    %269 = arith.addf %265, %268 : vector<2x128xf32>
    %c58 = arith.constant 58 : index
    %270 = memref.load %arg4[%c58] : memref<92xf32, #tpu.memory_space<smem>>
    %271 = vector.broadcast %270 : f32 to vector<2x128xf32>
    %272 = arith.mulf %271, %194 : vector<2x128xf32>
    %c59 = arith.constant 59 : index
    %273 = memref.load %arg4[%c59] : memref<92xf32, #tpu.memory_space<smem>>
    %274 = vector.broadcast %273 : f32 to vector<2x128xf32>
    %275 = arith.mulf %274, %184 : vector<2x128xf32>
    %276 = arith.addf %272, %275 : vector<2x128xf32>
    %c60 = arith.constant 60 : index
    %277 = memref.load %arg4[%c60] : memref<92xf32, #tpu.memory_space<smem>>
    %278 = vector.broadcast %277 : f32 to vector<2x128xf32>
    %279 = arith.mulf %278, %195 : vector<2x128xf32>
    %280 = arith.addf %276, %279 : vector<2x128xf32>
    %c61 = arith.constant 61 : index
    %281 = memref.load %arg4[%c61] : memref<92xf32, #tpu.memory_space<smem>>
    %282 = vector.broadcast %281 : f32 to vector<2x128xf32>
    %283 = arith.mulf %282, %196 : vector<2x128xf32>
    %c62 = arith.constant 62 : index
    %284 = memref.load %arg4[%c62] : memref<92xf32, #tpu.memory_space<smem>>
    %285 = vector.broadcast %284 : f32 to vector<2x128xf32>
    %286 = arith.mulf %285, %189 : vector<2x128xf32>
    %287 = arith.addf %283, %286 : vector<2x128xf32>
    %c63 = arith.constant 63 : index
    %288 = memref.load %arg4[%c63] : memref<92xf32, #tpu.memory_space<smem>>
    %289 = vector.broadcast %288 : f32 to vector<2x128xf32>
    %290 = arith.mulf %289, %197 : vector<2x128xf32>
    %291 = arith.addf %287, %290 : vector<2x128xf32>
    %292 = arith.addf %258, %269 : vector<2x128xf32>
    %293 = arith.addf %292, %280 : vector<2x128xf32>
    %294 = arith.addf %293, %291 : vector<2x128xf32>
    %c89 = arith.constant 89 : index
    %295 = memref.load %arg4[%c89] : memref<92xf32, #tpu.memory_space<smem>>
    %296 = vector.broadcast %295 : f32 to vector<2x128xf32>
    %297 = arith.addf %294, %296 : vector<2x128xf32>
    %c64 = arith.constant 64 : index
    %298 = memref.load %arg4[%c64] : memref<92xf32, #tpu.memory_space<smem>>
    %299 = vector.broadcast %298 : f32 to vector<2x128xf32>
    %300 = arith.mulf %299, %190 : vector<2x128xf32>
    %c65 = arith.constant 65 : index
    %301 = memref.load %arg4[%c65] : memref<92xf32, #tpu.memory_space<smem>>
    %302 = vector.broadcast %301 : f32 to vector<2x128xf32>
    %303 = arith.mulf %302, %174 : vector<2x128xf32>
    %304 = arith.addf %300, %303 : vector<2x128xf32>
    %c66 = arith.constant 66 : index
    %305 = memref.load %arg4[%c66] : memref<92xf32, #tpu.memory_space<smem>>
    %306 = vector.broadcast %305 : f32 to vector<2x128xf32>
    %307 = arith.mulf %306, %191 : vector<2x128xf32>
    %308 = arith.addf %304, %307 : vector<2x128xf32>
    %c67 = arith.constant 67 : index
    %309 = memref.load %arg4[%c67] : memref<92xf32, #tpu.memory_space<smem>>
    %310 = vector.broadcast %309 : f32 to vector<2x128xf32>
    %311 = arith.mulf %310, %192 : vector<2x128xf32>
    %c68 = arith.constant 68 : index
    %312 = memref.load %arg4[%c68] : memref<92xf32, #tpu.memory_space<smem>>
    %313 = vector.broadcast %312 : f32 to vector<2x128xf32>
    %314 = arith.mulf %313, %179 : vector<2x128xf32>
    %315 = arith.addf %311, %314 : vector<2x128xf32>
    %c69 = arith.constant 69 : index
    %316 = memref.load %arg4[%c69] : memref<92xf32, #tpu.memory_space<smem>>
    %317 = vector.broadcast %316 : f32 to vector<2x128xf32>
    %318 = arith.mulf %317, %193 : vector<2x128xf32>
    %319 = arith.addf %315, %318 : vector<2x128xf32>
    %c70 = arith.constant 70 : index
    %320 = memref.load %arg4[%c70] : memref<92xf32, #tpu.memory_space<smem>>
    %321 = vector.broadcast %320 : f32 to vector<2x128xf32>
    %322 = arith.mulf %321, %194 : vector<2x128xf32>
    %c71 = arith.constant 71 : index
    %323 = memref.load %arg4[%c71] : memref<92xf32, #tpu.memory_space<smem>>
    %324 = vector.broadcast %323 : f32 to vector<2x128xf32>
    %325 = arith.mulf %324, %184 : vector<2x128xf32>
    %326 = arith.addf %322, %325 : vector<2x128xf32>
    %c72 = arith.constant 72 : index
    %327 = memref.load %arg4[%c72] : memref<92xf32, #tpu.memory_space<smem>>
    %328 = vector.broadcast %327 : f32 to vector<2x128xf32>
    %329 = arith.mulf %328, %195 : vector<2x128xf32>
    %330 = arith.addf %326, %329 : vector<2x128xf32>
    %c73 = arith.constant 73 : index
    %331 = memref.load %arg4[%c73] : memref<92xf32, #tpu.memory_space<smem>>
    %332 = vector.broadcast %331 : f32 to vector<2x128xf32>
    %333 = arith.mulf %332, %196 : vector<2x128xf32>
    %c74 = arith.constant 74 : index
    %334 = memref.load %arg4[%c74] : memref<92xf32, #tpu.memory_space<smem>>
    %335 = vector.broadcast %334 : f32 to vector<2x128xf32>
    %336 = arith.mulf %335, %189 : vector<2x128xf32>
    %337 = arith.addf %333, %336 : vector<2x128xf32>
    %c75 = arith.constant 75 : index
    %338 = memref.load %arg4[%c75] : memref<92xf32, #tpu.memory_space<smem>>
    %339 = vector.broadcast %338 : f32 to vector<2x128xf32>
    %340 = arith.mulf %339, %197 : vector<2x128xf32>
    %341 = arith.addf %337, %340 : vector<2x128xf32>
    %342 = arith.addf %308, %319 : vector<2x128xf32>
    %343 = arith.addf %342, %330 : vector<2x128xf32>
    %344 = arith.addf %343, %341 : vector<2x128xf32>
    %c90 = arith.constant 90 : index
    %345 = memref.load %arg4[%c90] : memref<92xf32, #tpu.memory_space<smem>>
    %346 = vector.broadcast %345 : f32 to vector<2x128xf32>
    %347 = arith.addf %344, %346 : vector<2x128xf32>
    %c76 = arith.constant 76 : index
    %348 = memref.load %arg4[%c76] : memref<92xf32, #tpu.memory_space<smem>>
    %349 = vector.broadcast %348 : f32 to vector<2x128xf32>
    %350 = arith.mulf %349, %190 : vector<2x128xf32>
    %c77 = arith.constant 77 : index
    %351 = memref.load %arg4[%c77] : memref<92xf32, #tpu.memory_space<smem>>
    %352 = vector.broadcast %351 : f32 to vector<2x128xf32>
    %353 = arith.mulf %352, %174 : vector<2x128xf32>
    %354 = arith.addf %350, %353 : vector<2x128xf32>
    %c78 = arith.constant 78 : index
    %355 = memref.load %arg4[%c78] : memref<92xf32, #tpu.memory_space<smem>>
    %356 = vector.broadcast %355 : f32 to vector<2x128xf32>
    %357 = arith.mulf %356, %191 : vector<2x128xf32>
    %358 = arith.addf %354, %357 : vector<2x128xf32>
    %c79 = arith.constant 79 : index
    %359 = memref.load %arg4[%c79] : memref<92xf32, #tpu.memory_space<smem>>
    %360 = vector.broadcast %359 : f32 to vector<2x128xf32>
    %361 = arith.mulf %360, %192 : vector<2x128xf32>
    %c80 = arith.constant 80 : index
    %362 = memref.load %arg4[%c80] : memref<92xf32, #tpu.memory_space<smem>>
    %363 = vector.broadcast %362 : f32 to vector<2x128xf32>
    %364 = arith.mulf %363, %179 : vector<2x128xf32>
    %365 = arith.addf %361, %364 : vector<2x128xf32>
    %c81 = arith.constant 81 : index
    %366 = memref.load %arg4[%c81] : memref<92xf32, #tpu.memory_space<smem>>
    %367 = vector.broadcast %366 : f32 to vector<2x128xf32>
    %368 = arith.mulf %367, %193 : vector<2x128xf32>
    %369 = arith.addf %365, %368 : vector<2x128xf32>
    %c82 = arith.constant 82 : index
    %370 = memref.load %arg4[%c82] : memref<92xf32, #tpu.memory_space<smem>>
    %371 = vector.broadcast %370 : f32 to vector<2x128xf32>
    %372 = arith.mulf %371, %194 : vector<2x128xf32>
    %c83 = arith.constant 83 : index
    %373 = memref.load %arg4[%c83] : memref<92xf32, #tpu.memory_space<smem>>
    %374 = vector.broadcast %373 : f32 to vector<2x128xf32>
    %375 = arith.mulf %374, %184 : vector<2x128xf32>
    %376 = arith.addf %372, %375 : vector<2x128xf32>
    %c84 = arith.constant 84 : index
    %377 = memref.load %arg4[%c84] : memref<92xf32, #tpu.memory_space<smem>>
    %378 = vector.broadcast %377 : f32 to vector<2x128xf32>
    %379 = arith.mulf %378, %195 : vector<2x128xf32>
    %380 = arith.addf %376, %379 : vector<2x128xf32>
    %c85 = arith.constant 85 : index
    %381 = memref.load %arg4[%c85] : memref<92xf32, #tpu.memory_space<smem>>
    %382 = vector.broadcast %381 : f32 to vector<2x128xf32>
    %383 = arith.mulf %382, %196 : vector<2x128xf32>
    %c86 = arith.constant 86 : index
    %384 = memref.load %arg4[%c86] : memref<92xf32, #tpu.memory_space<smem>>
    %385 = vector.broadcast %384 : f32 to vector<2x128xf32>
    %386 = arith.mulf %385, %189 : vector<2x128xf32>
    %387 = arith.addf %383, %386 : vector<2x128xf32>
    %c87 = arith.constant 87 : index
    %388 = memref.load %arg4[%c87] : memref<92xf32, #tpu.memory_space<smem>>
    %389 = vector.broadcast %388 : f32 to vector<2x128xf32>
    %390 = arith.mulf %389, %197 : vector<2x128xf32>
    %391 = arith.addf %387, %390 : vector<2x128xf32>
    %392 = arith.addf %358, %369 : vector<2x128xf32>
    %393 = arith.addf %392, %380 : vector<2x128xf32>
    %394 = arith.addf %393, %391 : vector<2x128xf32>
    %c91 = arith.constant 91 : index
    %395 = memref.load %arg4[%c91] : memref<92xf32, #tpu.memory_space<smem>>
    %396 = vector.broadcast %395 : f32 to vector<2x128xf32>
    %397 = arith.addf %394, %396 : vector<2x128xf32>
    %398 = math.tanh %247 : vector<2x128xf32>
    %399 = math.tanh %297 : vector<2x128xf32>
    %400 = math.tanh %347 : vector<2x128xf32>
    %401 = math.tanh %397 : vector<2x128xf32>
    %402 = tpu.concatenate %398, %399, %400, %401 in 1 : vector<2x128xf32>, vector<2x128xf32>, vector<2x128xf32>, vector<2x128xf32> -> vector<2x512xf32>
    %c0_21 = arith.constant 0 : index
    %c0_22 = arith.constant 0 : index
    %403 = vector.load %arg7[%c0_21, %c0_22] : memref<4x32xf32, #tpu.memory_space<vmem>>, vector<1x32xf32>
    %c1_23 = arith.constant 1 : index
    %c0_24 = arith.constant 0 : index
    %404 = vector.load %arg7[%c1_23, %c0_24] : memref<4x32xf32, #tpu.memory_space<vmem>>, vector<1x32xf32>
    %c2_25 = arith.constant 2 : index
    %c0_26 = arith.constant 0 : index
    %405 = vector.load %arg7[%c2_25, %c0_26] : memref<4x32xf32, #tpu.memory_space<vmem>>, vector<1x32xf32>
    %c3_27 = arith.constant 3 : index
    %c0_28 = arith.constant 0 : index
    %406 = vector.load %arg7[%c3_27, %c0_28] : memref<4x32xf32, #tpu.memory_space<vmem>>, vector<1x32xf32>
    %c0_29 = arith.constant 0 : index
    %c0_30 = arith.constant 0 : index
    %407 = vector.load %arg5[%c0_29, %c0_30] : memref<512x32xf32, #tpu.memory_space<vmem>>, vector<512x32xf32>
    %cst_31 = arith.constant dense<0.000000e+00> : vector<2x32xf32>
    %408 = tpu.matmul %402, %407, %cst_31 {dimension_numbers = #tpu.dot_dimension_numbers<[1], [0], [0], [1], [0, 0, 1, 1], [], []>} : vector<2x512xf32>, vector<512x32xf32>, vector<2x32xf32> -> vector<2x32xf32>
    %409 = vector.broadcast %403 : vector<1x32xf32> to vector<2x32xf32>
    %410 = arith.addf %408, %409 : vector<2x32xf32>
    %411 = math.tanh %410 : vector<2x32xf32>
    %c0_32 = arith.constant 0 : index
    %c0_33 = arith.constant 0 : index
    %412 = vector.load %arg6[%c0_32, %c0_33] : memref<64x32xf32, #tpu.memory_space<vmem>>, vector<32x32xf32>
    %cst_34 = arith.constant dense<0.000000e+00> : vector<2x32xf32>
    %413 = tpu.matmul %411, %412, %cst_34 {dimension_numbers = #tpu.dot_dimension_numbers<[1], [0], [0], [1], [0, 0, 1, 1], [], []>} : vector<2x32xf32>, vector<32x32xf32>, vector<2x32xf32> -> vector<2x32xf32>
    %414 = vector.broadcast %404 : vector<1x32xf32> to vector<2x32xf32>
    %415 = arith.addf %413, %414 : vector<2x32xf32>
    %416 = math.tanh %415 : vector<2x32xf32>
    %c32_35 = arith.constant 32 : index
    %c0_36 = arith.constant 0 : index
    %417 = vector.load %arg6[%c32_35, %c0_36] : memref<64x32xf32, #tpu.memory_space<vmem>>, vector<32x32xf32>
    %cst_37 = arith.constant dense<0.000000e+00> : vector<2x32xf32>
    %418 = tpu.matmul %416, %417, %cst_37 {dimension_numbers = #tpu.dot_dimension_numbers<[1], [0], [0], [1], [0, 0, 1, 1], [], []>} : vector<2x32xf32>, vector<32x32xf32>, vector<2x32xf32> -> vector<2x32xf32>
    %419 = vector.broadcast %405 : vector<1x32xf32> to vector<2x32xf32>
    %420 = arith.addf %418, %419 : vector<2x32xf32>
    %c0_38 = arith.constant 0 : index
    %c0_39 = arith.constant 0 : index
    %421 = vector.load %arg8[%c0_38, %c0_39] : memref<2x256xf32, #tpu.memory_space<vmem>>, vector<1x256xf32>
    %c1_40 = arith.constant 1 : index
    %c0_41 = arith.constant 0 : index
    %422 = vector.load %arg8[%c1_40, %c0_41] : memref<2x256xf32, #tpu.memory_space<vmem>>, vector<1x256xf32>
    %c0_42 = arith.constant 0 : index
    %c0_43 = arith.constant 0 : index
    %423 = vector.load %arg9[%c0_42, %c0_43] : memref<2x256xf32, #tpu.memory_space<vmem>>, vector<1x256xf32>
    %c1_44 = arith.constant 1 : index
    %c0_45 = arith.constant 0 : index
    %424 = vector.load %arg9[%c1_44, %c0_45] : memref<2x256xf32, #tpu.memory_space<vmem>>, vector<1x256xf32>
    %c0_46 = arith.constant 0 : index
    %c0_47 = arith.constant 0 : index
    %425 = vector.load %arg3[%c0_46, %c0_47] : memref<128x2xf32, #tpu.memory_space<vmem>>, vector<128x2xf32>
    %c0_48 = arith.constant 0 : index
    %c0_49 = arith.constant 0 : index
    %426 = vector.load %arg8[%c0_48, %c0_49] : memref<2x256xf32, #tpu.memory_space<vmem>>, vector<2x256xf32>
    %cst_50 = arith.constant dense<0.000000e+00> : vector<128x256xf32>
    %427 = tpu.matmul %425, %426, %cst_50 {dimension_numbers = #tpu.dot_dimension_numbers<[1], [0], [0], [1], [0, 0, 1, 1], [], []>} : vector<128x2xf32>, vector<2x256xf32>, vector<128x256xf32> -> vector<128x256xf32>
    %428 = vector.broadcast %423 : vector<1x256xf32> to vector<128x256xf32>
    %429 = arith.addf %427, %428 : vector<128x256xf32>
    %430 = math.tanh %429 : vector<128x256xf32>
    %431 = arith.mulf %430, %430 : vector<128x256xf32>
    %cst_51 = arith.constant 1.000000e+00 : f32
    %432 = vector.broadcast %cst_51 : f32 to vector<128x256xf32>
    %433 = arith.subf %432, %431 : vector<128x256xf32>
    %cst_52 = arith.constant -2.000000e+00 : f32
    %434 = vector.broadcast %cst_52 : f32 to vector<128x256xf32>
    %435 = arith.mulf %434, %430 : vector<128x256xf32>
    %436 = arith.mulf %435, %433 : vector<128x256xf32>
    %437 = arith.mulf %421, %421 : vector<1x256xf32>
    %438 = arith.mulf %421, %422 : vector<1x256xf32>
    %439 = arith.mulf %422, %422 : vector<1x256xf32>
    %440 = vector.broadcast %421 : vector<1x256xf32> to vector<128x256xf32>
    %441 = arith.mulf %433, %440 : vector<128x256xf32>
    %442 = vector.broadcast %422 : vector<1x256xf32> to vector<128x256xf32>
    %443 = arith.mulf %433, %442 : vector<128x256xf32>
    %444 = vector.broadcast %437 : vector<1x256xf32> to vector<128x256xf32>
    %445 = arith.mulf %436, %444 : vector<128x256xf32>
    %446 = vector.broadcast %438 : vector<1x256xf32> to vector<128x256xf32>
    %447 = arith.mulf %436, %446 : vector<128x256xf32>
    %448 = vector.broadcast %439 : vector<1x256xf32> to vector<128x256xf32>
    %449 = arith.mulf %436, %448 : vector<128x256xf32>
    %450 = tpu.concatenate %430, %441, %443, %445, %447, %449 in 0 : vector<128x256xf32>, vector<128x256xf32>, vector<128x256xf32>, vector<128x256xf32>, vector<128x256xf32>, vector<128x256xf32> -> vector<768x256xf32>
    %451 = arith.truncf %450 : vector<768x256xf32> to vector<768x256xbf16>
    %c0_53 = arith.constant 0 : index
    %c0_54 = arith.constant 0 : index
    %452 = vector.load %arg10[%c0_53, %c0_54] : memref<256x256xbf16, #tpu.memory_space<vmem>>, vector<256x256xbf16>
    %cst_55 = arith.constant dense<0.000000e+00> : vector<768x256xf32>
    %453 = tpu.matmul %451, %452, %cst_55 {dimension_numbers = #tpu.dot_dimension_numbers<[1], [0], [0], [1], [0, 0, 1, 1], [], []>} : vector<768x256xbf16>, vector<256x256xbf16>, vector<768x256xf32> -> vector<768x256xf32>
    %454 = vector.extract_strided_slice %453 {offsets = [0, 0], sizes = [128, 256], strides = [1, 1]} : vector<768x256xf32> to vector<128x256xf32>
    %455 = vector.broadcast %424 : vector<1x256xf32> to vector<128x256xf32>
    %456 = arith.addf %454, %455 : vector<128x256xf32>
    %457 = math.tanh %456 : vector<128x256xf32>
    %458 = arith.mulf %457, %457 : vector<128x256xf32>
    %cst_56 = arith.constant 1.000000e+00 : f32
    %459 = vector.broadcast %cst_56 : f32 to vector<128x256xf32>
    %460 = arith.subf %459, %458 : vector<128x256xf32>
    %cst_57 = arith.constant -2.000000e+00 : f32
    %461 = vector.broadcast %cst_57 : f32 to vector<128x256xf32>
    %462 = arith.mulf %461, %457 : vector<128x256xf32>
    %463 = arith.mulf %462, %460 : vector<128x256xf32>
    %464 = vector.extract_strided_slice %453 {offsets = [128, 0], sizes = [128, 256], strides = [1, 1]} : vector<768x256xf32> to vector<128x256xf32>
    %465 = vector.extract_strided_slice %453 {offsets = [256, 0], sizes = [128, 256], strides = [1, 1]} : vector<768x256xf32> to vector<128x256xf32>
    %466 = vector.extract_strided_slice %453 {offsets = [384, 0], sizes = [128, 256], strides = [1, 1]} : vector<768x256xf32> to vector<128x256xf32>
    %467 = vector.extract_strided_slice %453 {offsets = [512, 0], sizes = [128, 256], strides = [1, 1]} : vector<768x256xf32> to vector<128x256xf32>
    %468 = vector.extract_strided_slice %453 {offsets = [640, 0], sizes = [128, 256], strides = [1, 1]} : vector<768x256xf32> to vector<128x256xf32>
    %469 = arith.mulf %460, %464 : vector<128x256xf32>
    %470 = arith.mulf %460, %465 : vector<128x256xf32>
    %471 = arith.mulf %460, %466 : vector<128x256xf32>
    %472 = arith.mulf %463, %464 : vector<128x256xf32>
    %473 = arith.mulf %472, %464 : vector<128x256xf32>
    %474 = arith.addf %471, %473 : vector<128x256xf32>
    %475 = arith.mulf %460, %467 : vector<128x256xf32>
    %476 = arith.mulf %463, %464 : vector<128x256xf32>
    %477 = arith.mulf %476, %465 : vector<128x256xf32>
    %478 = arith.addf %475, %477 : vector<128x256xf32>
    %479 = arith.mulf %460, %468 : vector<128x256xf32>
    %480 = arith.mulf %463, %465 : vector<128x256xf32>
    %481 = arith.mulf %480, %465 : vector<128x256xf32>
    %482 = arith.addf %479, %481 : vector<128x256xf32>
    %483 = tpu.concatenate %457, %469, %470, %474, %478, %482 in 0 : vector<128x256xf32>, vector<128x256xf32>, vector<128x256xf32>, vector<128x256xf32>, vector<128x256xf32>, vector<128x256xf32> -> vector<768x256xf32>
    %484 = arith.truncf %483 : vector<768x256xf32> to vector<768x256xbf16>
    %c0_58 = arith.constant 0 : index
    %c0_59 = arith.constant 0 : index
    %485 = vector.load %arg11[%c0_58, %c0_59] : memref<256x32xbf16, #tpu.memory_space<vmem>>, vector<256x32xbf16>
    %cst_60 = arith.constant dense<0.000000e+00> : vector<768x32xf32>
    %486 = tpu.matmul %484, %485, %cst_60 {dimension_numbers = #tpu.dot_dimension_numbers<[1], [0], [0], [1], [0, 0, 1, 1], [], []>} : vector<768x256xbf16>, vector<256x32xbf16>, vector<768x32xf32> -> vector<768x32xf32>
    %487 = tpu.iota {dimensions = array<i32: 1>} : vector<2x32xi32>
    %c16_i32 = arith.constant 16 : i32
    %488 = vector.broadcast %c16_i32 : i32 to vector<2x32xi32>
    %489 = arith.cmpi slt, %487, %488 : vector<2x32xi32>
    %cst_61 = arith.constant 0.000000e+00 : f32
    %490 = vector.broadcast %cst_61 : f32 to vector<2x32xf32>
    %491 = arith.select %489, %420, %490 : vector<2x32xi1>, vector<2x32xf32>
    %c16_i32_62 = arith.constant 16 : i32
    %492 = vector.broadcast %c16_i32_62 : i32 to vector<2x32xi32>
    %493 = arith.cmpi sge, %487, %492 : vector<2x32xi32>
    %cst_63 = arith.constant 0.000000e+00 : f32
    %494 = vector.broadcast %cst_63 : f32 to vector<2x32xf32>
    %495 = arith.select %493, %420, %494 : vector<2x32xi1>, vector<2x32xf32>
    %496 = tpu.concatenate %491, %495 in 0 : vector<2x32xf32>, vector<2x32xf32> -> vector<4x32xf32>
    %cst_64 = arith.constant dense<0.000000e+00> : vector<4x768xf32>
    %497 = tpu.matmul %496, %486, %cst_64 {dimension_numbers = #tpu.dot_dimension_numbers<[1], [1], [0], [0], [0, 0, 1, 0], [], []>} : vector<4x32xf32>, vector<768x32xf32>, vector<4x768xf32> -> vector<4x768xf32>
    %498 = vector.broadcast %406 : vector<1x32xf32> to vector<4x32xf32>
    %499 = arith.mulf %496, %498 : vector<4x32xf32>
    %cst_65 = arith.constant dense<0.000000e+00> : vector<4xf32>
    %500 = vector.multi_reduction <add>, %499, %cst_65 [1] : vector<4x32xf32> to vector<4xf32>
    %501 = vector.shape_cast %500 : vector<4xf32> to vector<4x1xf32>
    %502 = vector.extract_strided_slice %497 {offsets = [0, 0], sizes = [4, 128], strides = [1, 1]} : vector<4x768xf32> to vector<4x128xf32>
    %503 = vector.broadcast %501 : vector<4x1xf32> to vector<4x128xf32>
    %504 = arith.addf %502, %503 : vector<4x128xf32>
    %505 = vector.extract_strided_slice %497 {offsets = [0, 128], sizes = [4, 128], strides = [1, 1]} : vector<4x768xf32> to vector<4x128xf32>
    %506 = vector.extract_strided_slice %497 {offsets = [0, 256], sizes = [4, 128], strides = [1, 1]} : vector<4x768xf32> to vector<4x128xf32>
    %507 = vector.extract_strided_slice %497 {offsets = [0, 384], sizes = [4, 128], strides = [1, 1]} : vector<4x768xf32> to vector<4x128xf32>
    %508 = vector.extract_strided_slice %497 {offsets = [0, 512], sizes = [4, 128], strides = [1, 1]} : vector<4x768xf32> to vector<4x128xf32>
    %509 = vector.extract_strided_slice %497 {offsets = [0, 640], sizes = [4, 128], strides = [1, 1]} : vector<4x768xf32> to vector<4x128xf32>
    %c4_66 = arith.constant 4 : index
    %c0_67 = arith.constant 0 : index
    %510 = vector.load %arg2[%c4_66, %c0_67] : memref<5x128xf32, #tpu.memory_space<vmem>>, vector<1x128xf32>
    %cst_68 = arith.constant 0.000000e+00 : f32
    %511 = vector.broadcast %cst_68 : f32 to vector<1x128xf32>
    %512 = arith.subf %511, %510 : vector<1x128xf32>
    %cst_69 = arith.constant 0.166666672 : f32
    %513 = vector.broadcast %cst_69 : f32 to vector<1x128xf32>
    %514 = arith.mulf %512, %513 : vector<1x128xf32>
    %515 = math.exp %514 : vector<1x128xf32>
    %cst_70 = arith.constant 1.000000e+00 : f32
    %516 = vector.broadcast %cst_70 : f32 to vector<1x128xf32>
    %517 = arith.subf %516, %515 : vector<1x128xf32>
    %cst_71 = arith.constant 0.166666672 : f32
    %518 = vector.broadcast %cst_71 : f32 to vector<1x128xf32>
    %519 = arith.mulf %515, %518 : vector<1x128xf32>
    %cst_72 = arith.constant 0.000000e+00 : f32
    %520 = vector.broadcast %cst_72 : f32 to vector<1x128xf32>
    %521 = arith.subf %520, %515 : vector<1x128xf32>
    %cst_73 = arith.constant 0.027777778 : f32
    %522 = vector.broadcast %cst_73 : f32 to vector<1x128xf32>
    %523 = arith.mulf %521, %522 : vector<1x128xf32>
    %524 = vector.broadcast %523 : vector<1x128xf32> to vector<4x128xf32>
    %525 = arith.mulf %524, %504 : vector<4x128xf32>
    %cst_74 = arith.constant 2.000000e+00 : f32
    %526 = vector.broadcast %cst_74 : f32 to vector<1x128xf32>
    %527 = arith.mulf %526, %519 : vector<1x128xf32>
    %528 = vector.broadcast %527 : vector<1x128xf32> to vector<4x128xf32>
    %529 = arith.mulf %528, %505 : vector<4x128xf32>
    %530 = arith.addf %525, %529 : vector<4x128xf32>
    %531 = vector.broadcast %517 : vector<1x128xf32> to vector<4x128xf32>
    %532 = arith.mulf %531, %507 : vector<4x128xf32>
    %533 = arith.addf %530, %532 : vector<4x128xf32>
    %534 = vector.broadcast %519 : vector<1x128xf32> to vector<4x128xf32>
    %535 = arith.mulf %534, %506 : vector<4x128xf32>
    %536 = vector.broadcast %517 : vector<1x128xf32> to vector<4x128xf32>
    %537 = arith.mulf %536, %508 : vector<4x128xf32>
    %538 = arith.addf %535, %537 : vector<4x128xf32>
    %539 = vector.broadcast %517 : vector<1x128xf32> to vector<4x128xf32>
    %540 = arith.mulf %539, %509 : vector<4x128xf32>
    %541 = vector.broadcast %519 : vector<1x128xf32> to vector<4x128xf32>
    %542 = arith.mulf %541, %504 : vector<4x128xf32>
    %543 = vector.broadcast %517 : vector<1x128xf32> to vector<4x128xf32>
    %544 = arith.mulf %543, %505 : vector<4x128xf32>
    %545 = arith.addf %542, %544 : vector<4x128xf32>
    %546 = vector.broadcast %517 : vector<1x128xf32> to vector<4x128xf32>
    %547 = arith.mulf %546, %506 : vector<4x128xf32>
    %548 = vector.extract_strided_slice %533 {offsets = [0, 0], sizes = [2, 128], strides = [1, 1]} : vector<4x128xf32> to vector<2x128xf32>
    %549 = vector.extract_strided_slice %533 {offsets = [2, 0], sizes = [2, 128], strides = [1, 1]} : vector<4x128xf32> to vector<2x128xf32>
    %550 = vector.extract_strided_slice %538 {offsets = [0, 0], sizes = [2, 128], strides = [1, 1]} : vector<4x128xf32> to vector<2x128xf32>
    %551 = vector.extract_strided_slice %538 {offsets = [2, 0], sizes = [2, 128], strides = [1, 1]} : vector<4x128xf32> to vector<2x128xf32>
    %552 = vector.extract_strided_slice %540 {offsets = [0, 0], sizes = [2, 128], strides = [1, 1]} : vector<4x128xf32> to vector<2x128xf32>
    %553 = vector.extract_strided_slice %540 {offsets = [2, 0], sizes = [2, 128], strides = [1, 1]} : vector<4x128xf32> to vector<2x128xf32>
    %554 = vector.extract_strided_slice %545 {offsets = [0, 0], sizes = [2, 128], strides = [1, 1]} : vector<4x128xf32> to vector<2x128xf32>
    %555 = vector.extract_strided_slice %545 {offsets = [2, 0], sizes = [2, 128], strides = [1, 1]} : vector<4x128xf32> to vector<2x128xf32>
    %556 = vector.extract_strided_slice %547 {offsets = [0, 0], sizes = [2, 128], strides = [1, 1]} : vector<4x128xf32> to vector<2x128xf32>
    %557 = vector.extract_strided_slice %547 {offsets = [2, 0], sizes = [2, 128], strides = [1, 1]} : vector<4x128xf32> to vector<2x128xf32>
    %cst_75 = arith.constant 6.500000e-01 : f32
    %558 = vector.broadcast %cst_75 : f32 to vector<2x128xf32>
    %559 = arith.mulf %558, %551 : vector<2x128xf32>
    %560 = arith.addf %548, %559 : vector<2x128xf32>
    %cst_76 = arith.constant 3.500000e-01 : f32
    %561 = vector.broadcast %cst_76 : f32 to vector<2x128xf32>
    %562 = arith.mulf %561, %552 : vector<2x128xf32>
    %563 = arith.addf %560, %562 : vector<2x128xf32>
    %cst_77 = arith.constant 1.09890115 : f32
    %564 = vector.broadcast %cst_77 : f32 to vector<2x128xf32>
    %565 = arith.mulf %564, %563 : vector<2x128xf32>
    %cst_78 = arith.constant 6.500000e-01 : f32
    %566 = vector.broadcast %cst_78 : f32 to vector<2x128xf32>
    %567 = arith.mulf %566, %550 : vector<2x128xf32>
    %568 = arith.addf %553, %567 : vector<2x128xf32>
    %cst_79 = arith.constant 3.500000e-01 : f32
    %569 = vector.broadcast %cst_79 : f32 to vector<2x128xf32>
    %570 = arith.mulf %569, %549 : vector<2x128xf32>
    %571 = arith.addf %568, %570 : vector<2x128xf32>
    %cst_80 = arith.constant 1.09890115 : f32
    %572 = vector.broadcast %cst_80 : f32 to vector<2x128xf32>
    %573 = arith.mulf %572, %571 : vector<2x128xf32>
    %cst_81 = arith.constant 3.000000e-01 : f32
    %574 = vector.broadcast %cst_81 : f32 to vector<2x128xf32>
    %575 = arith.mulf %574, %557 : vector<2x128xf32>
    %576 = arith.addf %554, %575 : vector<2x128xf32>
    %cst_82 = arith.constant 1.09890115 : f32
    %577 = vector.broadcast %cst_82 : f32 to vector<2x128xf32>
    %578 = arith.mulf %577, %576 : vector<2x128xf32>
    %c0_83 = arith.constant 0 : index
    %c0_84 = arith.constant 0 : index
    %579 = vector.load %arg2[%c0_83, %c0_84] : memref<5x128xf32, #tpu.memory_space<vmem>>, vector<2x128xf32>
    %580 = arith.addf %578, %579 : vector<2x128xf32>
    %581 = arith.addf %556, %555 : vector<2x128xf32>
    %cst_85 = arith.constant 0.384615391 : f32
    %582 = vector.broadcast %cst_85 : f32 to vector<2x128xf32>
    %583 = arith.mulf %582, %581 : vector<2x128xf32>
    %c2_86 = arith.constant 2 : index
    %c0_87 = arith.constant 0 : index
    %584 = vector.load %arg2[%c2_86, %c0_87] : memref<5x128xf32, #tpu.memory_space<vmem>>, vector<2x128xf32>
    %585 = arith.addf %583, %584 : vector<2x128xf32>
    %586 = tpu.iota {dimensions = array<i32: 1>} : vector<1x128xi32>
    %c8_i32 = arith.constant 8 : i32
    %587 = vector.broadcast %c8_i32 : i32 to vector<1x128xi32>
    %588 = arith.cmpi slt, %586, %587 : vector<1x128xi32>
    %c8_i32_88 = arith.constant 8 : i32
    %589 = vector.broadcast %c8_i32_88 : i32 to vector<1x128xi32>
    %590 = arith.cmpi sge, %586, %589 : vector<1x128xi32>
    %c109_i32 = arith.constant 109 : i32
    %591 = vector.broadcast %c109_i32 : i32 to vector<1x128xi32>
    %592 = arith.cmpi slt, %586, %591 : vector<1x128xi32>
    %593 = arith.andi %590, %592 : vector<1x128xi1>
    %594 = arith.mulf %565, %565 : vector<2x128xf32>
    %595 = arith.mulf %573, %573 : vector<2x128xf32>
    %596 = arith.addf %594, %595 : vector<2x128xf32>
    %cst_89 = arith.constant 0.000000e+00 : f32
    %597 = vector.shape_cast %588 : vector<1x128xi1> to vector<1x128xi1>
    %598 = vector.broadcast %597 : vector<1x128xi1> to vector<2x128xi1>
    %599 = vector.broadcast %cst_89 : f32 to vector<2x128xf32>
    %600 = arith.select %598, %596, %599 : vector<2x128xi1>, vector<2x128xf32>
    %601 = vector.shape_cast %600 : vector<2x128xf32> to vector<1x2x128xf32>
    %cst_90 = arith.constant dense<0.000000e+00> : vector<1xf32>
    %602 = vector.multi_reduction <add>, %601, %cst_90 [1, 2] : vector<1x2x128xf32> to vector<1xf32>
    %603 = vector.shape_cast %602 : vector<1xf32> to vector<1x1x1xf32>
    %604 = vector.extract %603[0, 0, 0] : f32 from vector<1x1x1xf32>
    %605 = vector.broadcast %604 : f32 to vector<1x1xf32>
    %606 = arith.mulf %580, %580 : vector<2x128xf32>
    %607 = arith.mulf %585, %585 : vector<2x128xf32>
    %608 = arith.addf %606, %607 : vector<2x128xf32>
    %cst_91 = arith.constant 0.000000e+00 : f32
    %609 = vector.shape_cast %593 : vector<1x128xi1> to vector<1x128xi1>
    %610 = vector.broadcast %609 : vector<1x128xi1> to vector<2x128xi1>
    %611 = vector.broadcast %cst_91 : f32 to vector<2x128xf32>
    %612 = arith.select %610, %608, %611 : vector<2x128xi1>, vector<2x128xf32>
    %613 = vector.shape_cast %612 : vector<2x128xf32> to vector<1x2x128xf32>
    %cst_92 = arith.constant dense<0.000000e+00> : vector<1xf32>
    %614 = vector.multi_reduction <add>, %613, %cst_92 [1, 2] : vector<1x2x128xf32> to vector<1xf32>
    %615 = vector.shape_cast %614 : vector<1xf32> to vector<1x1x1xf32>
    %616 = vector.extract %615[0, 0, 0] : f32 from vector<1x1x1xf32>
    %617 = vector.broadcast %616 : f32 to vector<1x1xf32>
    %cst_93 = arith.constant 6.250000e-02 : f32
    %618 = vector.broadcast %cst_93 : f32 to vector<1x1xf32>
    %619 = arith.mulf %618, %605 : vector<1x1xf32>
    %cst_94 = arith.constant 0.00495049497 : f32
    %620 = vector.broadcast %cst_94 : f32 to vector<1x1xf32>
    %621 = arith.mulf %620, %617 : vector<1x1xf32>
    %622 = arith.addf %619, %621 : vector<1x1xf32>
    %c0_95 = arith.constant 0 : index
    %c0_96 = arith.constant 0 : index
    %623 = vector.load %arg12[%c0_95, %c0_96] : memref<1x1xf32, #tpu.memory_space<vmem>>, vector<1x1xf32>
    tpu.vector_store %arg12[%c0_95, %c0_96], %622 {strides = array<i32>} : memref<1x1xf32, #tpu.memory_space<vmem>>, vector<1x1xf32>,
    return
  }
  func.func @transform_0(%arg0: i32) -> (i32, i32) {
    %c0_i32 = arith.constant 0 : i32
    %c0_i32_0 = arith.constant 0 : i32
    %c0_i32_1 = arith.constant 0 : i32
    return %c0_i32, %c0_i32_0 : i32, i32
  }
  func.func @transform_1(%arg0: i32) -> (i32, i32) {
    %c0_i32 = arith.constant 0 : i32
    %c0_i32_0 = arith.constant 0 : i32
    %c0_i32_1 = arith.constant 0 : i32
    return %c0_i32, %c0_i32_0 : i32, i32
  }
  func.func @transform_2(%arg0: i32) -> (i32, i32) {
    %c0_i32 = arith.constant 0 : i32
    %c0_i32_0 = arith.constant 0 : i32
    %c0_i32_1 = arith.constant 0 : i32
    return %c0_i32, %c0_i32_0 : i32, i32
  }
  func.func @transform_3(%arg0: i32) -> i32 {
    %c0_i32 = arith.constant 0 : i32
    %c0_i32_0 = arith.constant 0 : i32
    return %c0_i32 : i32
  }
  func.func @transform_4(%arg0: i32) -> (i32, i32) {
    %c0_i32 = arith.constant 0 : i32
    %c0_i32_0 = arith.constant 0 : i32
    %c0_i32_1 = arith.constant 0 : i32
    return %c0_i32, %c0_i32_0 : i32, i32
  }
  func.func @transform_5(%arg0: i32) -> (i32, i32) {
    %c0_i32 = arith.constant 0 : i32
    %c0_i32_0 = arith.constant 0 : i32
    %c0_i32_1 = arith.constant 0 : i32
    return %c0_i32, %c0_i32_0 : i32, i32
  }
  func.func @transform_6(%arg0: i32) -> (i32, i32) {
    %c0_i32 = arith.constant 0 : i32
    %c0_i32_0 = arith.constant 0 : i32
    %c0_i32_1 = arith.constant 0 : i32
    return %c0_i32, %c0_i32_0 : i32, i32
  }
  func.func @transform_7(%arg0: i32) -> (i32, i32) {
    %c0_i32 = arith.constant 0 : i32
    %c0_i32_0 = arith.constant 0 : i32
    %c0_i32_1 = arith.constant 0 : i32
    return %c0_i32, %c0_i32_0 : i32, i32
  }
  func.func @transform_8(%arg0: i32) -> (i32, i32) {
    %c0_i32 = arith.constant 0 : i32
    %c0_i32_0 = arith.constant 0 : i32
    %c0_i32_1 = arith.constant 0 : i32
    return %c0_i32, %c0_i32_0 : i32, i32
  }
  func.func @transform_9(%arg0: i32) -> (i32, i32) {
    %c0_i32 = arith.constant 0 : i32
    %c0_i32_0 = arith.constant 0 : i32
    %c0_i32_1 = arith.constant 0 : i32
    return %c0_i32, %c0_i32_0 : i32, i32
  }
  func.func @transform_10(%arg0: i32) -> (i32, i32) {
    %c0_i32 = arith.constant 0 : i32
    %c0_i32_0 = arith.constant 0 : i32
    %c0_i32_1 = arith.constant 0 : i32
    return %c0_i32, %c0_i32_0 : i32, i32
  }
  func.func @transform_11(%arg0: i32) -> (i32, i32) {
    %c0_i32 = arith.constant 0 : i32
    %c0_i32_0 = arith.constant 0 : i32
    %c0_i32_1 = arith.constant 0 : i32
    return %c0_i32, %c0_i32_0 : i32, i32
  }
}

</mosaic_0001>

<llo_original>
// kernel: tpu_custom_call.1
$region0: #{tpu_custom_call.1}
  #allocation0 [shape = 'u32[]', space=smem, size = 0x4, offset = 0x4, fixed_abs, tag = 'smem constant byte address 0x4 - core index']
  #allocation1 [shape = 'u32[144,128]{1,0:T(1,128)}', space=vmem, size = 0x12000, scoped, tag = 'internal scratch']
  %s0 = inlined_call_operand.vmem [shape: f32[4,128], index: 0, kind: input, shape index: {}]
  %s1 = inlined_call_operand.vmem [shape: f32[5,128], index: 1, kind: input, shape index: {}]
  %s2 = inlined_call_operand.vmem [shape: f32[128,2], index: 2, kind: input, shape index: {}]
  %s3 = inlined_call_operand.vmem [shape: f32[92], index: 3, kind: input, shape index: {}]
  %s4 = inlined_call_operand.vmem [shape: f32[512,32], index: 4, kind: input, shape index: {}]
  %s5 = inlined_call_operand.vmem [shape: f32[64,32], index: 5, kind: input, shape index: {}]
  %s6 = inlined_call_operand.vmem [shape: f32[4,32], index: 6, kind: input, shape index: {}]
  %s7 = inlined_call_operand.vmem [shape: f32[2,256], index: 7, kind: input, shape index: {}]
  %s8 = inlined_call_operand.vmem [shape: f32[2,256], index: 8, kind: input, shape index: {}]
  %s9 = inlined_call_operand.vmem [shape: bf16[256,256], index: 9, kind: input, shape index: {}]
  %s10 = inlined_call_operand.vmem [shape: bf16[256,32], index: 10, kind: input, shape index: {}]
  %s11 = inlined_call_operand.hbm [shape: f32[1,1], index: 11, kind: output, shape index: {}]
  %s12 = sld [smem:[#allocation0]]
  $region58: #{tpu_custom_call.1} parent=0
    _
  %s14 = ssub.s32 1, %s12
  %s15 = scalar_select 0, %s14, %s12
  $region1: #{tpu_custom_call.1} parent=0
    #allocation2 [shape = 'u8[512]{0}', space=smem, size = 0x200, scoped, tag = 'input window, operand 3, single buffered']
    #allocation3 [shape = 's32[1]{0}', space=sflag, size = 0x4, scoped, tag = 'scoped memory for tpu_custom_call.1']
    #allocation4 [shape = 's32[1]{0}', space=sflag, size = 0x4, scoped, tag = 'scoped memory for tpu_custom_call.1']
    #allocation5 [shape = 'u8[512]{0}', space=vmem, size = 0x400, scoped, tag = 'output window, operand 0, single buffered']
    %16 = vsyncpa [#allocation4], 0
    %17 = vsyncpa [#allocation3], 0
    // Predicated region
    $region2: #{tpu_custom_call.1} parent=1 // pred_check
      _
    $region3: #{tpu_custom_call.1} parent=1 // pred_check_branch
      %19 = sbr.rel (0) target = $region5
    $region4: #{tpu_custom_call.1} parent=1 // pred_region
      _
    $region5: #{tpu_custom_call.1} parent=1 // pred_fallthru
      _
    // Predicated region
    $region6: #{tpu_custom_call.1} parent=1 // pred_check
      _
    $region7: #{tpu_custom_call.1} parent=1 // pred_check_branch
      %21 = sbr.rel (0) target = $region9
    $region8: #{tpu_custom_call.1} parent=1 // pred_region
      _
    $region9: #{tpu_custom_call.1} parent=1 // pred_fallthru
      _
    // Predicated region
    $region10: #{tpu_custom_call.1} parent=1 // pred_check
      _
    $region11: #{tpu_custom_call.1} parent=1 // pred_check_branch
      %23 = sbr.rel (0) target = $region13
    $region12: #{tpu_custom_call.1} parent=1 // pred_region
      _
    $region13: #{tpu_custom_call.1} parent=1 // pred_fallthru
      _
    // Predicated region
    $region14: #{tpu_custom_call.1} parent=1 // pred_check
      _
    $region15: #{tpu_custom_call.1} parent=1 // pred_check_branch
      %25 = sbr.rel (0) target = $region17
    $region16: #{tpu_custom_call.1} parent=1 // pred_region
      %s27 = ssub.s32 16, 16
      %28 = vsyncadd [#allocation4], %s27
      %s30 = sshll.u32 %s3, 4
      %s31 = int_to_ptr.vmem [resolvable:$true] %s30
      %33 = dma.vmem_to_smem %s31, 16, [#allocation2], [#allocation4]
    $region17: #{tpu_custom_call.1} parent=1 // pred_fallthru
      _
    // Predicated region
    $region18: #{tpu_custom_call.1} parent=1 // pred_check
      _
    $region19: #{tpu_custom_call.1} parent=1 // pred_check_branch
      %35 = sbr.rel (0) target = $region21
    $region20: #{tpu_custom_call.1} parent=1 // pred_region
      _
    $region21: #{tpu_custom_call.1} parent=1 // pred_fallthru
      _
    // Predicated region
    $region22: #{tpu_custom_call.1} parent=1 // pred_check
      _
    $region23: #{tpu_custom_call.1} parent=1 // pred_check_branch
      %37 = sbr.rel (0) target = $region25
    $region24: #{tpu_custom_call.1} parent=1 // pred_region
      _
    $region25: #{tpu_custom_call.1} parent=1 // pred_fallthru
      _
    // Predicated region
    $region26: #{tpu_custom_call.1} parent=1 // pred_check
      _
    $region27: #{tpu_custom_call.1} parent=1 // pred_check_branch
      %39 = sbr.rel (0) target = $region29
    $region28: #{tpu_custom_call.1} parent=1 // pred_region
      _
    $region29: #{tpu_custom_call.1} parent=1 // pred_fallthru
      _
    // Predicated region
    $region30: #{tpu_custom_call.1} parent=1 // pred_check
      _
    $region31: #{tpu_custom_call.1} parent=1 // pred_check_branch
      %41 = sbr.rel (0) target = $region33
    $region32: #{tpu_custom_call.1} parent=1 // pred_region
      _
    $region33: #{tpu_custom_call.1} parent=1 // pred_fallthru
      _
    // Predicated region
    $region34: #{tpu_custom_call.1} parent=1 // pred_check
      _
    $region35: #{tpu_custom_call.1} parent=1 // pred_check_branch
      %43 = sbr.rel (0) target = $region37
    $region36: #{tpu_custom_call.1} parent=1 // pred_region
      _
    $region37: #{tpu_custom_call.1} parent=1 // pred_fallthru
      _
    // Predicated region
    $region38: #{tpu_custom_call.1} parent=1 // pred_check
      _
    $region39: #{tpu_custom_call.1} parent=1 // pred_check_branch
      %45 = sbr.rel (0) target = $region41
    $region40: #{tpu_custom_call.1} parent=1 // pred_region
      _
    $region41: #{tpu_custom_call.1} parent=1 // pred_fallthru
      _
    // Predicated region
    $region42: #{tpu_custom_call.1} parent=1 // pred_check
      _
    $region43: #{tpu_custom_call.1} parent=1 // pred_check_branch
      %47 = sbr.rel (0) target = $region45
    $region44: #{tpu_custom_call.1} parent=1 // pred_region
      _
    $region45: #{tpu_custom_call.1} parent=1 // pred_fallthru
      _
    // Predicated region
    $region46: #{tpu_custom_call.1} parent=1 // pred_check
      _
    $region47: #{tpu_custom_call.1} parent=1 // pred_check_branch
      %49 = sbr.rel (0) target = $region49
    $region48: #{tpu_custom_call.1} parent=1 // pred_region
      %50 = dma.done [#allocation4], 16
    $region49: #{tpu_custom_call.1} parent=1 // pred_fallthru
      _
    %51 = sfence
    %v53 = vlaneseq
    %v54 = vand.u32 %v53, 127
    %vm55 = vcmp.lt.s32.totalorder %v54, 101
    %v56 = vcvt.s32.f32 %v54
    %v57 = vmul.f32 %v56, 0.01
    %v58 = vsel %vm55, %v57, 0.0
    %v59 = vld [vmem:[%s0] sm:$0x3]
    %v60 = vld [vmem:[%s0 + $0x2] sm:$0x3]
    %61 = vrot.lane.b32.xlu0 %v59, 1
    %v62 = vpop.permute.xlu0 %61
    %63 = vrot.lane.b32.xlu0 %v59, 127
    %v64 = vpop.permute.xlu0 %63
    %65 = vrot.lane.b32.xlu0 %v60, 1
    %v66 = vpop.permute.xlu0 %65
    %67 = vrot.lane.b32.xlu0 %v60, 127
    %v68 = vpop.permute.xlu0 %67
    %69 = vrot.lane.b32.xlu0 %v58, 1
    %v70 = vpop.permute.xlu0 %69
    %71 = vrot.lane.b32.xlu0 %v58, 127
    %v72 = vpop.permute.xlu0 %71
    %s73 = sld [smem:[#allocation2]]
    %v74 = vstv %s73
    %v75 = vmul.f32 %v74, %v62
    %s76 = sld [smem:[#allocation2 + $0x1]]
    %v77 = vstv %s76
    %v78 = vmul.f32 %v77, %v59
    %v79 = vadd.f32 %v75, %v78
    %s80 = sld [smem:[#allocation2 + $0x2]]
    %v81 = vstv %s80
    %v82 = vmul.f32 %v81, %v64
    %v83 = vadd.f32 %v79, %v82
    %s84 = sld [smem:[#allocation2 + $0x3]]
    %v85 = vstv %s84
    %v86 = vmul.f32 %v85, %v66
    %s87 = sld [smem:[#allocation2 + $0x4]]
    %v88 = vstv %s87
    %v89 = vmul.f32 %v88, %v60
    %v90 = vadd.f32 %v86, %v89
    %s91 = sld [smem:[#allocation2 + $0x5]]
    %v92 = vstv %s91
    %v93 = vmul.f32 %v92, %v68
    %v94 = vadd.f32 %v90, %v93
    %s95 = sld [smem:[#allocation2 + $0x6]]
    %v96 = vstv %s95
    %v97 = vmul.f32 %v96, %v70
    %s98 = sld [smem:[#allocation2 + $0x7]]
    %v99 = vstv %s98
    %v100 = vmul.f32 %v99, %v58
    %v101 = vadd.f32 %v97, %v100
    %s102 = sld [smem:[#allocation2 + $0x8]]
    %v103 = vstv %s102
    %v104 = vmul.f32 %v103, %v72
    %v105 = vadd.f32 %v101, %v104
    %v106 = vadd.f32 %v83, %v94
    %v107 = vadd.f32 %v106, %v105
    %s108 = sld [smem:[#allocation2 + $0x24]]
    %v109 = vstv %s108
    %v110 = vadd.f32 %v107, %v109
    %s111 = sld [smem:[#allocation2 + $0x9]]
    %v112 = vstv %s111
    %v113 = vmul.f32 %v112, %v62
    %s114 = sld [smem:[#allocation2 + $0xa]]
    %v115 = vstv %s114
    %v116 = vmul.f32 %v115, %v59
    %v117 = vadd.f32 %v113, %v116
    %s118 = sld [smem:[#allocation2 + $0xb]]
    %v119 = vstv %s118
    %v120 = vmul.f32 %v119, %v64
    %v121 = vadd.f32 %v117, %v120
    %s122 = sld [smem:[#allocation2 + $0xc]]
    %v123 = vstv %s122
    %v124 = vmul.f32 %v123, %v66
    %s125 = sld [smem:[#allocation2 + $0xd]]
    %v126 = vstv %s125
    %v127 = vmul.f32 %v126, %v60
    %v128 = vadd.f32 %v124, %v127
    %s129 = sld [smem:[#allocation2 + $0xe]]
    %v130 = vstv %s129
    %v131 = vmul.f32 %v130, %v68
    %v132 = vadd.f32 %v128, %v131
    %s133 = sld [smem:[#allocation2 + $0xf]]
    %v134 = vstv %s133
    %v135 = vmul.f32 %v134, %v70
    %s136 = sld [smem:[#allocation2 + $0x10]]
    %v137 = vstv %s136
    %v138 = vmul.f32 %v137, %v58
    %v139 = vadd.f32 %v135, %v138
    %s140 = sld [smem:[#allocation2 + $0x11]]
    %v141 = vstv %s140
    %v142 = vmul.f32 %v141, %v72
    %v143 = vadd.f32 %v139, %v142
    %v144 = vadd.f32 %v121, %v132
    %v145 = vadd.f32 %v144, %v143
    %s146 = sld [smem:[#allocation2 + $0x25]]
    %v147 = vstv %s146
    %v148 = vadd.f32 %v145, %v147
    %s149 = sld [smem:[#allocation2 + $0x12]]
    %v150 = vstv %s149
    %v151 = vmul.f32 %v150, %v62
    %s152 = sld [smem:[#allocation2 + $0x13]]
    %v153 = vstv %s152
    %v154 = vmul.f32 %v153, %v59
    %v155 = vadd.f32 %v151, %v154
    %s156 = sld [smem:[#allocation2 + $0x14]]
    %v157 = vstv %s156
    %v158 = vmul.f32 %v157, %v64
    %v159 = vadd.f32 %v155, %v158
    %s160 = sld [smem:[#allocation2 + $0x15]]
    %v161 = vstv %s160
    %v162 = vmul.f32 %v161, %v66
    %s163 = sld [smem:[#allocation2 + $0x16]]
    %v164 = vstv %s163
    %v165 = vmul.f32 %v164, %v60
    %v166 = vadd.f32 %v162, %v165
    %s167 = sld [smem:[#allocation2 + $0x17]]
    %v168 = vstv %s167
    %v169 = vmul.f32 %v168, %v68
    %v170 = vadd.f32 %v166, %v169
    %s171 = sld [smem:[#allocation2 + $0x18]]
    %v172 = vstv %s171
    %v173 = vmul.f32 %v172, %v70
    %s174 = sld [smem:[#allocation2 + $0x19]]
    %v175 = vstv %s174
    %v176 = vmul.f32 %v175, %v58
    %v177 = vadd.f32 %v173, %v176
    %s178 = sld [smem:[#allocation2 + $0x1a]]
    %v179 = vstv %s178
    %v180 = vmul.f32 %v179, %v72
    %v181 = vadd.f32 %v177, %v180
    %v182 = vadd.f32 %v159, %v170
    %v183 = vadd.f32 %v182, %v181
    %s184 = sld [smem:[#allocation2 + $0x26]]
    %v185 = vstv %s184
    %v186 = vadd.f32 %v183, %v185
    %s187 = sld [smem:[#allocation2 + $0x1b]]
    %v188 = vstv %s187
    %v189 = vmul.f32 %v188, %v62
    %s190 = sld [smem:[#allocation2 + $0x1c]]
    %v191 = vstv %s190
    %v192 = vmul.f32 %v191, %v59
    %v193 = vadd.f32 %v189, %v192
    %s194 = sld [smem:[#allocation2 + $0x1d]]
    %v195 = vstv %s194
    %v196 = vmul.f32 %v195, %v64
    %v197 = vadd.f32 %v193, %v196
    %s198 = sld [smem:[#allocation2 + $0x1e]]
    %v199 = vstv %s198
    %v200 = vmul.f32 %v199, %v66
    %s201 = sld [smem:[#allocation2 + $0x1f]]
    %v202 = vstv %s201
    %v203 = vmul.f32 %v202, %v60
    %v204 = vadd.f32 %v200, %v203
    %s205 = sld [smem:[#allocation2 + $0x20]]
    %v206 = vstv %s205
    %v207 = vmul.f32 %v206, %v68
    %v208 = vadd.f32 %v204, %v207
    %s209 = sld [smem:[#allocation2 + $0x21]]
    %v210 = vstv %s209
    %v211 = vmul.f32 %v210, %v70
    %s212 = sld [smem:[#allocation2 + $0x22]]
    %v213 = vstv %s212
    %v214 = vmul.f32 %v213, %v58
    %v215 = vadd.f32 %v211, %v214
    %s216 = sld [smem:[#allocation2 + $0x23]]
    %v217 = vstv %s216
    %v218 = vmul.f32 %v217, %v72
    %v219 = vadd.f32 %v215, %v218
    %v220 = vadd.f32 %v197, %v208
    %v221 = vadd.f32 %v220, %v219
    %s222 = sld [smem:[#allocation2 + $0x27]]
    %v223 = vstv %s222
    %v224 = vadd.f32 %v221, %v223
    %v225 = vtanh.pop %v110
    %v226 = vsel %vm55, 1, 0
    %vm227 = vcmp.eq.s32.totalorder %v226, 1
    %v228 = vsel %vm227, %v225, 0.0
    %v229 = vtanh.pop %v148
    %v230 = vsel %vm227, %v229, 0.0
    %v231 = vtanh.pop %v186
    %v232 = vsel %vm227, %v231, 0.0
    %v233 = vtanh.pop %v224
    %v234 = vsel %vm227, %v233, 0.0
    %235 = vrot.lane.b32.xlu0 %v228, 1
    %v236 = vpop.permute.xlu0 %235
    %237 = vrot.lane.b32.xlu0 %v228, 127
    %v238 = vpop.permute.xlu0 %237
    %239 = vrot.lane.b32.xlu0 %v230, 1
    %v240 = vpop.permute.xlu0 %239
    %241 = vrot.lane.b32.xlu0 %v230, 127
    %v242 = vpop.permute.xlu0 %241
    %243 = vrot.lane.b32.xlu0 %v232, 1
    %v244 = vpop.permute.xlu0 %243
    %245 = vrot.lane.b32.xlu0 %v232, 127
    %v246 = vpop.permute.xlu0 %245
    %247 = vrot.lane.b32.xlu0 %v234, 1
    %v248 = vpop.permute.xlu0 %247
    %249 = vrot.lane.b32.xlu0 %v234, 127
    %v250 = vpop.permute.xlu0 %249
    %s251 = sld [smem:[#allocation2 + $0x28]]
    %v252 = vstv %s251
    %v253 = vmul.f32 %v252, %v236
    %s254 = sld [smem:[#allocation2 + $0x29]]
    %v255 = vstv %s254
    %v256 = vmul.f32 %v255, %v228
    %v257 = vadd.f32 %v253, %v256
    %s258 = sld [smem:[#allocation2 + $0x2a]]
    %v259 = vstv %s258
    %v260 = vmul.f32 %v259, %v238
    %v261 = vadd.f32 %v257, %v260
    %s262 = sld [smem:[#allocation2 + $0x2b]]
    %v263 = vstv %s262
    %v264 = vmul.f32 %v263, %v240
    %s265 = sld [smem:[#allocation2 + $0x2c]]
    %v266 = vstv %s265
    %v267 = vmul.f32 %v266, %v230
    %v268 = vadd.f32 %v264, %v267
    %s269 = sld [smem:[#allocation2 + $0x2d]]
    %v270 = vstv %s269
    %v271 = vmul.f32 %v270, %v242
    %v272 = vadd.f32 %v268, %v271
    %s273 = sld [smem:[#allocation2 + $0x2e]]
    %v274 = vstv %s273
    %v275 = vmul.f32 %v274, %v244
    %s276 = sld [smem:[#allocation2 + $0x2f]]
    %v277 = vstv %s276
    %v278 = vmul.f32 %v277, %v232
    %v279 = vadd.f32 %v275, %v278
    %s280 = sld [smem:[#allocation2 + $0x30]]
    %v281 = vstv %s280
    %v282 = vmul.f32 %v281, %v246
    %v283 = vadd.f32 %v279, %v282
    %s284 = sld [smem:[#allocation2 + $0x31]]
    %v285 = vstv %s284
    %v286 = vmul.f32 %v285, %v248
    %s287 = sld [smem:[#allocation2 + $0x32]]
    %v288 = vstv %s287
    %v289 = vmul.f32 %v288, %v234
    %v290 = vadd.f32 %v286, %v289
    %s291 = sld [smem:[#allocation2 + $0x33]]
    %v292 = vstv %s291
    %v293 = vmul.f32 %v292, %v250
    %v294 = vadd.f32 %v290, %v293
    %v295 = vadd.f32 %v261, %v272
    %v296 = vadd.f32 %v295, %v283
    %v297 = vadd.f32 %v296, %v294
    %s298 = sld [smem:[#allocation2 + $0x58]]
    %v299 = vstv %s298
    %v300 = vadd.f32 %v297, %v299
    %s301 = sld [smem:[#allocation2 + $0x34]]
    %v302 = vstv %s301
    %v303 = vmul.f32 %v302, %v236
    %s304 = sld [smem:[#allocation2 + $0x35]]
    %v305 = vstv %s304
    %v306 = vmul.f32 %v305, %v228
    %v307 = vadd.f32 %v303, %v306
    %s308 = sld [smem:[#allocation2 + $0x36]]
    %v309 = vstv %s308
    %v310 = vmul.f32 %v309, %v238
    %v311 = vadd.f32 %v307, %v310
    %s312 = sld [smem:[#allocation2 + $0x37]]
    %v313 = vstv %s312
    %v314 = vmul.f32 %v313, %v240
    %s315 = sld [smem:[#allocation2 + $0x38]]
    %v316 = vstv %s315
    %v317 = vmul.f32 %v316, %v230
    %v318 = vadd.f32 %v314, %v317
    %s319 = sld [smem:[#allocation2 + $0x39]]
    %v320 = vstv %s319
    %v321 = vmul.f32 %v320, %v242
    %v322 = vadd.f32 %v318, %v321
    %s323 = sld [smem:[#allocation2 + $0x3a]]
    %v324 = vstv %s323
    %v325 = vmul.f32 %v324, %v244
    %s326 = sld [smem:[#allocation2 + $0x3b]]
    %v327 = vstv %s326
    %v328 = vmul.f32 %v327, %v232
    %v329 = vadd.f32 %v325, %v328
    %s330 = sld [smem:[#allocation2 + $0x3c]]
    %v331 = vstv %s330
    %v332 = vmul.f32 %v331, %v246
    %v333 = vadd.f32 %v329, %v332
    %s334 = sld [smem:[#allocation2 + $0x3d]]
    %v335 = vstv %s334
    %v336 = vmul.f32 %v335, %v248
    %s337 = sld [smem:[#allocation2 + $0x3e]]
    %v338 = vstv %s337
    %v339 = vmul.f32 %v338, %v234
    %v340 = vadd.f32 %v336, %v339
    %s341 = sld [smem:[#allocation2 + $0x3f]]
    %v342 = vstv %s341
    %v343 = vmul.f32 %v342, %v250
    %v344 = vadd.f32 %v340, %v343
    %v345 = vadd.f32 %v311, %v322
    %v346 = vadd.f32 %v345, %v333
    %v347 = vadd.f32 %v346, %v344
    %s348 = sld [smem:[#allocation2 + $0x59]]
    %v349 = vstv %s348
    %v350 = vadd.f32 %v347, %v349
    %s351 = sld [smem:[#allocation2 + $0x40]]
    %v352 = vstv %s351
    %v353 = vmul.f32 %v352, %v236
    %s354 = sld [smem:[#allocation2 + $0x41]]
    %v355 = vstv %s354
    %v356 = vmul.f32 %v355, %v228
    %v357 = vadd.f32 %v353, %v356
    %s358 = sld [smem:[#allocation2 + $0x42]]
    %v359 = vstv %s358
    %v360 = vmul.f32 %v359, %v238
    %v361 = vadd.f32 %v357, %v360
    %s362 = sld [smem:[#allocation2 + $0x43]]
    %v363 = vstv %s362
    %v364 = vmul.f32 %v363, %v240
    %s365 = sld [smem:[#allocation2 + $0x44]]
    %v366 = vstv %s365
    %v367 = vmul.f32 %v366, %v230
    %v368 = vadd.f32 %v364, %v367
    %s369 = sld [smem:[#allocation2 + $0x45]]
    %v370 = vstv %s369
    %v371 = vmul.f32 %v370, %v242
    %v372 = vadd.f32 %v368, %v371
    %s373 = sld [smem:[#allocation2 + $0x46]]
    %v374 = vstv %s373
    %v375 = vmul.f32 %v374, %v244
    %s376 = sld [smem:[#allocation2 + $0x47]]
    %v377 = vstv %s376
    %v378 = vmul.f32 %v377, %v232
    %v379 = vadd.f32 %v375, %v378
    %s380 = sld [smem:[#allocation2 + $0x48]]
    %v381 = vstv %s380
    %v382 = vmul.f32 %v381, %v246
    %v383 = vadd.f32 %v379, %v382
    %s384 = sld [smem:[#allocation2 + $0x49]]
    %v385 = vstv %s384
    %v386 = vmul.f32 %v385, %v248
    %s387 = sld [smem:[#allocation2 + $0x4a]]
    %v388 = vstv %s387
    %v389 = vmul.f32 %v388, %v234
    %v390 = vadd.f32 %v386, %v389
    %s391 = sld [smem:[#allocation2 + $0x4b]]
    %v392 = vstv %s391
    %v393 = vmul.f32 %v392, %v250
    %v394 = vadd.f32 %v390, %v393
    %v395 = vadd.f32 %v361, %v372
    %v396 = vadd.f32 %v395, %v383
    %v397 = vadd.f32 %v396, %v394
    %s398 = sld [smem:[#allocation2 + $0x5a]]
    %v399 = vstv %s398
    %v400 = vadd.f32 %v397, %v399
    %s401 = sld [smem:[#allocation2 + $0x4c]]
    %v402 = vstv %s401
    %v403 = vmul.f32 %v402, %v236
    %s404 = sld [smem:[#allocation2 + $0x4d]]
    %v405 = vstv %s404
    %v406 = vmul.f32 %v405, %v228
    %v407 = vadd.f32 %v403, %v406
    %s408 = sld [smem:[#allocation2 + $0x4e]]
    %v409 = vstv %s408
    %v410 = vmul.f32 %v409, %v238
    %v411 = vadd.f32 %v407, %v410
    %s412 = sld [smem:[#allocation2 + $0x4f]]
    %v413 = vstv %s412
    %v414 = vmul.f32 %v413, %v240
    %s415 = sld [smem:[#allocation2 + $0x50]]
    %v416 = vstv %s415
    %v417 = vmul.f32 %v416, %v230
    %v418 = vadd.f32 %v414, %v417
    %s419 = sld [smem:[#allocation2 + $0x51]]
    %v420 = vstv %s419
    %v421 = vmul.f32 %v420, %v242
    %v422 = vadd.f32 %v418, %v421
    %s423 = sld [smem:[#allocation2 + $0x52]]
    %v424 = vstv %s423
    %v425 = vmul.f32 %v424, %v244
    %s426 = sld [smem:[#allocation2 + $0x53]]
    %v427 = vstv %s426
    %v428 = vmul.f32 %v427, %v232
    %v429 = vadd.f32 %v425, %v428
    %s430 = sld [smem:[#allocation2 + $0x54]]
    %v431 = vstv %s430
    %v432 = vmul.f32 %v431, %v246
    %v433 = vadd.f32 %v429, %v432
    %s434 = sld [smem:[#allocation2 + $0x55]]
    %v435 = vstv %s434
    %v436 = vmul.f32 %v435, %v248
    %s437 = sld [smem:[#allocation2 + $0x56]]
    %v438 = vstv %s437
    %v439 = vmul.f32 %v438, %v234
    %v440 = vadd.f32 %v436, %v439
    %s441 = sld [smem:[#allocation2 + $0x57]]
    %v442 = vstv %s441
    %v443 = vmul.f32 %v442, %v250
    %v444 = vadd.f32 %v440, %v443
    %v445 = vadd.f32 %v411, %v422
    %v446 = vadd.f32 %v445, %v433
    %v447 = vadd.f32 %v446, %v444
    %s448 = sld [smem:[#allocation2 + $0x5b]]
    %v449 = vstv %s448
    %v450 = vadd.f32 %v447, %v449
    %v451 = vtanh.pop %v300
    %v452 = vtanh.pop %v350
    %v453 = vtanh.pop %v400
    %v454 = vtanh.pop %v450
    %v455 = vld [vmem:[%s6] sm:$0x1]
    %v456 = vld [vmem:[%s6 + $0x1] sm:$0x1]
    %v457 = vld [vmem:[%s6 + $0x2] sm:$0x1]
    %v458 = vld [vmem:[%s6 + $0x3] sm:$0x1]
    %v459 = vld [vmem:[%s4] sm:$0xff]
    %v460 = vld [vmem:[%s4 + $0x8] sm:$0xff]
    %v461 = vld [vmem:[%s4 + $0x10] sm:$0xff]
    %v462 = vld [vmem:[%s4 + $0x18] sm:$0xff]
    %v463 = vld [vmem:[%s4 + $0x20] sm:$0xff]
    %v464 = vld [vmem:[%s4 + $0x28] sm:$0xff]
    %v465 = vld [vmem:[%s4 + $0x30] sm:$0xff]
    %v466 = vld [vmem:[%s4 + $0x38] sm:$0xff]
    %v467 = vld [vmem:[%s4 + $0x40] sm:$0xff]
    %v468 = vld [vmem:[%s4 + $0x48] sm:$0xff]
    %v469 = vld [vmem:[%s4 + $0x50] sm:$0xff]
    %v470 = vld [vmem:[%s4 + $0x58] sm:$0xff]
    %v471 = vld [vmem:[%s4 + $0x60] sm:$0xff]
    %v472 = vld [vmem:[%s4 + $0x68] sm:$0xff]
    %v473 = vld [vmem:[%s4 + $0x70] sm:$0xff]
    %v474 = vld [vmem:[%s4 + $0x78] sm:$0xff]
    %v475 = vld [vmem:[%s4 + $0x80] sm:$0xff]
    %v476 = vld [vmem:[%s4 + $0x88] sm:$0xff]
    %v477 = vld [vmem:[%s4 + $0x90] sm:$0xff]
    %v478 = vld [vmem:[%s4 + $0x98] sm:$0xff]
    %v479 = vld [vmem:[%s4 + $0xa0] sm:$0xff]
    %v480 = vld [vmem:[%s4 + $0xa8] sm:$0xff]
    %v481 = vld [vmem:[%s4 + $0xb0] sm:$0xff]
    %v482 = vld [vmem:[%s4 + $0xb8] sm:$0xff]
    %v483 = vld [vmem:[%s4 + $0xc0] sm:$0xff]
    %v484 = vld [vmem:[%s4 + $0xc8] sm:$0xff]
    %v485 = vld [vmem:[%s4 + $0xd0] sm:$0xff]
    %v486 = vld [vmem:[%s4 + $0xd8] sm:$0xff]
    %v487 = vld [vmem:[%s4 + $0xe0] sm:$0xff]
    %v488 = vld [vmem:[%s4 + $0xe8] sm:$0xff]
    %v489 = vld [vmem:[%s4 + $0xf0] sm:$0xff]
    %v490 = vld [vmem:[%s4 + $0xf8] sm:$0xff]
    %v491 = vld [vmem:[%s4 + $0x100] sm:$0xff]
    %v492 = vld [vmem:[%s4 + $0x108] sm:$0xff]
    %v493 = vld [vmem:[%s4 + $0x110] sm:$0xff]
    %v494 = vld [vmem:[%s4 + $0x118] sm:$0xff]
    %v495 = vld [vmem:[%s4 + $0x120] sm:$0xff]
    %v496 = vld [vmem:[%s4 + $0x128] sm:$0xff]
    %v497 = vld [vmem:[%s4 + $0x130] sm:$0xff]
    %v498 = vld [vmem:[%s4 + $0x138] sm:$0xff]
    %v499 = vld [vmem:[%s4 + $0x140] sm:$0xff]
    %v500 = vld [vmem:[%s4 + $0x148] sm:$0xff]
    %v501 = vld [vmem:[%s4 + $0x150] sm:$0xff]
    %v502 = vld [vmem:[%s4 + $0x158] sm:$0xff]
    %v503 = vld [vmem:[%s4 + $0x160] sm:$0xff]
    %v504 = vld [vmem:[%s4 + $0x168] sm:$0xff]
    %v505 = vld [vmem:[%s4 + $0x170] sm:$0xff]
    %v506 = vld [vmem:[%s4 + $0x178] sm:$0xff]
    %v507 = vld [vmem:[%s4 + $0x180] sm:$0xff]
    %v508 = vld [vmem:[%s4 + $0x188] sm:$0xff]
    %v509 = vld [vmem:[%s4 + $0x190] sm:$0xff]
    %v510 = vld [vmem:[%s4 + $0x198] sm:$0xff]
    %v511 = vld [vmem:[%s4 + $0x1a0] sm:$0xff]
    %v512 = vld [vmem:[%s4 + $0x1a8] sm:$0xff]
    %v513 = vld [vmem:[%s4 + $0x1b0] sm:$0xff]
    %v514 = vld [vmem:[%s4 + $0x1b8] sm:$0xff]
    %v515 = vld [vmem:[%s4 + $0x1c0] sm:$0xff]
    %v516 = vld [vmem:[%s4 + $0x1c8] sm:$0xff]
    %v517 = vld [vmem:[%s4 + $0x1d0] sm:$0xff]
    %v518 = vld [vmem:[%s4 + $0x1d8] sm:$0xff]
    %v519 = vld [vmem:[%s4 + $0x1e0] sm:$0xff]
    %v520 = vld [vmem:[%s4 + $0x1e8] sm:$0xff]
    %v521 = vld [vmem:[%s4 + $0x1f0] sm:$0xff]
    %v522 = vld [vmem:[%s4 + $0x1f8] sm:$0xff]
    %v523 = vlaneseq
    %v524 = vshrl.u32 %v523, 7
    %v525 = vsub.s32 0, %v524
    %v526 = vrot.slane %v455, %v525
    %527 = vmatprep.subr.mxu0 0.0
    %528 = vmatpush1.msra.mxu0 %v459
    %529 = vmatprep.subr.mxu0 0.0
    %530 = vmatpush1.msra.mxu0 %v460
    %531 = vmatprep.subr.mxu0 0.0
    %532 = vmatpush1.msra.mxu0 %v461
    %533 = vmatprep.subr.mxu0 0.0
    %534 = vmatpush1.msra.mxu0 %v462
    %535 = vmatprep.subr.mxu0 0.0
    %536 = vmatpush1.msra.mxu0 %v463
    %537 = vmatprep.subr.mxu0 0.0
    %538 = vmatpush1.msra.mxu0 %v464
    %539 = vmatprep.subr.mxu0 0.0
    %540 = vmatpush1.msra.mxu0 %v465
    %541 = vmatprep.subr.mxu0 0.0
    %542 = vmatpush1.msra.mxu0 %v466
    %543 = vmatprep.subr.mxu0 0.0
    %544 = vmatpush1.msra.mxu0 %v467
    %545 = vmatprep.subr.mxu0 0.0
    %546 = vmatpush1.msra.mxu0 %v468
    %547 = vmatprep.subr.mxu0 0.0
    %548 = vmatpush1.msra.mxu0 %v469
    %549 = vmatprep.subr.mxu0 0.0
    %550 = vmatpush1.msra.mxu0 %v470
    %551 = vmatprep.subr.mxu0 0.0
    %552 = vmatpush1.msra.mxu0 %v471
    %553 = vmatprep.subr.mxu0 0.0
    %554 = vmatpush1.msra.mxu0 %v472
    %555 = vmatprep.subr.mxu0 0.0
    %556 = vmatpush1.msra.mxu0 %v473
    %557 = vmatprep.subr.mxu0 0.0
    %558 = vmatpush1.msra.mxu0 %v474
    %559 = vmatprep.subr.mxu0 0.0
    %560 = vmatpush1.msra.mxu0 %v475
    %561 = vmatprep.subr.mxu0 0.0
    %562 = vmatpush1.msra.mxu0 %v476
    %563 = vmatprep.subr.mxu0 0.0
    %564 = vmatpush1.msra.mxu0 %v477
    %565 = vmatprep.subr.mxu0 0.0
    %566 = vmatpush1.msra.mxu0 %v478
    %567 = vmatprep.subr.mxu0 0.0
    %568 = vmatpush1.msra.mxu0 %v479
    %569 = vmatprep.subr.mxu0 0.0
    %570 = vmatpush1.msra.mxu0 %v480
    %571 = vmatprep.subr.mxu0 0.0
    %572 = vmatpush1.msra.mxu0 %v481
    %573 = vmatprep.subr.mxu0 0.0
    %574 = vmatpush1.msra.mxu0 %v482
    %575 = vmatprep.subr.mxu0 0.0
    %576 = vmatpush1.msra.mxu0 %v483
    %577 = vmatprep.subr.mxu0 0.0
    %578 = vmatpush1.msra.mxu0 %v484
    %579 = vmatprep.subr.mxu0 0.0
    %580 = vmatpush1.msra.mxu0 %v485
    %581 = vmatprep.subr.mxu0 0.0
    %582 = vmatpush1.msra.mxu0 %v486
    %583 = vmatprep.subr.mxu0 0.0
    %584 = vmatpush1.msra.mxu0 %v487
    %585 = vmatprep.subr.mxu0 0.0
    %586 = vmatpush1.msra.mxu0 %v488
    %587 = vmatprep.subr.mxu0 0.0
    %588 = vmatpush1.msra.mxu0 %v489
    %589 = vmatprep.subr.mxu0 0.0
    %590 = vmatpush1.msra.mxu0 %v490
    %591 = vmatprep.mubr.f32.mxu0 %v452
    %592 = vmatmul.mubr.f32.gmra.mrb[0].mxu0 %v451
    %v593 = vpop.f32.mrb[0].mxu0
    %v594 = vadd.f32 %v526, %v593
    %v595 = vpop.f32.mrb[0].mxu0
    %596 = vdwg.mxu0
    %597 = vmatprep.subr.mxu0 0.0
    %598 = vmatpush1.msra.mxu0 %v491
    %599 = vmatprep.subr.mxu0 0.0
    %600 = vmatpush1.msra.mxu0 %v492
    %601 = vmatprep.subr.mxu0 0.0
    %602 = vmatpush1.msra.mxu0 %v493
    %603 = vmatprep.subr.mxu0 0.0
    %604 = vmatpush1.msra.mxu0 %v494
    %605 = vmatprep.subr.mxu0 0.0
    %606 = vmatpush1.msra.mxu0 %v495
    %607 = vmatprep.subr.mxu0 0.0
    %608 = vmatpush1.msra.mxu0 %v496
    %609 = vmatprep.subr.mxu0 0.0
    %610 = vmatpush1.msra.mxu0 %v497
    %611 = vmatprep.subr.mxu0 0.0
    %612 = vmatpush1.msra.mxu0 %v498
    %613 = vmatprep.subr.mxu0 0.0
    %614 = vmatpush1.msra.mxu0 %v499
    %615 = vmatprep.subr.mxu0 0.0
    %616 = vmatpush1.msra.mxu0 %v500
    %617 = vmatprep.subr.mxu0 0.0
    %618 = vmatpush1.msra.mxu0 %v501
    %619 = vmatprep.subr.mxu0 0.0
    %620 = vmatpush1.msra.mxu0 %v502
    %621 = vmatprep.subr.mxu0 0.0
    %622 = vmatpush1.msra.mxu0 %v503
    %623 = vmatprep.subr.mxu0 0.0
    %624 = vmatpush1.msra.mxu0 %v504
    %625 = vmatprep.subr.mxu0 0.0
    %626 = vmatpush1.msra.mxu0 %v505
    %627 = vmatprep.subr.mxu0 0.0
    %628 = vmatpush1.msra.mxu0 %v506
    %629 = vmatprep.subr.mxu0 0.0
    %630 = vmatpush1.msra.mxu0 %v507
    %631 = vmatprep.subr.mxu0 0.0
    %632 = vmatpush1.msra.mxu0 %v508
    %633 = vmatprep.subr.mxu0 0.0
    %634 = vmatpush1.msra.mxu0 %v509
    %635 = vmatprep.subr.mxu0 0.0
    %636 = vmatpush1.msra.mxu0 %v510
    %637 = vmatprep.subr.mxu0 0.0
    %638 = vmatpush1.msra.mxu0 %v511
    %639 = vmatprep.subr.mxu0 0.0
    %640 = vmatpush1.msra.mxu0 %v512
    %641 = vmatprep.subr.mxu0 0.0
    %642 = vmatpush1.msra.mxu0 %v513
    %643 = vmatprep.subr.mxu0 0.0
    %644 = vmatpush1.msra.mxu0 %v514
    %645 = vmatprep.subr.mxu0 0.0
    %646 = vmatpush1.msra.mxu0 %v515
    %647 = vmatprep.subr.mxu0 0.0
    %648 = vmatpush1.msra.mxu0 %v516
    %649 = vmatprep.subr.mxu0 0.0
    %650 = vmatpush1.msra.mxu0 %v517
    %651 = vmatprep.subr.mxu0 0.0
    %652 = vmatpush1.msra.mxu0 %v518
    %653 = vmatprep.subr.mxu0 0.0
    %654 = vmatpush1.msra.mxu0 %v519
    %655 = vmatprep.subr.mxu0 0.0
    %656 = vmatpush1.msra.mxu0 %v520
    %657 = vmatprep.subr.mxu0 0.0
    %658 = vmatpush1.msra.mxu0 %v521
    %659 = vmatprep.subr.mxu0 0.0
    %660 = vmatpush1.msra.mxu0 %v522
    %661 = vmatprep.mubr.f32.mxu0 %v454
    %662 = vmatmul.mubr.f32.gmra.mrb[0].mxu0 %v453
    %v663 = vpop.f32.mrb[0].mxu0
    %v664 = vadd.f32 %v594, %v663
    %v665 = vpop.f32.mrb[0].mxu0
    %666 = vdwg.mxu0
    %v667 = vtanh.pop %v664
    %v668 = vld [vmem:[%s5] sm:$0xff]
    %v669 = vld [vmem:[%s5 + $0x8] sm:$0xff]
    %v670 = vld [vmem:[%s5 + $0x10] sm:$0xff]
    %v671 = vld [vmem:[%s5 + $0x18] sm:$0xff]
    %v672 = vlaneseq
    %v673 = vshrl.u32 %v672, 7
    %v674 = vsub.s32 0, %v673
    %v675 = vrot.slane %v456, %v674
    %vm676 = vcmask 261120
    %v678 = vsel %vm676, %v667, 0
    %680 = vmatprep.subr.mxu0 0.0
    %681 = vmatpush1.msra.mxu0 %v668
    %682 = vmatprep.subr.mxu0 0.0
    %683 = vmatpush1.msra.mxu0 %v669
    %684 = vmatprep.subr.mxu0 0.0
    %685 = vmatpush1.msra.mxu0 %v670
    %686 = vmatprep.subr.mxu0 0.0
    %687 = vmatpush1.msra.mxu0 %v671
    %688 = vmatprep.subr.mxu0 0.0
    %689 = vmatpush1.msra.mxu0 0.0
    %690 = vmatprep.subr.mxu0 0.0
    %691 = vmatpush1.msra.mxu0 0.0
    %692 = vmatprep.subr.mxu0 0.0
    %693 = vmatpush1.msra.mxu0 0.0
    %694 = vmatprep.subr.mxu0 0.0
    %695 = vmatpush1.msra.mxu0 0.0
    %696 = vmatprep.subr.mxu0 0.0
    %697 = vmatpush1.msra.mxu0 0.0
    %698 = vmatprep.subr.mxu0 0.0
    %699 = vmatpush1.msra.mxu0 0.0
    %700 = vmatprep.subr.mxu0 0.0
    %701 = vmatpush1.msra.mxu0 0.0
    %702 = vmatprep.subr.mxu0 0.0
    %703 = vmatpush1.msra.mxu0 0.0
    %704 = vmatprep.subr.mxu0 0.0
    %705 = vmatpush1.msra.mxu0 0.0
    %706 = vmatprep.subr.mxu0 0.0
    %707 = vmatpush1.msra.mxu0 0.0
    %708 = vmatprep.subr.mxu0 0.0
    %709 = vmatpush1.msra.mxu0 0.0
    %710 = vmatprep.subr.mxu0 0.0
    %711 = vmatpush1.msra.mxu0 0.0
    %712 = vmatprep.subr.mxu0 0.0
    %713 = vmatpush1.msra.mxu0 0.0
    %714 = vmatprep.subr.mxu0 0.0
    %715 = vmatpush1.msra.mxu0 0.0
    %716 = vmatprep.subr.mxu0 0.0
    %717 = vmatpush1.msra.mxu0 0.0
    %718 = vmatprep.subr.mxu0 0.0
    %719 = vmatpush1.msra.mxu0 0.0
    %720 = vmatprep.subr.mxu0 0.0
    %721 = vmatpush1.msra.mxu0 0.0
    %722 = vmatprep.subr.mxu0 0.0
    %723 = vmatpush1.msra.mxu0 0.0
    %724 = vmatprep.subr.mxu0 0.0
    %725 = vmatpush1.msra.mxu0 0.0
    %726 = vmatprep.subr.mxu0 0.0
    %727 = vmatpush1.msra.mxu0 0.0
    %728 = vmatprep.subr.mxu0 0.0
    %729 = vmatpush1.msra.mxu0 0.0
    %730 = vmatprep.subr.mxu0 0.0
    %731 = vmatpush1.msra.mxu0 0.0
    %732 = vmatprep.subr.mxu0 0.0
    %733 = vmatpush1.msra.mxu0 0.0
    %734 = vmatprep.subr.mxu0 0.0
    %735 = vmatpush1.msra.mxu0 0.0
    %736 = vmatprep.subr.mxu0 0.0
    %737 = vmatpush1.msra.mxu0 0.0
    %738 = vmatprep.subr.mxu0 0.0
    %739 = vmatpush1.msra.mxu0 0.0
    %740 = vmatprep.subr.mxu0 0.0
    %741 = vmatpush1.msra.mxu0 0.0
    %742 = vmatprep.subr.mxu0 0.0
    %743 = vmatpush1.msra.mxu0 0.0
    %744 = vmatprep.mubr.f32.mxu0 0.0
    %745 = vmatmul.mubr.f32.gmra.mrb[0].mxu0 %v678
    %v746 = vpop.f32.mrb[0].mxu0
    %v747 = vadd.f32 %v675, %v746
    %v748 = vpop.f32.mrb[0].mxu0
    %749 = vdwg.mxu0
    %v750 = vtanh.pop %v747
    %v751 = vld [vmem:[%s5 + $0x20] sm:$0xff]
    %v752 = vld [vmem:[%s5 + $0x28] sm:$0xff]
    %v753 = vld [vmem:[%s5 + $0x30] sm:$0xff]
    %v754 = vld [vmem:[%s5 + $0x38] sm:$0xff]
    %v755 = vlaneseq
    %v756 = vshrl.u32 %v755, 7
    %v757 = vsub.s32 0, %v756
    %v758 = vrot.slane %v457, %v757
    %v760 = vsel %vm676, %v750, 0
    %762 = vmatprep.subr.mxu0 0.0
    %763 = vmatpush1.msra.mxu0 %v751
    %764 = vmatprep.subr.mxu0 0.0
    %765 = vmatpush1.msra.mxu0 %v752
    %766 = vmatprep.subr.mxu0 0.0
    %767 = vmatpush1.msra.mxu0 %v753
    %768 = vmatprep.subr.mxu0 0.0
    %769 = vmatpush1.msra.mxu0 %v754
    %770 = vmatprep.subr.mxu0 0.0
    %771 = vmatpush1.msra.mxu0 0.0
    %772 = vmatprep.subr.mxu0 0.0
    %773 = vmatpush1.msra.mxu0 0.0
    %774 = vmatprep.subr.mxu0 0.0
    %775 = vmatpush1.msra.mxu0 0.0
    %776 = vmatprep.subr.mxu0 0.0
    %777 = vmatpush1.msra.mxu0 0.0
    %778 = vmatprep.subr.mxu0 0.0
    %779 = vmatpush1.msra.mxu0 0.0
    %780 = vmatprep.subr.mxu0 0.0
    %781 = vmatpush1.msra.mxu0 0.0
    %782 = vmatprep.subr.mxu0 0.0
    %783 = vmatpush1.msra.mxu0 0.0
    %784 = vmatprep.subr.mxu0 0.0
    %785 = vmatpush1.msra.mxu0 0.0
    %786 = vmatprep.subr.mxu0 0.0
    %787 = vmatpush1.msra.mxu0 0.0
    %788 = vmatprep.subr.mxu0 0.0
    %789 = vmatpush1.msra.mxu0 0.0
    %790 = vmatprep.subr.mxu0 0.0
    %791 = vmatpush1.msra.mxu0 0.0
    %792 = vmatprep.subr.mxu0 0.0
    %793 = vmatpush1.msra.mxu0 0.0
    %794 = vmatprep.subr.mxu0 0.0
    %795 = vmatpush1.msra.mxu0 0.0
    %796 = vmatprep.subr.mxu0 0.0
    %797 = vmatpush1.msra.mxu0 0.0
    %798 = vmatprep.subr.mxu0 0.0
    %799 = vmatpush1.msra.mxu0 0.0
    %800 = vmatprep.subr.mxu0 0.0
    %801 = vmatpush1.msra.mxu0 0.0
    %802 = vmatprep.subr.mxu0 0.0
    %803 = vmatpush1.msra.mxu0 0.0
    %804 = vmatprep.subr.mxu0 0.0
    %805 = vmatpush1.msra.mxu0 0.0
    %806 = vmatprep.subr.mxu0 0.0
    %807 = vmatpush1.msra.mxu0 0.0
    %808 = vmatprep.subr.mxu0 0.0
    %809 = vmatpush1.msra.mxu0 0.0
    %810 = vmatprep.subr.mxu0 0.0
    %811 = vmatpush1.msra.mxu0 0.0
    %812 = vmatprep.subr.mxu0 0.0
    %813 = vmatpush1.msra.mxu0 0.0
    %814 = vmatprep.subr.mxu0 0.0
    %815 = vmatpush1.msra.mxu0 0.0
    %816 = vmatprep.subr.mxu0 0.0
    %817 = vmatpush1.msra.mxu0 0.0
    %818 = vmatprep.subr.mxu0 0.0
    %819 = vmatpush1.msra.mxu0 0.0
    %820 = vmatprep.subr.mxu0 0.0
    %821 = vmatpush1.msra.mxu0 0.0
    %822 = vmatprep.subr.mxu0 0.0
    %823 = vmatpush1.msra.mxu0 0.0
    %824 = vmatprep.subr.mxu0 0.0
    %825 = vmatpush1.msra.mxu0 0.0
    %826 = vmatprep.mubr.f32.mxu0 0.0
    %827 = vmatmul.mubr.f32.gmra.mrb[0].mxu0 %v760
    %v828 = vpop.f32.mrb[0].mxu0
    %v829 = vadd.f32 %v758, %v828
    %v830 = vpop.f32.mrb[0].mxu0
    %831 = vdwg.mxu0
    %v832 = vld [vmem:[%s7] ss:$2 sm:$0x3]
    %s833 = scalar_lea.vmem %s7, 1
    %v834 = vld [vmem:[%s833] ss:$2 sm:$0x3]
    %v835 = vld [vmem:[%s8] ss:$2 sm:$0x3]
    %s836 = scalar_lea.vmem %s8, 1
    %v837 = vld [vmem:[%s836] ss:$2 sm:$0x3]
    %v838 = vld [vmem:[%s2] sm:$0xff]
    %v839 = vld [vmem:[%s2 + $0x8] sm:$0xff]
    %v840 = vld [vmem:[%s2 + $0x10] sm:$0xff]
    %v841 = vld [vmem:[%s2 + $0x18] sm:$0xff]
    %v842 = vld [vmem:[%s2 + $0x20] sm:$0xff]
    %v843 = vld [vmem:[%s2 + $0x28] sm:$0xff]
    %v844 = vld [vmem:[%s2 + $0x30] sm:$0xff]
    %v845 = vld [vmem:[%s2 + $0x38] sm:$0xff]
    %v846 = vld [vmem:[%s2 + $0x40] sm:$0xff]
    %v847 = vld [vmem:[%s2 + $0x48] sm:$0xff]
    %v848 = vld [vmem:[%s2 + $0x50] sm:$0xff]
    %v849 = vld [vmem:[%s2 + $0x58] sm:$0xff]
    %v850 = vld [vmem:[%s2 + $0x60] sm:$0xff]
    %v851 = vld [vmem:[%s2 + $0x68] sm:$0xff]
    %v852 = vld [vmem:[%s2 + $0x70] sm:$0xff]
    %v853 = vld [vmem:[%s2 + $0x78] sm:$0xff]
    %v854 = vld [vmem:[%s7] sm:$0xf]
    %v856 = vlaneseq
    %v857 = vshrl.u32 %v856, 7
    %v858 = vsub.s32 0, %v857
    %v859 = vrot.slane %v835, %v858
    %v860 = vlaneseq
    %v861 = vshrl.u32 %v860, 7
    %v862 = vsub.s32 1, %v861
    %v863 = vrot.slane %v835, %v862
    %v868 = vunpack.c.l.s4 1983009808
    %v869 = vunpack.c.0.s8 %v868
    %v870 = vlaneseq
    %v871 = vshrl.u32 %v870, 7
    %v872 = vsub.s32 %v869, %v871
    %v873 = vrot.slane %v854, %v872
    %v874 = vcombine.high %v873, %v873
    %vm875 = vcmask 15360
    %v877 = vsel %vm875, %v838, 0
    %v880 = vsel %vm875, %v839, 0
    %v883 = vsel %vm875, %v840, 0
    %v886 = vsel %vm875, %v841, 0
    %v889 = vsel %vm875, %v842, 0
    %v892 = vsel %vm875, %v843, 0
    %v895 = vsel %vm875, %v844, 0
    %v898 = vsel %vm875, %v845, 0
    %v901 = vsel %vm875, %v846, 0
    %v904 = vsel %vm875, %v847, 0
    %v907 = vsel %vm875, %v848, 0
    %v910 = vsel %vm875, %v849, 0
    %v913 = vsel %vm875, %v850, 0
    %v916 = vsel %vm875, %v851, 0
    %v919 = vsel %vm875, %v852, 0
    %v922 = vsel %vm875, %v853, 0
    %vm924 = vcmask 1041408
    %v925 = vsel %vm924, %v873, 0
    %v927 = vsel %vm924, %v874, 0
    %929 = vmatprep.subr.mxu0 %v927
    %930 = vmatpush1.msra.mxu0 %v925
    %931 = vmatprep.subr.mxu0 0.0
    %932 = vmatpush1.msra.mxu0 0.0
    %933 = vmatprep.subr.mxu0 0.0
    %934 = vmatpush1.msra.mxu0 0.0
    %935 = vmatprep.subr.mxu0 0.0
    %936 = vmatpush1.msra.mxu0 0.0
    %937 = vmatprep.subr.mxu0 0.0
    %938 = vmatpush1.msra.mxu0 0.0
    %939 = vmatprep.subr.mxu0 0.0
    %940 = vmatpush1.msra.mxu0 0.0
    %941 = vmatprep.subr.mxu0 0.0
    %942 = vmatpush1.msra.mxu0 0.0
    %943 = vmatprep.subr.mxu0 0.0
    %944 = vmatpush1.msra.mxu0 0.0
    %945 = vmatprep.subr.mxu0 0.0
    %946 = vmatpush1.msra.mxu0 0.0
    %947 = vmatprep.subr.mxu0 0.0
    %948 = vmatpush1.msra.mxu0 0.0
    %949 = vmatprep.subr.mxu0 0.0
    %950 = vmatpush1.msra.mxu0 0.0
    %951 = vmatprep.subr.mxu0 0.0
    %952 = vmatpush1.msra.mxu0 0.0
    %953 = vmatprep.subr.mxu0 0.0
    %954 = vmatpush1.msra.mxu0 0.0
    %955 = vmatprep.subr.mxu0 0.0
    %956 = vmatpush1.msra.mxu0 0.0
    %957 = vmatprep.subr.mxu0 0.0
    %958 = vmatpush1.msra.mxu0 0.0
    %959 = vmatprep.subr.mxu0 0.0
    %960 = vmatpush1.msra.mxu0 0.0
    %961 = vmatprep.subr.mxu0 0.0
    %962 = vmatpush1.msra.mxu0 0.0
    %963 = vmatprep.subr.mxu0 0.0
    %964 = vmatpush1.msra.mxu0 0.0
    %965 = vmatprep.subr.mxu0 0.0
    %966 = vmatpush1.msra.mxu0 0.0
    %967 = vmatprep.subr.mxu0 0.0
    %968 = vmatpush1.msra.mxu0 0.0
    %969 = vmatprep.subr.mxu0 0.0
    %970 = vmatpush1.msra.mxu0 0.0
    %971 = vmatprep.subr.mxu0 0.0
    %972 = vmatpush1.msra.mxu0 0.0
    %973 = vmatprep.subr.mxu0 0.0
    %974 = vmatpush1.msra.mxu0 0.0
    %975 = vmatprep.subr.mxu0 0.0
    %976 = vmatpush1.msra.mxu0 0.0
    %977 = vmatprep.subr.mxu0 0.0
    %978 = vmatpush1.msra.mxu0 0.0
    %979 = vmatprep.subr.mxu0 0.0
    %980 = vmatpush1.msra.mxu0 0.0
    %981 = vmatprep.subr.mxu0 0.0
    %982 = vmatpush1.msra.mxu0 0.0
    %983 = vmatprep.subr.mxu0 0.0
    %984 = vmatpush1.msra.mxu0 0.0
    %985 = vmatprep.subr.mxu0 0.0
    %986 = vmatpush1.msra.mxu0 0.0
    %987 = vmatprep.subr.mxu0 0.0
    %988 = vmatpush1.msra.mxu0 0.0
    %989 = vmatprep.subr.mxu0 0.0
    %990 = vmatpush1.msra.mxu0 0.0
    %991 = vmatprep.subr.mxu0 0.0
    %992 = vmatpush1.msra.mxu0 0.0
    %993 = vmatprep.mubr.f32.mxu0 0.0
    %994 = vmatmul.mubr.f32.gmra.mrb[0].mxu0 %v877
    %v995 = vpop.f32.mrb[0].mxu0
    %v996 = vadd.f32 %v859, %v995
    %v997 = vpop.f32.mrb[0].mxu0
    %v998 = vadd.f32 %v863, %v997
    %999 = vmatprep.mubr.f32.mxu0 0.0
    %1000 = vmatmul.mubr.f32.gmra.mrb[0].mxu0 %v880
    %v1001 = vpop.f32.mrb[0].mxu0
    %v1002 = vadd.f32 %v859, %v1001
    %v1003 = vpop.f32.mrb[0].mxu0
    %v1004 = vadd.f32 %v863, %v1003
    %1005 = vmatprep.mubr.f32.mxu0 0.0
    %1006 = vmatmul.mubr.f32.gmra.mrb[0].mxu0 %v883
    %v1007 = vpop.f32.mrb[0].mxu0
    %v1008 = vadd.f32 %v859, %v1007
    %v1009 = vpop.f32.mrb[0].mxu0
    %v1010 = vadd.f32 %v863, %v1009
    %1011 = vmatprep.mubr.f32.mxu0 0.0
    %1012 = vmatmul.mubr.f32.gmra.mrb[0].mxu0 %v886
    %v1013 = vpop.f32.mrb[0].mxu0
    %v1014 = vadd.f32 %v859, %v1013
    %v1015 = vpop.f32.mrb[0].mxu0
    %v1016 = vadd.f32 %v863, %v1015
    %1017 = vmatprep.mubr.f32.mxu0 0.0
    %1018 = vmatmul.mubr.f32.gmra.mrb[0].mxu0 %v889
    %v1019 = vpop.f32.mrb[0].mxu0
    %v1020 = vadd.f32 %v859, %v1019
    %v1021 = vpop.f32.mrb[0].mxu0
    %v1022 = vadd.f32 %v863, %v1021
    %1023 = vmatprep.mubr.f32.mxu0 0.0
    %1024 = vmatmul.mubr.f32.gmra.mrb[0].mxu0 %v892
    %v1025 = vpop.f32.mrb[0].mxu0
    %v1026 = vadd.f32 %v859, %v1025
    %v1027 = vpop.f32.mrb[0].mxu0
    %v1028 = vadd.f32 %v863, %v1027
    %1029 = vmatprep.mubr.f32.mxu0 0.0
    %1030 = vmatmul.mubr.f32.gmra.mrb[0].mxu0 %v895
    %v1031 = vpop.f32.mrb[0].mxu0
    %v1032 = vadd.f32 %v859, %v1031
    %v1033 = vpop.f32.mrb[0].mxu0
    %v1034 = vadd.f32 %v863, %v1033
    %1035 = vmatprep.mubr.f32.mxu0 0.0
    %1036 = vmatmul.mubr.f32.gmra.mrb[0].mxu0 %v898
    %v1037 = vpop.f32.mrb[0].mxu0
    %v1038 = vadd.f32 %v859, %v1037
    %v1039 = vpop.f32.mrb[0].mxu0
    %v1040 = vadd.f32 %v863, %v1039
    %1041 = vmatprep.mubr.f32.mxu0 0.0
    %1042 = vmatmul.mubr.f32.gmra.mrb[0].mxu0 %v901
    %v1043 = vpop.f32.mrb[0].mxu0
    %v1044 = vadd.f32 %v859, %v1043
    %v1045 = vpop.f32.mrb[0].mxu0
    %v1046 = vadd.f32 %v863, %v1045
    %1047 = vmatprep.mubr.f32.mxu0 0.0
    %1048 = vmatmul.mubr.f32.gmra.mrb[0].mxu0 %v904
    %v1049 = vpop.f32.mrb[0].mxu0
    %v1050 = vadd.f32 %v859, %v1049
    %v1051 = vpop.f32.mrb[0].mxu0
    %v1052 = vadd.f32 %v863, %v1051
    %1053 = vmatprep.mubr.f32.mxu0 0.0
    %1054 = vmatmul.mubr.f32.gmra.mrb[0].mxu0 %v907
    %v1055 = vpop.f32.mrb[0].mxu0
    %v1056 = vadd.f32 %v859, %v1055
    %v1057 = vpop.f32.mrb[0].mxu0
    %v1058 = vadd.f32 %v863, %v1057
    %1059 = vmatprep.mubr.f32.mxu0 0.0
    %1060 = vmatmul.mubr.f32.gmra.mrb[0].mxu0 %v910
    %v1061 = vpop.f32.mrb[0].mxu0
    %v1062 = vadd.f32 %v859, %v1061
    %v1063 = vpop.f32.mrb[0].mxu0
    %v1064 = vadd.f32 %v863, %v1063
    %1065 = vmatprep.mubr.f32.mxu0 0.0
    %1066 = vmatmul.mubr.f32.gmra.mrb[0].mxu0 %v913
    %v1067 = vpop.f32.mrb[0].mxu0
    %v1068 = vadd.f32 %v859, %v1067
    %v1069 = vpop.f32.mrb[0].mxu0
    %v1070 = vadd.f32 %v863, %v1069
    %1071 = vmatprep.mubr.f32.mxu0 0.0
    %1072 = vmatmul.mubr.f32.gmra.mrb[0].mxu0 %v916
    %v1073 = vpop.f32.mrb[0].mxu0
    %v1074 = vadd.f32 %v859, %v1073
    %v1075 = vpop.f32.mrb[0].mxu0
    %v1076 = vadd.f32 %v863, %v1075
    %1077 = vmatprep.mubr.f32.mxu0 0.0
    %1078 = vmatmul.mubr.f32.gmra.mrb[0].mxu0 %v919
    %v1079 = vpop.f32.mrb[0].mxu0
    %v1080 = vadd.f32 %v859, %v1079
    %v1081 = vpop.f32.mrb[0].mxu0
    %v1082 = vadd.f32 %v863, %v1081
    %1083 = vmatprep.mubr.f32.mxu0 0.0
    %1084 = vmatmul.mubr.f32.gmra.mrb[0].mxu0 %v922
    %v1085 = vpop.f32.mrb[0].mxu0
    %v1086 = vadd.f32 %v859, %v1085
    %v1087 = vpop.f32.mrb[0].mxu0
    %v1088 = vadd.f32 %v863, %v1087
    %1089 = vdwg.mxu0
    %v1090 = vtanh.pop %v996
    %v1091 = vtanh.pop %v998
    %v1092 = vtanh.pop %v1002
    %v1093 = vtanh.pop %v1004
    %v1094 = vtanh.pop %v1008
    %v1095 = vtanh.pop %v1010
    %v1096 = vtanh.pop %v1014
    %v1097 = vtanh.pop %v1016
    %v1098 = vtanh.pop %v1020
    %v1099 = vtanh.pop %v1022
    %v1100 = vtanh.pop %v1026
    %v1101 = vtanh.pop %v1028
    %v1102 = vtanh.pop %v1032
    %v1103 = vtanh.pop %v1034
    %v1104 = vtanh.pop %v1038
    %v1105 = vtanh.pop %v1040
    %v1106 = vtanh.pop %v1044
    %v1107 = vtanh.pop %v1046
    %v1108 = vtanh.pop %v1050
    %v1109 = vtanh.pop %v1052
    %v1110 = vtanh.pop %v1056
    %v1111 = vtanh.pop %v1058
    %v1112 = vtanh.pop %v1062
    %v1113 = vtanh.pop %v1064
    %v1114 = vtanh.pop %v1068
    %v1115 = vtanh.pop %v1070
    %v1116 = vtanh.pop %v1074
    %v1117 = vtanh.pop %v1076
    %v1118 = vtanh.pop %v1080
    %v1119 = vtanh.pop %v1082
    %v1120 = vtanh.pop %v1086
    %v1121 = vtanh.pop %v1088
    %v1122 = vmul.f32 %v1090, %v1090
    %v1123 = vmul.f32 %v1091, %v1091
    %v1124 = vmul.f32 %v1092, %v1092
    %v1125 = vmul.f32 %v1093, %v1093
    %v1126 = vmul.f32 %v1094, %v1094
    %v1127 = vmul.f32 %v1095, %v1095
    %v1128 = vmul.f32 %v1096, %v1096
    %v1129 = vmul.f32 %v1097, %v1097
    %v1130 = vmul.f32 %v1098, %v1098
    %v1131 = vmul.f32 %v1099, %v1099
    %v1132 = vmul.f32 %v1100, %v1100
    %v1133 = vmul.f32 %v1101, %v1101
    %v1134 = vmul.f32 %v1102, %v1102
    %v1135 = vmul.f32 %v1103, %v1103
    %v1136 = vmul.f32 %v1104, %v1104
    %v1137 = vmul.f32 %v1105, %v1105
    %v1138 = vmul.f32 %v1106, %v1106
    %v1139 = vmul.f32 %v1107, %v1107
    %v1140 = vmul.f32 %v1108, %v1108
    %v1141 = vmul.f32 %v1109, %v1109
    %v1142 = vmul.f32 %v1110, %v1110
    %v1143 = vmul.f32 %v1111, %v1111
    %v1144 = vmul.f32 %v1112, %v1112
    %v1145 = vmul.f32 %v1113, %v1113
    %v1146 = vmul.f32 %v1114, %v1114
    %v1147 = vmul.f32 %v1115, %v1115
    %v1148 = vmul.f32 %v1116, %v1116
    %v1149 = vmul.f32 %v1117, %v1117
    %v1150 = vmul.f32 %v1118, %v1118
    %v1151 = vmul.f32 %v1119, %v1119
    %v1152 = vmul.f32 %v1120, %v1120
    %v1153 = vmul.f32 %v1121, %v1121
    %v1154 = vsub.f32 1.0, %v1122
    %v1155 = vsub.f32 1.0, %v1123
    %v1156 = vsub.f32 1.0, %v1124
    %v1157 = vsub.f32 1.0, %v1125
    %v1158 = vsub.f32 1.0, %v1126
    %v1159 = vsub.f32 1.0, %v1127
    %v1160 = vsub.f32 1.0, %v1128
    %v1161 = vsub.f32 1.0, %v1129
    %v1162 = vsub.f32 1.0, %v1130
    %v1163 = vsub.f32 1.0, %v1131
    %v1164 = vsub.f32 1.0, %v1132
    %v1165 = vsub.f32 1.0, %v1133
    %v1166 = vsub.f32 1.0, %v1134
    %v1167 = vsub.f32 1.0, %v1135
    %v1168 = vsub.f32 1.0, %v1136
    %v1169 = vsub.f32 1.0, %v1137
    %v1170 = vsub.f32 1.0, %v1138
    %v1171 = vsub.f32 1.0, %v1139
    %v1172 = vsub.f32 1.0, %v1140
    %v1173 = vsub.f32 1.0, %v1141
    %v1174 = vsub.f32 1.0, %v1142
    %v1175 = vsub.f32 1.0, %v1143
    %v1176 = vsub.f32 1.0, %v1144
    %v1177 = vsub.f32 1.0, %v1145
    %v1178 = vsub.f32 1.0, %v1146
    %v1179 = vsub.f32 1.0, %v1147
    %v1180 = vsub.f32 1.0, %v1148
    %v1181 = vsub.f32 1.0, %v1149
    %v1182 = vsub.f32 1.0, %v1150
    %v1183 = vsub.f32 1.0, %v1151
    %v1184 = vsub.f32 1.0, %v1152
    %v1185 = vsub.f32 1.0, %v1153
    %v1186 = vmul.f32 %v1090, -2.0
    %v1187 = vmul.f32 %v1091, -2.0
    %v1188 = vmul.f32 %v1092, -2.0
    %v1189 = vmul.f32 %v1093, -2.0
    %v1190 = vmul.f32 %v1094, -2.0
    %v1191 = vmul.f32 %v1095, -2.0
    %v1192 = vmul.f32 %v1096, -2.0
    %v1193 = vmul.f32 %v1097, -2.0
    %v1194 = vmul.f32 %v1098, -2.0
    %v1195 = vmul.f32 %v1099, -2.0
    %v1196 = vmul.f32 %v1100, -2.0
    %v1197 = vmul.f32 %v1101, -2.0
    %v1198 = vmul.f32 %v1102, -2.0
    %v1199 = vmul.f32 %v1103, -2.0
    %v1200 = vmul.f32 %v1104, -2.0
    %v1201 = vmul.f32 %v1105, -2.0
    %v1202 = vmul.f32 %v1106, -2.0
    %v1203 = vmul.f32 %v1107, -2.0
    %v1204 = vmul.f32 %v1108, -2.0
    %v1205 = vmul.f32 %v1109, -2.0
    %v1206 = vmul.f32 %v1110, -2.0
    %v1207 = vmul.f32 %v1111, -2.0
    %v1208 = vmul.f32 %v1112, -2.0
    %v1209 = vmul.f32 %v1113, -2.0
    %v1210 = vmul.f32 %v1114, -2.0
    %v1211 = vmul.f32 %v1115, -2.0
    %v1212 = vmul.f32 %v1116, -2.0
    %v1213 = vmul.f32 %v1117, -2.0
    %v1214 = vmul.f32 %v1118, -2.0
    %v1215 = vmul.f32 %v1119, -2.0
    %v1216 = vmul.f32 %v1120, -2.0
    %v1217 = vmul.f32 %v1121, -2.0
    %v1218 = vmul.f32 %v1186, %v1154
    %v1219 = vmul.f32 %v1187, %v1155
    %v1220 = vmul.f32 %v1188, %v1156
    %v1221 = vmul.f32 %v1189, %v1157
    %v1222 = vmul.f32 %v1190, %v1158
    %v1223 = vmul.f32 %v1191, %v1159
    %v1224 = vmul.f32 %v1192, %v1160
    %v1225 = vmul.f32 %v1193, %v1161
    %v1226 = vmul.f32 %v1194, %v1162
    %v1227 = vmul.f32 %v1195, %v1163
    %v1228 = vmul.f32 %v1196, %v1164
    %v1229 = vmul.f32 %v1197, %v1165
    %v1230 = vmul.f32 %v1198, %v1166
    %v1231 = vmul.f32 %v1199, %v1167
    %v1232 = vmul.f32 %v1200, %v1168
    %v1233 = vmul.f32 %v1201, %v1169
    %v1234 = vmul.f32 %v1202, %v1170
    %v1235 = vmul.f32 %v1203, %v1171
    %v1236 = vmul.f32 %v1204, %v1172
    %v1237 = vmul.f32 %v1205, %v1173
    %v1238 = vmul.f32 %v1206, %v1174
    %v1239 = vmul.f32 %v1207, %v1175
    %v1240 = vmul.f32 %v1208, %v1176
    %v1241 = vmul.f32 %v1209, %v1177
    %v1242 = vmul.f32 %v1210, %v1178
    %v1243 = vmul.f32 %v1211, %v1179
    %v1244 = vmul.f32 %v1212, %v1180
    %v1245 = vmul.f32 %v1213, %v1181
    %v1246 = vmul.f32 %v1214, %v1182
    %v1247 = vmul.f32 %v1215, %v1183
    %v1248 = vmul.f32 %v1216, %v1184
    %v1249 = vmul.f32 %v1217, %v1185
    %v1250 = vmul.f32 %v832, %v832
    %v1251 = vmul.f32 %v832, %v834
    %v1252 = vmul.f32 %v834, %v834
    %v1254 = vlaneseq
    %v1255 = vshrl.u32 %v1254, 7
    %v1256 = vsub.s32 0, %v1255
    %v1257 = vrot.slane %v832, %v1256
    %v1258 = vlaneseq
    %v1259 = vshrl.u32 %v1258, 7
    %v1260 = vsub.s32 1, %v1259
    %v1261 = vrot.slane %v832, %v1260
    %v1264 = vmul.f32 %v1154, %v1257
    %v1265 = vmul.f32 %v1155, %v1261
    %v1266 = vmul.f32 %v1156, %v1257
    %v1267 = vmul.f32 %v1157, %v1261
    %v1268 = vmul.f32 %v1158, %v1257
    %v1269 = vmul.f32 %v1159, %v1261
    %v1270 = vmul.f32 %v1160, %v1257
    %v1271 = vmul.f32 %v1161, %v1261
    %v1272 = vmul.f32 %v1162, %v1257
    %v1273 = vmul.f32 %v1163, %v1261
    %v1274 = vmul.f32 %v1164, %v1257
    %v1275 = vmul.f32 %v1165, %v1261
    %v1276 = vmul.f32 %v1166, %v1257
    %v1277 = vmul.f32 %v1167, %v1261
    %v1278 = vmul.f32 %v1168, %v1257
    %v1279 = vmul.f32 %v1169, %v1261
    %v1280 = vmul.f32 %v1170, %v1257
    %v1281 = vmul.f32 %v1171, %v1261
    %v1282 = vmul.f32 %v1172, %v1257
    %v1283 = vmul.f32 %v1173, %v1261
    %v1284 = vmul.f32 %v1174, %v1257
    %v1285 = vmul.f32 %v1175, %v1261
    %v1286 = vmul.f32 %v1176, %v1257
    %v1287 = vmul.f32 %v1177, %v1261
    %v1288 = vmul.f32 %v1178, %v1257
    %v1289 = vmul.f32 %v1179, %v1261
    %v1290 = vmul.f32 %v1180, %v1257
    %v1291 = vmul.f32 %v1181, %v1261
    %v1292 = vmul.f32 %v1182, %v1257
    %v1293 = vmul.f32 %v1183, %v1261
    %v1294 = vmul.f32 %v1184, %v1257
    %v1295 = vmul.f32 %v1185, %v1261
    %v1297 = vlaneseq
    %v1298 = vshrl.u32 %v1297, 7
    %v1299 = vsub.s32 0, %v1298
    %v1300 = vrot.slane %v834, %v1299
    %v1301 = vlaneseq
    %v1302 = vshrl.u32 %v1301, 7
    %v1303 = vsub.s32 1, %v1302
    %v1304 = vrot.slane %v834, %v1303
    %v1307 = vmul.f32 %v1154, %v1300
    %v1308 = vmul.f32 %v1155, %v1304
    %v1309 = vmul.f32 %v1156, %v1300
    %v1310 = vmul.f32 %v1157, %v1304
    %v1311 = vmul.f32 %v1158, %v1300
    %v1312 = vmul.f32 %v1159, %v1304
    %v1313 = vmul.f32 %v1160, %v1300
    %v1314 = vmul.f32 %v1161, %v1304
    %v1315 = vmul.f32 %v1162, %v1300
    %v1316 = vmul.f32 %v1163, %v1304
    %v1317 = vmul.f32 %v1164, %v1300
    %v1318 = vmul.f32 %v1165, %v1304
    %v1319 = vmul.f32 %v1166, %v1300
    %v1320 = vmul.f32 %v1167, %v1304
    %v1321 = vmul.f32 %v1168, %v1300
    %v1322 = vmul.f32 %v1169, %v1304
    %v1323 = vmul.f32 %v1170, %v1300
    %v1324 = vmul.f32 %v1171, %v1304
    %v1325 = vmul.f32 %v1172, %v1300
    %v1326 = vmul.f32 %v1173, %v1304
    %v1327 = vmul.f32 %v1174, %v1300
    %v1328 = vmul.f32 %v1175, %v1304
    %v1329 = vmul.f32 %v1176, %v1300
    %v1330 = vmul.f32 %v1177, %v1304
    %v1331 = vmul.f32 %v1178, %v1300
    %v1332 = vmul.f32 %v1179, %v1304
    %v1333 = vmul.f32 %v1180, %v1300
    %v1334 = vmul.f32 %v1181, %v1304
    %v1335 = vmul.f32 %v1182, %v1300
    %v1336 = vmul.f32 %v1183, %v1304
    %v1337 = vmul.f32 %v1184, %v1300
    %v1338 = vmul.f32 %v1185, %v1304
    %v1340 = vlaneseq
    %v1341 = vshrl.u32 %v1340, 7
    %v1342 = vsub.s32 0, %v1341
    %v1343 = vrot.slane %v1250, %v1342
    %v1344 = vlaneseq
    %v1345 = vshrl.u32 %v1344, 7
    %v1346 = vsub.s32 1, %v1345
    %v1347 = vrot.slane %v1250, %v1346
    %v1350 = vmul.f32 %v1218, %v1343
    %v1351 = vmul.f32 %v1219, %v1347
    %v1352 = vmul.f32 %v1220, %v1343
    %v1353 = vmul.f32 %v1221, %v1347
    %v1354 = vmul.f32 %v1222, %v1343
    %v1355 = vmul.f32 %v1223, %v1347
    %v1356 = vmul.f32 %v1224, %v1343
    %v1357 = vmul.f32 %v1225, %v1347
    %v1358 = vmul.f32 %v1226, %v1343
    %v1359 = vmul.f32 %v1227, %v1347
    %v1360 = vmul.f32 %v1228, %v1343
    %v1361 = vmul.f32 %v1229, %v1347
    %v1362 = vmul.f32 %v1230, %v1343
    %v1363 = vmul.f32 %v1231, %v1347
    %v1364 = vmul.f32 %v1232, %v1343
    %v1365 = vmul.f32 %v1233, %v1347
    %v1366 = vmul.f32 %v1234, %v1343
    %v1367 = vmul.f32 %v1235, %v1347
    %v1368 = vmul.f32 %v1236, %v1343
    %v1369 = vmul.f32 %v1237, %v1347
    %v1370 = vmul.f32 %v1238, %v1343
    %v1371 = vmul.f32 %v1239, %v1347
    %v1372 = vmul.f32 %v1240, %v1343
    %v1373 = vmul.f32 %v1241, %v1347
    %v1374 = vmul.f32 %v1242, %v1343
    %v1375 = vmul.f32 %v1243, %v1347
    %v1376 = vmul.f32 %v1244, %v1343
    %v1377 = vmul.f32 %v1245, %v1347
    %v1378 = vmul.f32 %v1246, %v1343
    %v1379 = vmul.f32 %v1247, %v1347
    %v1380 = vmul.f32 %v1248, %v1343
    %v1381 = vmul.f32 %v1249, %v1347
    %v1383 = vlaneseq
    %v1384 = vshrl.u32 %v1383, 7
    %v1385 = vsub.s32 0, %v1384
    %v1386 = vrot.slane %v1251, %v1385
    %v1387 = vlaneseq
    %v1388 = vshrl.u32 %v1387, 7
    %v1389 = vsub.s32 1, %v1388
    %v1390 = vrot.slane %v1251, %v1389
    %v1393 = vmul.f32 %v1218, %v1386
    %v1394 = vmul.f32 %v1219, %v1390
    %v1395 = vmul.f32 %v1220, %v1386
    %v1396 = vmul.f32 %v1221, %v1390
    %v1397 = vmul.f32 %v1222, %v1386
    %v1398 = vmul.f32 %v1223, %v1390
    %v1399 = vmul.f32 %v1224, %v1386
    %v1400 = vmul.f32 %v1225, %v1390
    %v1401 = vmul.f32 %v1226, %v1386
    %v1402 = vmul.f32 %v1227, %v1390
    %v1403 = vmul.f32 %v1228, %v1386
    %v1404 = vmul.f32 %v1229, %v1390
    %v1405 = vmul.f32 %v1230, %v1386
    %v1406 = vmul.f32 %v1231, %v1390
    %v1407 = vmul.f32 %v1232, %v1386
    %v1408 = vmul.f32 %v1233, %v1390
    %v1409 = vmul.f32 %v1234, %v1386
    %v1410 = vmul.f32 %v1235, %v1390
    %v1411 = vmul.f32 %v1236, %v1386
    %v1412 = vmul.f32 %v1237, %v1390
    %v1413 = vmul.f32 %v1238, %v1386
    %v1414 = vmul.f32 %v1239, %v1390
    %v1415 = vmul.f32 %v1240, %v1386
    %v1416 = vmul.f32 %v1241, %v1390
    %v1417 = vmul.f32 %v1242, %v1386
    %v1418 = vmul.f32 %v1243, %v1390
    %v1419 = vmul.f32 %v1244, %v1386
    %v1420 = vmul.f32 %v1245, %v1390
    %v1421 = vmul.f32 %v1246, %v1386
    %v1422 = vmul.f32 %v1247, %v1390
    %v1423 = vmul.f32 %v1248, %v1386
    %v1424 = vmul.f32 %v1249, %v1390
    %v1426 = vlaneseq
    %v1427 = vshrl.u32 %v1426, 7
    %v1428 = vsub.s32 0, %v1427
    %v1429 = vrot.slane %v1252, %v1428
    %v1430 = vlaneseq
    %v1431 = vshrl.u32 %v1430, 7
    %v1432 = vsub.s32 1, %v1431
    %v1433 = vrot.slane %v1252, %v1432
    %v1436 = vmul.f32 %v1218, %v1429
    %v1437 = vmul.f32 %v1219, %v1433
    %v1438 = vmul.f32 %v1220, %v1429
    %v1439 = vmul.f32 %v1221, %v1433
    %v1440 = vmul.f32 %v1222, %v1429
    %v1441 = vmul.f32 %v1223, %v1433
    %v1442 = vmul.f32 %v1224, %v1429
    %v1443 = vmul.f32 %v1225, %v1433
    %v1444 = vmul.f32 %v1226, %v1429
    %v1445 = vmul.f32 %v1227, %v1433
    %v1446 = vmul.f32 %v1228, %v1429
    %v1447 = vmul.f32 %v1229, %v1433
    %v1448 = vmul.f32 %v1230, %v1429
    %v1449 = vmul.f32 %v1231, %v1433
    %v1450 = vmul.f32 %v1232, %v1429
    %v1451 = vmul.f32 %v1233, %v1433
    %v1452 = vmul.f32 %v1234, %v1429
    %v1453 = vmul.f32 %v1235, %v1433
    %v1454 = vmul.f32 %v1236, %v1429
    %v1455 = vmul.f32 %v1237, %v1433
    %v1456 = vmul.f32 %v1238, %v1429
    %v1457 = vmul.f32 %v1239, %v1433
    %v1458 = vmul.f32 %v1240, %v1429
    %v1459 = vmul.f32 %v1241, %v1433
    %v1460 = vmul.f32 %v1242, %v1429
    %v1461 = vmul.f32 %v1243, %v1433
    %v1462 = vmul.f32 %v1244, %v1429
    %v1463 = vmul.f32 %v1245, %v1433
    %v1464 = vmul.f32 %v1246, %v1429
    %v1465 = vmul.f32 %v1247, %v1433
    %v1466 = vmul.f32 %v1248, %v1429
    %v1467 = vmul.f32 %v1249, %v1433
    %v1468 = vpack.c.bf16 %v1092, %v1090
    %v1469 = vpack.c.bf16 %v1093, %v1091
    %v1470 = vpack.c.bf16 %v1096, %v1094
    %v1471 = vpack.c.bf16 %v1097, %v1095
    %v1472 = vpack.c.bf16 %v1100, %v1098
    %v1473 = vpack.c.bf16 %v1101, %v1099
    %v1474 = vpack.c.bf16 %v1104, %v1102
    %v1475 = vpack.c.bf16 %v1105, %v1103
    %v1476 = vpack.c.bf16 %v1108, %v1106
    %v1477 = vpack.c.bf16 %v1109, %v1107
    %v1478 = vpack.c.bf16 %v1112, %v1110
    %v1479 = vpack.c.bf16 %v1113, %v1111
    %v1480 = vpack.c.bf16 %v1116, %v1114
    %v1481 = vpack.c.bf16 %v1117, %v1115
    %v1482 = vpack.c.bf16 %v1120, %v1118
    %v1483 = vpack.c.bf16 %v1121, %v1119
    %v1484 = vpack.c.bf16 %v1266, %v1264
    %v1485 = vpack.c.bf16 %v1267, %v1265
    %v1486 = vpack.c.bf16 %v1270, %v1268
    %v1487 = vpack.c.bf16 %v1271, %v1269
    %v1488 = vpack.c.bf16 %v1274, %v1272
    %v1489 = vpack.c.bf16 %v1275, %v1273
    %v1490 = vpack.c.bf16 %v1278, %v1276
    %v1491 = vpack.c.bf16 %v1279, %v1277
    %v1492 = vpack.c.bf16 %v1282, %v1280
    %v1493 = vpack.c.bf16 %v1283, %v1281
    %v1494 = vpack.c.bf16 %v1286, %v1284
    %v1495 = vpack.c.bf16 %v1287, %v1285
    %v1496 = vpack.c.bf16 %v1290, %v1288
    %v1497 = vpack.c.bf16 %v1291, %v1289
    %v1498 = vpack.c.bf16 %v1294, %v1292
    %v1499 = vpack.c.bf16 %v1295, %v1293
    %v1500 = vpack.c.bf16 %v1309, %v1307
    %v1501 = vpack.c.bf16 %v1310, %v1308
    %v1502 = vpack.c.bf16 %v1313, %v1311
    %v1503 = vpack.c.bf16 %v1314, %v1312
    %v1504 = vpack.c.bf16 %v1317, %v1315
    %v1505 = vpack.c.bf16 %v1318, %v1316
    %v1506 = vpack.c.bf16 %v1321, %v1319
    %v1507 = vpack.c.bf16 %v1322, %v1320
    %v1508 = vpack.c.bf16 %v1325, %v1323
    %v1509 = vpack.c.bf16 %v1326, %v1324
    %v1510 = vpack.c.bf16 %v1329, %v1327
    %v1511 = vpack.c.bf16 %v1330, %v1328
    %v1512 = vpack.c.bf16 %v1333, %v1331
    %v1513 = vpack.c.bf16 %v1334, %v1332
    %v1514 = vpack.c.bf16 %v1337, %v1335
    %v1515 = vpack.c.bf16 %v1338, %v1336
    %v1516 = vpack.c.bf16 %v1352, %v1350
    %v1517 = vpack.c.bf16 %v1353, %v1351
    %v1518 = vpack.c.bf16 %v1356, %v1354
    %v1519 = vpack.c.bf16 %v1357, %v1355
    %v1520 = vpack.c.bf16 %v1360, %v1358
    %v1521 = vpack.c.bf16 %v1361, %v1359
    %v1522 = vpack.c.bf16 %v1364, %v1362
    %v1523 = vpack.c.bf16 %v1365, %v1363
    %v1524 = vpack.c.bf16 %v1368, %v1366
    %v1525 = vpack.c.bf16 %v1369, %v1367
    %v1526 = vpack.c.bf16 %v1372, %v1370
    %v1527 = vpack.c.bf16 %v1373, %v1371
    %v1528 = vpack.c.bf16 %v1376, %v1374
    %v1529 = vpack.c.bf16 %v1377, %v1375
    %v1530 = vpack.c.bf16 %v1380, %v1378
    %v1531 = vpack.c.bf16 %v1381, %v1379
    %v1532 = vpack.c.bf16 %v1395, %v1393
    %v1533 = vpack.c.bf16 %v1396, %v1394
    %v1534 = vpack.c.bf16 %v1399, %v1397
    %v1535 = vpack.c.bf16 %v1400, %v1398
    %v1536 = vpack.c.bf16 %v1403, %v1401
    %v1537 = vpack.c.bf16 %v1404, %v1402
    %v1538 = vpack.c.bf16 %v1407, %v1405
    %v1539 = vpack.c.bf16 %v1408, %v1406
    %v1540 = vpack.c.bf16 %v1411, %v1409
    %v1541 = vpack.c.bf16 %v1412, %v1410
    %v1542 = vpack.c.bf16 %v1415, %v1413
    %v1543 = vpack.c.bf16 %v1416, %v1414
    %v1544 = vpack.c.bf16 %v1419, %v1417
    %v1545 = vpack.c.bf16 %v1420, %v1418
    %v1546 = vpack.c.bf16 %v1423, %v1421
    %v1547 = vpack.c.bf16 %v1424, %v1422
    %v1548 = vpack.c.bf16 %v1438, %v1436
    %v1549 = vpack.c.bf16 %v1439, %v1437
    %v1550 = vpack.c.bf16 %v1442, %v1440
    %v1551 = vpack.c.bf16 %v1443, %v1441
    %v1552 = vpack.c.bf16 %v1446, %v1444
    %v1553 = vpack.c.bf16 %v1447, %v1445
    %v1554 = vpack.c.bf16 %v1450, %v1448
    %v1555 = vpack.c.bf16 %v1451, %v1449
    %v1556 = vpack.c.bf16 %v1454, %v1452
    %v1557 = vpack.c.bf16 %v1455, %v1453
    %v1558 = vpack.c.bf16 %v1458, %v1456
    %v1559 = vpack.c.bf16 %v1459, %v1457
    %v1560 = vpack.c.bf16 %v1462, %v1460
    %v1561 = vpack.c.bf16 %v1463, %v1461
    %v1562 = vpack.c.bf16 %v1466, %v1464
    %v1563 = vpack.c.bf16 %v1467, %v1465
    %v1564 = vld [vmem:[%s9] sm:$0xff]
    %v1565 = vld [vmem:[%s9 + $0x8] sm:$0xff]
    %v1566 = vld [vmem:[%s9 + $0x10] sm:$0xff]
    %v1567 = vld [vmem:[%s9 + $0x18] sm:$0xff]
    %v1568 = vld [vmem:[%s9 + $0x20] sm:$0xff]
    %v1569 = vld [vmem:[%s9 + $0x28] sm:$0xff]
    %v1570 = vld [vmem:[%s9 + $0x30] sm:$0xff]
    %v1571 = vld [vmem:[%s9 + $0x38] sm:$0xff]
    %v1572 = vld [vmem:[%s9 + $0x40] sm:$0xff]
    %v1573 = vld [vmem:[%s9 + $0x48] sm:$0xff]
    %v1574 = vld [vmem:[%s9 + $0x50] sm:$0xff]
    %v1575 = vld [vmem:[%s9 + $0x58] sm:$0xff]
    %v1576 = vld [vmem:[%s9 + $0x60] sm:$0xff]
    %v1577 = vld [vmem:[%s9 + $0x68] sm:$0xff]
    %v1578 = vld [vmem:[%s9 + $0x70] sm:$0xff]
    %v1579 = vld [vmem:[%s9 + $0x78] sm:$0xff]
    %v1580 = vld [vmem:[%s9 + $0x80] sm:$0xff]
    %v1581 = vld [vmem:[%s9 + $0x88] sm:$0xff]
    %v1582 = vld [vmem:[%s9 + $0x90] sm:$0xff]
    %v1583 = vld [vmem:[%s9 + $0x98] sm:$0xff]
    %v1584 = vld [vmem:[%s9 + $0xa0] sm:$0xff]
    %v1585 = vld [vmem:[%s9 + $0xa8] sm:$0xff]
    %v1586 = vld [vmem:[%s9 + $0xb0] sm:$0xff]
    %v1587 = vld [vmem:[%s9 + $0xb8] sm:$0xff]
    %v1588 = vld [vmem:[%s9 + $0xc0] sm:$0xff]
    %v1589 = vld [vmem:[%s9 + $0xc8] sm:$0xff]
    %v1590 = vld [vmem:[%s9 + $0xd0] sm:$0xff]
    %v1591 = vld [vmem:[%s9 + $0xd8] sm:$0xff]
    %v1592 = vld [vmem:[%s9 + $0xe0] sm:$0xff]
    %v1593 = vld [vmem:[%s9 + $0xe8] sm:$0xff]
    %v1594 = vld [vmem:[%s9 + $0xf0] sm:$0xff]
    %v1595 = vld [vmem:[%s9 + $0xf8] sm:$0xff]
    %v1628 = vunpack.c.l.b16 %v1564
    %v1629 = vunpack.c.h.b16 %v1564
    %v1630 = vunpack.c.l.b16 %v1565
    %v1631 = vunpack.c.h.b16 %v1565
    %v1632 = vunpack.c.l.b16 %v1566
    %v1633 = vunpack.c.h.b16 %v1566
    %v1634 = vunpack.c.l.b16 %v1567
    %v1635 = vunpack.c.h.b16 %v1567
    %v1636 = vunpack.c.l.b16 %v1568
    %v1637 = vunpack.c.h.b16 %v1568
    %v1638 = vunpack.c.l.b16 %v1569
    %v1639 = vunpack.c.h.b16 %v1569
    %v1640 = vunpack.c.l.b16 %v1570
    %v1641 = vunpack.c.h.b16 %v1570
    %v1642 = vunpack.c.l.b16 %v1571
    %v1643 = vunpack.c.h.b16 %v1571
    %v1644 = vunpack.c.l.b16 %v1572
    %v1645 = vunpack.c.h.b16 %v1572
    %v1646 = vunpack.c.l.b16 %v1573
    %v1647 = vunpack.c.h.b16 %v1573
    %v1648 = vunpack.c.l.b16 %v1574
    %v1649 = vunpack.c.h.b16 %v1574
    %v1650 = vunpack.c.l.b16 %v1575
    %v1651 = vunpack.c.h.b16 %v1575
    %v1652 = vunpack.c.l.b16 %v1576
    %v1653 = vunpack.c.h.b16 %v1576
    %v1654 = vunpack.c.l.b16 %v1577
    %v1655 = vunpack.c.h.b16 %v1577
    %v1656 = vunpack.c.l.b16 %v1578
    %v1657 = vunpack.c.h.b16 %v1578
    %v1658 = vunpack.c.l.b16 %v1579
    %v1659 = vunpack.c.h.b16 %v1579
    %v1660 = vunpack.c.l.b16 %v1580
    %v1661 = vunpack.c.h.b16 %v1580
    %v1662 = vunpack.c.l.b16 %v1581
    %v1663 = vunpack.c.h.b16 %v1581
    %v1664 = vunpack.c.l.b16 %v1582
    %v1665 = vunpack.c.h.b16 %v1582
    %v1666 = vunpack.c.l.b16 %v1583
    %v1667 = vunpack.c.h.b16 %v1583
    %v1668 = vunpack.c.l.b16 %v1584
    %v1669 = vunpack.c.h.b16 %v1584
    %v1670 = vunpack.c.l.b16 %v1585
    %v1671 = vunpack.c.h.b16 %v1585
    %v1672 = vunpack.c.l.b16 %v1586
    %v1673 = vunpack.c.h.b16 %v1586
    %v1674 = vunpack.c.l.b16 %v1587
    %v1675 = vunpack.c.h.b16 %v1587
    %v1676 = vunpack.c.l.b16 %v1588
    %v1677 = vunpack.c.h.b16 %v1588
    %v1678 = vunpack.c.l.b16 %v1589
    %v1679 = vunpack.c.h.b16 %v1589
    %v1680 = vunpack.c.l.b16 %v1590
    %v1681 = vunpack.c.h.b16 %v1590
    %v1682 = vunpack.c.l.b16 %v1591
    %v1683 = vunpack.c.h.b16 %v1591
    %v1684 = vunpack.c.l.b16 %v1592
    %v1685 = vunpack.c.h.b16 %v1592
    %v1686 = vunpack.c.l.b16 %v1593
    %v1687 = vunpack.c.h.b16 %v1593
    %v1688 = vunpack.c.l.b16 %v1594
    %v1689 = vunpack.c.h.b16 %v1594
    %v1690 = vunpack.c.l.b16 %v1595
    %v1691 = vunpack.c.h.b16 %v1595
    %v1692 = vpack.c.b16 %v1630, %v1628
    %v1693 = vpack.c.b16 %v1631, %v1629
    %v1694 = vpack.c.b16 %v1634, %v1632
    %v1695 = vpack.c.b16 %v1635, %v1633
    %v1696 = vpack.c.b16 %v1638, %v1636
    %v1697 = vpack.c.b16 %v1639, %v1637
    %v1698 = vpack.c.b16 %v1642, %v1640
    %v1699 = vpack.c.b16 %v1643, %v1641
    %v1700 = vpack.c.b16 %v1646, %v1644
    %v1701 = vpack.c.b16 %v1647, %v1645
    %v1702 = vpack.c.b16 %v1650, %v1648
    %v1703 = vpack.c.b16 %v1651, %v1649
    %v1704 = vpack.c.b16 %v1654, %v1652
    %v1705 = vpack.c.b16 %v1655, %v1653
    %v1706 = vpack.c.b16 %v1658, %v1656
    %v1707 = vpack.c.b16 %v1659, %v1657
    %v1708 = vpack.c.b16 %v1662, %v1660
    %v1709 = vpack.c.b16 %v1663, %v1661
    %v1710 = vpack.c.b16 %v1666, %v1664
    %v1711 = vpack.c.b16 %v1667, %v1665
    %v1712 = vpack.c.b16 %v1670, %v1668
    %v1713 = vpack.c.b16 %v1671, %v1669
    %v1714 = vpack.c.b16 %v1674, %v1672
    %v1715 = vpack.c.b16 %v1675, %v1673
    %v1716 = vpack.c.b16 %v1678, %v1676
    %v1717 = vpack.c.b16 %v1679, %v1677
    %v1718 = vpack.c.b16 %v1682, %v1680
    %v1719 = vpack.c.b16 %v1683, %v1681
    %v1720 = vpack.c.b16 %v1686, %v1684
    %v1721 = vpack.c.b16 %v1687, %v1685
    %v1722 = vpack.c.b16 %v1690, %v1688
    %v1723 = vpack.c.b16 %v1691, %v1689
    %1756 = vmatprep.subr.bf16.mxu0 %v1693
    %1757 = vmatpush1.bf16.msra.mxu0 %v1692
    %1758 = vmatprep.subr.bf16.mxu0 %v1695
    %1759 = vmatpush1.bf16.msra.mxu0 %v1694
    %1760 = vmatprep.subr.bf16.mxu0 %v1697
    %1761 = vmatpush1.bf16.msra.mxu0 %v1696
    %1762 = vmatprep.subr.bf16.mxu0 %v1699
    %1763 = vmatpush1.bf16.msra.mxu0 %v1698
    %1764 = vmatprep.subr.bf16.mxu0 %v1701
    %1765 = vmatpush1.bf16.msra.mxu0 %v1700
    %1766 = vmatprep.subr.bf16.mxu0 %v1703
    %1767 = vmatpush1.bf16.msra.mxu0 %v1702
    %1768 = vmatprep.subr.bf16.mxu0 %v1705
    %1769 = vmatpush1.bf16.msra.mxu0 %v1704
    %1770 = vmatprep.subr.bf16.mxu0 %v1707
    %1771 = vmatpush1.bf16.msra.mxu0 %v1706
    %1772 = vmatprep.subr.bf16.mxu0 %v1709
    %1773 = vmatpush1.bf16.msra.mxu0 %v1708
    %1774 = vmatprep.subr.bf16.mxu0 %v1711
    %1775 = vmatpush1.bf16.msra.mxu0 %v1710
    %1776 = vmatprep.subr.bf16.mxu0 %v1713
    %1777 = vmatpush1.bf16.msra.mxu0 %v1712
    %1778 = vmatprep.subr.bf16.mxu0 %v1715
    %1779 = vmatpush1.bf16.msra.mxu0 %v1714
    %1780 = vmatprep.subr.bf16.mxu0 %v1717
    %1781 = vmatpush1.bf16.msra.mxu0 %v1716
    %1782 = vmatprep.subr.bf16.mxu0 %v1719
    %1783 = vmatpush1.bf16.msra.mxu0 %v1718
    %1784 = vmatprep.subr.bf16.mxu0 %v1721
    %1785 = vmatpush1.bf16.msra.mxu0 %v1720
    %1786 = vmatprep.subr.bf16.mxu0 %v1723
    %1787 = vmatpush1.bf16.msra.mxu0 %v1722
    %1788 = vmatprep.mubr.bf16.mxu0 %v1469
    %1789 = vmatmul.mubr.bf16.gmra.mrb[0].mxu0 %v1468
    %v1790 = vpop.f32.mrb[0].mxu0
    %v1791 = vadd.f32 0.0, %v1790
    %v1792 = vpop.f32.mrb[0].mxu0
    %v1793 = vadd.f32 0.0, %v1792
    %v1794 = vpop.f32.mrb[0].mxu0
    %v1795 = vadd.f32 0.0, %v1794
    %v1796 = vpop.f32.mrb[0].mxu0
    %v1797 = vadd.f32 0.0, %v1796
    %1798 = vmatprep.mubr.bf16.mxu0 %v1471
    %1799 = vmatmul.mubr.bf16.gmra.mrb[0].mxu0 %v1470
    %v1800 = vpop.f32.mrb[0].mxu0
    %v1801 = vadd.f32 0.0, %v1800
    %v1802 = vpop.f32.mrb[0].mxu0
    %v1803 = vadd.f32 0.0, %v1802
    %v1804 = vpop.f32.mrb[0].mxu0
    %v1805 = vadd.f32 0.0, %v1804
    %v1806 = vpop.f32.mrb[0].mxu0
    %v1807 = vadd.f32 0.0, %v1806
    %1808 = vmatprep.mubr.bf16.mxu0 %v1473
    %1809 = vmatmul.mubr.bf16.gmra.mrb[0].mxu0 %v1472
    %v1810 = vpop.f32.mrb[0].mxu0
    %v1811 = vadd.f32 0.0, %v1810
    %v1812 = vpop.f32.mrb[0].mxu0
    %v1813 = vadd.f32 0.0, %v1812
    %v1814 = vpop.f32.mrb[0].mxu0
    %v1815 = vadd.f32 0.0, %v1814
    %v1816 = vpop.f32.mrb[0].mxu0
    %v1817 = vadd.f32 0.0, %v1816
    %1818 = vmatprep.mubr.bf16.mxu0 %v1475
    %1819 = vmatmul.mubr.bf16.gmra.mrb[0].mxu0 %v1474
    %v1820 = vpop.f32.mrb[0].mxu0
    %v1821 = vadd.f32 0.0, %v1820
    %v1822 = vpop.f32.mrb[0].mxu0
    %v1823 = vadd.f32 0.0, %v1822
    %v1824 = vpop.f32.mrb[0].mxu0
    %v1825 = vadd.f32 0.0, %v1824
    %v1826 = vpop.f32.mrb[0].mxu0
    %v1827 = vadd.f32 0.0, %v1826
    %1828 = vmatprep.mubr.bf16.mxu0 %v1477
    %1829 = vmatmul.mubr.bf16.gmra.mrb[0].mxu0 %v1476
    %v1830 = vpop.f32.mrb[0].mxu0
    %v1831 = vadd.f32 0.0, %v1830
    %v1832 = vpop.f32.mrb[0].mxu0
    %v1833 = vadd.f32 0.0, %v1832
    %v1834 = vpop.f32.mrb[0].mxu0
    %v1835 = vadd.f32 0.0, %v1834
    %v1836 = vpop.f32.mrb[0].mxu0
    %v1837 = vadd.f32 0.0, %v1836
    %1838 = vmatprep.mubr.bf16.mxu0 %v1479
    %1839 = vmatmul.mubr.bf16.gmra.mrb[0].mxu0 %v1478
    %v1840 = vpop.f32.mrb[0].mxu0
    %v1841 = vadd.f32 0.0, %v1840
    %v1842 = vpop.f32.mrb[0].mxu0
    %v1843 = vadd.f32 0.0, %v1842
    %v1844 = vpop.f32.mrb[0].mxu0
    %v1845 = vadd.f32 0.0, %v1844
    %v1846 = vpop.f32.mrb[0].mxu0
    %v1847 = vadd.f32 0.0, %v1846
    %1848 = vmatprep.mubr.bf16.mxu0 %v1481
    %1849 = vmatmul.mubr.bf16.gmra.mrb[0].mxu0 %v1480
    %v1850 = vpop.f32.mrb[0].mxu0
    %v1851 = vadd.f32 0.0, %v1850
    %v1852 = vpop.f32.mrb[0].mxu0
    %v1853 = vadd.f32 0.0, %v1852
    %v1854 = vpop.f32.mrb[0].mxu0
    %v1855 = vadd.f32 0.0, %v1854
    %v1856 = vpop.f32.mrb[0].mxu0
    %v1857 = vadd.f32 0.0, %v1856
    %1858 = vmatprep.mubr.bf16.mxu0 %v1483
    %1859 = vmatmul.mubr.bf16.gmra.mrb[0].mxu0 %v1482
    %v1860 = vpop.f32.mrb[0].mxu0
    %v1861 = vadd.f32 0.0, %v1860
    %v1862 = vpop.f32.mrb[0].mxu0
    %v1863 = vadd.f32 0.0, %v1862
    %v1864 = vpop.f32.mrb[0].mxu0
    %v1865 = vadd.f32 0.0, %v1864
    %v1866 = vpop.f32.mrb[0].mxu0
    %v1867 = vadd.f32 0.0, %v1866
    %1868 = vmatprep.mubr.bf16.mxu0 %v1485
    %1869 = vmatmul.mubr.bf16.gmra.mrb[0].mxu0 %v1484
    %v1870 = vpop.f32.mrb[0].mxu0
    %v1871 = vadd.f32 0.0, %v1870
    %v1872 = vpop.f32.mrb[0].mxu0
    %v1873 = vadd.f32 0.0, %v1872
    %v1874 = vpop.f32.mrb[0].mxu0
    %v1875 = vadd.f32 0.0, %v1874
    %v1876 = vpop.f32.mrb[0].mxu0
    %v1877 = vadd.f32 0.0, %v1876
    %1878 = vmatprep.mubr.bf16.mxu0 %v1487
    %1879 = vmatmul.mubr.bf16.gmra.mrb[0].mxu0 %v1486
    %v1880 = vpop.f32.mrb[0].mxu0
    %v1881 = vadd.f32 0.0, %v1880
    %v1882 = vpop.f32.mrb[0].mxu0
    %v1883 = vadd.f32 0.0, %v1882
    %v1884 = vpop.f32.mrb[0].mxu0
    %v1885 = vadd.f32 0.0, %v1884
    %v1886 = vpop.f32.mrb[0].mxu0
    %v1887 = vadd.f32 0.0, %v1886
    %1888 = vmatprep.mubr.bf16.mxu0 %v1489
    %1889 = vmatmul.mubr.bf16.gmra.mrb[0].mxu0 %v1488
    %v1890 = vpop.f32.mrb[0].mxu0
    %v1891 = vadd.f32 0.0, %v1890
    %v1892 = vpop.f32.mrb[0].mxu0
    %v1893 = vadd.f32 0.0, %v1892
    %v1894 = vpop.f32.mrb[0].mxu0
    %v1895 = vadd.f32 0.0, %v1894
    %v1896 = vpop.f32.mrb[0].mxu0
    %v1897 = vadd.f32 0.0, %v1896
    %1898 = vmatprep.mubr.bf16.mxu0 %v1491
    %1899 = vmatmul.mubr.bf16.gmra.mrb[0].mxu0 %v1490
    %v1900 = vpop.f32.mrb[0].mxu0
    %v1901 = vadd.f32 0.0, %v1900
    %v1902 = vpop.f32.mrb[0].mxu0
    %v1903 = vadd.f32 0.0, %v1902
    %v1904 = vpop.f32.mrb[0].mxu0
    %v1905 = vadd.f32 0.0, %v1904
    %v1906 = vpop.f32.mrb[0].mxu0
    %v1907 = vadd.f32 0.0, %v1906
    %1908 = vmatprep.mubr.bf16.mxu0 %v1493
    %1909 = vmatmul.mubr.bf16.gmra.mrb[0].mxu0 %v1492
    %v1910 = vpop.f32.mrb[0].mxu0
    %v1911 = vadd.f32 0.0, %v1910
    %v1912 = vpop.f32.mrb[0].mxu0
    %v1913 = vadd.f32 0.0, %v1912
    %v1914 = vpop.f32.mrb[0].mxu0
    %v1915 = vadd.f32 0.0, %v1914
    %v1916 = vpop.f32.mrb[0].mxu0
    %v1917 = vadd.f32 0.0, %v1916
    %1918 = vmatprep.mubr.bf16.mxu0 %v1495
    %1919 = vmatmul.mubr.bf16.gmra.mrb[0].mxu0 %v1494
    %v1920 = vpop.f32.mrb[0].mxu0
    %v1921 = vadd.f32 0.0, %v1920
    %v1922 = vpop.f32.mrb[0].mxu0
    %v1923 = vadd.f32 0.0, %v1922
    %v1924 = vpop.f32.mrb[0].mxu0
    %v1925 = vadd.f32 0.0, %v1924
    %v1926 = vpop.f32.mrb[0].mxu0
    %v1927 = vadd.f32 0.0, %v1926
    %1928 = vmatprep.mubr.bf16.mxu0 %v1497
    %1929 = vmatmul.mubr.bf16.gmra.mrb[0].mxu0 %v1496
    %v1930 = vpop.f32.mrb[0].mxu0
    %v1931 = vadd.f32 0.0, %v1930
    %v1932 = vpop.f32.mrb[0].mxu0
    %v1933 = vadd.f32 0.0, %v1932
    %v1934 = vpop.f32.mrb[0].mxu0
    %v1935 = vadd.f32 0.0, %v1934
    %v1936 = vpop.f32.mrb[0].mxu0
    %v1937 = vadd.f32 0.0, %v1936
    %1938 = vmatprep.mubr.bf16.mxu0 %v1499
    %1939 = vmatmul.mubr.bf16.gmra.mrb[0].mxu0 %v1498
    %v1940 = vpop.f32.mrb[0].mxu0
    %v1941 = vadd.f32 0.0, %v1940
    %v1942 = vpop.f32.mrb[0].mxu0
    %v1943 = vadd.f32 0.0, %v1942
    %v1944 = vpop.f32.mrb[0].mxu0
    %v1945 = vadd.f32 0.0, %v1944
    %v1946 = vpop.f32.mrb[0].mxu0
    %v1947 = vadd.f32 0.0, %v1946
    %1948 = vmatprep.mubr.bf16.mxu0 %v1501
    %1949 = vmatmul.mubr.bf16.gmra.mrb[0].mxu0 %v1500
    %v1950 = vpop.f32.mrb[0].mxu0
    %v1951 = vadd.f32 0.0, %v1950
    %v1952 = vpop.f32.mrb[0].mxu0
    %v1953 = vadd.f32 0.0, %v1952
    %v1954 = vpop.f32.mrb[0].mxu0
    %v1955 = vadd.f32 0.0, %v1954
    %v1956 = vpop.f32.mrb[0].mxu0
    %v1957 = vadd.f32 0.0, %v1956
    %1958 = vmatprep.mubr.bf16.mxu0 %v1503
    %1959 = vmatmul.mubr.bf16.gmra.mrb[0].mxu0 %v1502
    %v1960 = vpop.f32.mrb[0].mxu0
    %v1961 = vadd.f32 0.0, %v1960
    %v1962 = vpop.f32.mrb[0].mxu0
    %v1963 = vadd.f32 0.0, %v1962
    %v1964 = vpop.f32.mrb[0].mxu0
    %v1965 = vadd.f32 0.0, %v1964
    %v1966 = vpop.f32.mrb[0].mxu0
    %v1967 = vadd.f32 0.0, %v1966
    %1968 = vmatprep.mubr.bf16.mxu0 %v1505
    %1969 = vmatmul.mubr.bf16.gmra.mrb[0].mxu0 %v1504
    %v1970 = vpop.f32.mrb[0].mxu0
    %v1971 = vadd.f32 0.0, %v1970
    %v1972 = vpop.f32.mrb[0].mxu0
    %v1973 = vadd.f32 0.0, %v1972
    %v1974 = vpop.f32.mrb[0].mxu0
    %v1975 = vadd.f32 0.0, %v1974
    %v1976 = vpop.f32.mrb[0].mxu0
    %v1977 = vadd.f32 0.0, %v1976
    %1978 = vmatprep.mubr.bf16.mxu0 %v1507
    %1979 = vmatmul.mubr.bf16.gmra.mrb[0].mxu0 %v1506
    %v1980 = vpop.f32.mrb[0].mxu0
    %v1981 = vadd.f32 0.0, %v1980
    %v1982 = vpop.f32.mrb[0].mxu0
    %v1983 = vadd.f32 0.0, %v1982
    %v1984 = vpop.f32.mrb[0].mxu0
    %v1985 = vadd.f32 0.0, %v1984
    %v1986 = vpop.f32.mrb[0].mxu0
    %v1987 = vadd.f32 0.0, %v1986
    %1988 = vmatprep.mubr.bf16.mxu0 %v1509
    %1989 = vmatmul.mubr.bf16.gmra.mrb[0].mxu0 %v1508
    %v1990 = vpop.f32.mrb[0].mxu0
    %v1991 = vadd.f32 0.0, %v1990
    %v1992 = vpop.f32.mrb[0].mxu0
    %v1993 = vadd.f32 0.0, %v1992
    %v1994 = vpop.f32.mrb[0].mxu0
    %v1995 = vadd.f32 0.0, %v1994
    %v1996 = vpop.f32.mrb[0].mxu0
    %v1997 = vadd.f32 0.0, %v1996
    %1998 = vmatprep.mubr.bf16.mxu0 %v1511
    %1999 = vmatmul.mubr.bf16.gmra.mrb[0].mxu0 %v1510
    %v2000 = vpop.f32.mrb[0].mxu0
    %v2001 = vadd.f32 0.0, %v2000
    %v2002 = vpop.f32.mrb[0].mxu0
    %v2003 = vadd.f32 0.0, %v2002
    %v2004 = vpop.f32.mrb[0].mxu0
    %v2005 = vadd.f32 0.0, %v2004
    %v2006 = vpop.f32.mrb[0].mxu0
    %v2007 = vadd.f32 0.0, %v2006
    %2008 = vmatprep.mubr.bf16.mxu0 %v1513
    %2009 = vmatmul.mubr.bf16.gmra.mrb[0].mxu0 %v1512
    %v2010 = vpop.f32.mrb[0].mxu0
    %v2011 = vadd.f32 0.0, %v2010
    %v2012 = vpop.f32.mrb[0].mxu0
    %v2013 = vadd.f32 0.0, %v2012
    %v2014 = vpop.f32.mrb[0].mxu0
    %v2015 = vadd.f32 0.0, %v2014
    %v2016 = vpop.f32.mrb[0].mxu0
    %v2017 = vadd.f32 0.0, %v2016
    %2018 = vmatprep.mubr.bf16.mxu0 %v1515
    %2019 = vmatmul.mubr.bf16.gmra.mrb[0].mxu0 %v1514
    %v2020 = vpop.f32.mrb[0].mxu0
    %v2021 = vadd.f32 0.0, %v2020
    %v2022 = vpop.f32.mrb[0].mxu0
    %v2023 = vadd.f32 0.0, %v2022
    %v2024 = vpop.f32.mrb[0].mxu0
    %v2025 = vadd.f32 0.0, %v2024
    %v2026 = vpop.f32.mrb[0].mxu0
    %v2027 = vadd.f32 0.0, %v2026
    %2028 = vmatprep.mubr.bf16.mxu0 %v1517
    %2029 = vmatmul.mubr.bf16.gmra.mrb[0].mxu0 %v1516
    %v2030 = vpop.f32.mrb[0].mxu0
    %v2031 = vadd.f32 0.0, %v2030
    %v2032 = vpop.f32.mrb[0].mxu0
    %v2033 = vadd.f32 0.0, %v2032
    %v2034 = vpop.f32.mrb[0].mxu0
    %v2035 = vadd.f32 0.0, %v2034
    %v2036 = vpop.f32.mrb[0].mxu0
    %v2037 = vadd.f32 0.0, %v2036
    %2038 = vmatprep.mubr.bf16.mxu0 %v1519
    %2039 = vmatmul.mubr.bf16.gmra.mrb[0].mxu0 %v1518
    %v2040 = vpop.f32.mrb[0].mxu0
    %v2041 = vadd.f32 0.0, %v2040
    %v2042 = vpop.f32.mrb[0].mxu0
    %v2043 = vadd.f32 0.0, %v2042
    %v2044 = vpop.f32.mrb[0].mxu0
    %v2045 = vadd.f32 0.0, %v2044
    %v2046 = vpop.f32.mrb[0].mxu0
    %v2047 = vadd.f32 0.0, %v2046
    %2048 = vmatprep.mubr.bf16.mxu0 %v1521
    %2049 = vmatmul.mubr.bf16.gmra.mrb[0].mxu0 %v1520
    %v2050 = vpop.f32.mrb[0].mxu0
    %v2051 = vadd.f32 0.0, %v2050
    %v2052 = vpop.f32.mrb[0].mxu0
    %v2053 = vadd.f32 0.0, %v2052
    %v2054 = vpop.f32.mrb[0].mxu0
    %v2055 = vadd.f32 0.0, %v2054
    %v2056 = vpop.f32.mrb[0].mxu0
    %v2057 = vadd.f32 0.0, %v2056
    %2058 = vmatprep.mubr.bf16.mxu0 %v1523
    %2059 = vmatmul.mubr.bf16.gmra.mrb[0].mxu0 %v1522
    %v2060 = vpop.f32.mrb[0].mxu0
    %v2061 = vadd.f32 0.0, %v2060
    %v2062 = vpop.f32.mrb[0].mxu0
    %v2063 = vadd.f32 0.0, %v2062
    %v2064 = vpop.f32.mrb[0].mxu0
    %v2065 = vadd.f32 0.0, %v2064
    %v2066 = vpop.f32.mrb[0].mxu0
    %v2067 = vadd.f32 0.0, %v2066
    %2068 = vmatprep.mubr.bf16.mxu0 %v1525
    %2069 = vmatmul.mubr.bf16.gmra.mrb[0].mxu0 %v1524
    %v2070 = vpop.f32.mrb[0].mxu0
    %v2071 = vadd.f32 0.0, %v2070
    %v2072 = vpop.f32.mrb[0].mxu0
    %v2073 = vadd.f32 0.0, %v2072
    %v2074 = vpop.f32.mrb[0].mxu0
    %v2075 = vadd.f32 0.0, %v2074
    %v2076 = vpop.f32.mrb[0].mxu0
    %v2077 = vadd.f32 0.0, %v2076
    %2078 = vmatprep.mubr.bf16.mxu0 %v1527
    %2079 = vmatmul.mubr.bf16.gmra.mrb[0].mxu0 %v1526
    %v2080 = vpop.f32.mrb[0].mxu0
    %v2081 = vadd.f32 0.0, %v2080
    %v2082 = vpop.f32.mrb[0].mxu0
    %v2083 = vadd.f32 0.0, %v2082
    %v2084 = vpop.f32.mrb[0].mxu0
    %v2085 = vadd.f32 0.0, %v2084
    %v2086 = vpop.f32.mrb[0].mxu0
    %v2087 = vadd.f32 0.0, %v2086
    %2088 = vmatprep.mubr.bf16.mxu0 %v1529
    %2089 = vmatmul.mubr.bf16.gmra.mrb[0].mxu0 %v1528
    %v2090 = vpop.f32.mrb[0].mxu0
    %v2091 = vadd.f32 0.0, %v2090
    %v2092 = vpop.f32.mrb[0].mxu0
    %v2093 = vadd.f32 0.0, %v2092
    %v2094 = vpop.f32.mrb[0].mxu0
    %v2095 = vadd.f32 0.0, %v2094
    %v2096 = vpop.f32.mrb[0].mxu0
    %v2097 = vadd.f32 0.0, %v2096
    %2098 = vmatprep.mubr.bf16.mxu0 %v1531
    %2099 = vmatmul.mubr.bf16.gmra.mrb[0].mxu0 %v1530
    %v2100 = vpop.f32.mrb[0].mxu0
    %v2101 = vadd.f32 0.0, %v2100
    %v2102 = vpop.f32.mrb[0].mxu0
    %v2103 = vadd.f32 0.0, %v2102
    %v2104 = vpop.f32.mrb[0].mxu0
    %v2105 = vadd.f32 0.0, %v2104
    %v2106 = vpop.f32.mrb[0].mxu0
    %v2107 = vadd.f32 0.0, %v2106
    %2108 = vmatprep.mubr.bf16.mxu0 %v1533
    %2109 = vmatmul.mubr.bf16.gmra.mrb[0].mxu0 %v1532
    %v2110 = vpop.f32.mrb[0].mxu0
    %v2111 = vadd.f32 0.0, %v2110
    %v2112 = vpop.f32.mrb[0].mxu0
    %v2113 = vadd.f32 0.0, %v2112
    %v2114 = vpop.f32.mrb[0].mxu0
    %v2115 = vadd.f32 0.0, %v2114
    %v2116 = vpop.f32.mrb[0].mxu0
    %v2117 = vadd.f32 0.0, %v2116
    %2118 = vmatprep.mubr.bf16.mxu0 %v1535
    %2119 = vmatmul.mubr.bf16.gmra.mrb[0].mxu0 %v1534
    %v2120 = vpop.f32.mrb[0].mxu0
    %v2121 = vadd.f32 0.0, %v2120
    %v2122 = vpop.f32.mrb[0].mxu0
    %v2123 = vadd.f32 0.0, %v2122
    %v2124 = vpop.f32.mrb[0].mxu0
    %v2125 = vadd.f32 0.0, %v2124
    %v2126 = vpop.f32.mrb[0].mxu0
    %v2127 = vadd.f32 0.0, %v2126
    %2128 = vmatprep.mubr.bf16.mxu0 %v1537
    %2129 = vmatmul.mubr.bf16.gmra.mrb[0].mxu0 %v1536
    %v2130 = vpop.f32.mrb[0].mxu0
    %v2131 = vadd.f32 0.0, %v2130
    %v2132 = vpop.f32.mrb[0].mxu0
    %v2133 = vadd.f32 0.0, %v2132
    %v2134 = vpop.f32.mrb[0].mxu0
    %v2135 = vadd.f32 0.0, %v2134
    %v2136 = vpop.f32.mrb[0].mxu0
    %v2137 = vadd.f32 0.0, %v2136
    %2138 = vmatprep.mubr.bf16.mxu0 %v1539
    %2139 = vmatmul.mubr.bf16.gmra.mrb[0].mxu0 %v1538
    %v2140 = vpop.f32.mrb[0].mxu0
    %v2141 = vadd.f32 0.0, %v2140
    %v2142 = vpop.f32.mrb[0].mxu0
    %v2143 = vadd.f32 0.0, %v2142
    %v2144 = vpop.f32.mrb[0].mxu0
    %v2145 = vadd.f32 0.0, %v2144
    %v2146 = vpop.f32.mrb[0].mxu0
    %v2147 = vadd.f32 0.0, %v2146
    %2148 = vmatprep.mubr.bf16.mxu0 %v1541
    %2149 = vmatmul.mubr.bf16.gmra.mrb[0].mxu0 %v1540
    %v2150 = vpop.f32.mrb[0].mxu0
    %v2151 = vadd.f32 0.0, %v2150
    %v2152 = vpop.f32.mrb[0].mxu0
    %v2153 = vadd.f32 0.0, %v2152
    %v2154 = vpop.f32.mrb[0].mxu0
    %v2155 = vadd.f32 0.0, %v2154
    %v2156 = vpop.f32.mrb[0].mxu0
    %v2157 = vadd.f32 0.0, %v2156
    %2158 = vmatprep.mubr.bf16.mxu0 %v1543
    %2159 = vmatmul.mubr.bf16.gmra.mrb[0].mxu0 %v1542
    %v2160 = vpop.f32.mrb[0].mxu0
    %v2161 = vadd.f32 0.0, %v2160
    %v2162 = vpop.f32.mrb[0].mxu0
    %v2163 = vadd.f32 0.0, %v2162
    %v2164 = vpop.f32.mrb[0].mxu0
    %v2165 = vadd.f32 0.0, %v2164
    %v2166 = vpop.f32.mrb[0].mxu0
    %v2167 = vadd.f32 0.0, %v2166
    %2168 = vmatprep.mubr.bf16.mxu0 %v1545
    %2169 = vmatmul.mubr.bf16.gmra.mrb[0].mxu0 %v1544
    %v2170 = vpop.f32.mrb[0].mxu0
    %v2171 = vadd.f32 0.0, %v2170
    %v2172 = vpop.f32.mrb[0].mxu0
    %v2173 = vadd.f32 0.0, %v2172
    %v2174 = vpop.f32.mrb[0].mxu0
    %v2175 = vadd.f32 0.0, %v2174
    %v2176 = vpop.f32.mrb[0].mxu0
    %v2177 = vadd.f32 0.0, %v2176
    %2178 = vmatprep.mubr.bf16.mxu0 %v1547
    %2179 = vmatmul.mubr.bf16.gmra.mrb[0].mxu0 %v1546
    %v2180 = vpop.f32.mrb[0].mxu0
    %v2181 = vadd.f32 0.0, %v2180
    %v2182 = vpop.f32.mrb[0].mxu0
    %v2183 = vadd.f32 0.0, %v2182
    %v2184 = vpop.f32.mrb[0].mxu0
    %v2185 = vadd.f32 0.0, %v2184
    %v2186 = vpop.f32.mrb[0].mxu0
    %v2187 = vadd.f32 0.0, %v2186
    %2188 = vmatprep.mubr.bf16.mxu0 %v1549
    %2189 = vmatmul.mubr.bf16.gmra.mrb[0].mxu0 %v1548
    %v2190 = vpop.f32.mrb[0].mxu0
    %v2191 = vadd.f32 0.0, %v2190
    %v2192 = vpop.f32.mrb[0].mxu0
    %v2193 = vadd.f32 0.0, %v2192
    %v2194 = vpop.f32.mrb[0].mxu0
    %v2195 = vadd.f32 0.0, %v2194
    %v2196 = vpop.f32.mrb[0].mxu0
    %v2197 = vadd.f32 0.0, %v2196
    %2198 = vmatprep.mubr.bf16.mxu0 %v1551
    %2199 = vmatmul.mubr.bf16.gmra.mrb[0].mxu0 %v1550
    %v2200 = vpop.f32.mrb[0].mxu0
    %v2201 = vadd.f32 0.0, %v2200
    %v2202 = vpop.f32.mrb[0].mxu0
    %v2203 = vadd.f32 0.0, %v2202
    %v2204 = vpop.f32.mrb[0].mxu0
    %v2205 = vadd.f32 0.0, %v2204
    %v2206 = vpop.f32.mrb[0].mxu0
    %v2207 = vadd.f32 0.0, %v2206
    %2208 = vmatprep.mubr.bf16.mxu0 %v1553
    %2209 = vmatmul.mubr.bf16.gmra.mrb[0].mxu0 %v1552
    %v2210 = vpop.f32.mrb[0].mxu0
    %v2211 = vadd.f32 0.0, %v2210
    %v2212 = vpop.f32.mrb[0].mxu0
    %v2213 = vadd.f32 0.0, %v2212
    %v2214 = vpop.f32.mrb[0].mxu0
    %v2215 = vadd.f32 0.0, %v2214
    %v2216 = vpop.f32.mrb[0].mxu0
    %v2217 = vadd.f32 0.0, %v2216
    %2218 = vmatprep.mubr.bf16.mxu0 %v1555
    %2219 = vmatmul.mubr.bf16.gmra.mrb[0].mxu0 %v1554
    %v2220 = vpop.f32.mrb[0].mxu0
    %v2221 = vadd.f32 0.0, %v2220
    %v2222 = vpop.f32.mrb[0].mxu0
    %v2223 = vadd.f32 0.0, %v2222
    %v2224 = vpop.f32.mrb[0].mxu0
    %v2225 = vadd.f32 0.0, %v2224
    %v2226 = vpop.f32.mrb[0].mxu0
    %v2227 = vadd.f32 0.0, %v2226
    %2228 = vmatprep.mubr.bf16.mxu0 %v1557
    %2229 = vmatmul.mubr.bf16.gmra.mrb[0].mxu0 %v1556
    %v2230 = vpop.f32.mrb[0].mxu0
    %v2231 = vadd.f32 0.0, %v2230
    %v2232 = vpop.f32.mrb[0].mxu0
    %v2233 = vadd.f32 0.0, %v2232
    %v2234 = vpop.f32.mrb[0].mxu0
    %v2235 = vadd.f32 0.0, %v2234
    %v2236 = vpop.f32.mrb[0].mxu0
    %v2237 = vadd.f32 0.0, %v2236
    %2238 = vmatprep.mubr.bf16.mxu0 %v1559
    %2239 = vmatmul.mubr.bf16.gmra.mrb[0].mxu0 %v1558
    %v2240 = vpop.f32.mrb[0].mxu0
    %v2241 = vadd.f32 0.0, %v2240
    %v2242 = vpop.f32.mrb[0].mxu0
    %v2243 = vadd.f32 0.0, %v2242
    %v2244 = vpop.f32.mrb[0].mxu0
    %v2245 = vadd.f32 0.0, %v2244
    %v2246 = vpop.f32.mrb[0].mxu0
    %v2247 = vadd.f32 0.0, %v2246
    %2248 = vmatprep.mubr.bf16.mxu0 %v1561
    %2249 = vmatmul.mubr.bf16.gmra.mrb[0].mxu0 %v1560
    %v2250 = vpop.f32.mrb[0].mxu0
    %v2251 = vadd.f32 0.0, %v2250
    %v2252 = vpop.f32.mrb[0].mxu0
    %v2253 = vadd.f32 0.0, %v2252
    %v2254 = vpop.f32.mrb[0].mxu0
    %v2255 = vadd.f32 0.0, %v2254
    %v2256 = vpop.f32.mrb[0].mxu0
    %v2257 = vadd.f32 0.0, %v2256
    %2258 = vmatprep.mubr.bf16.mxu0 %v1563
    %2259 = vmatmul.mubr.bf16.gmra.mrb[0].mxu0 %v1562
    %v2260 = vpop.f32.mrb[0].mxu0
    %v2261 = vadd.f32 0.0, %v2260
    %v2262 = vpop.f32.mrb[0].mxu0
    %v2263 = vadd.f32 0.0, %v2262
    %v2264 = vpop.f32.mrb[0].mxu0
    %v2265 = vadd.f32 0.0, %v2264
    %v2266 = vpop.f32.mrb[0].mxu0
    %v2267 = vadd.f32 0.0, %v2266
    %2268 = vdwg.mxu0
    %v2270 = vlaneseq
    %v2271 = vshrl.u32 %v2270, 7
    %v2272 = vsub.s32 0, %v2271
    %v2273 = vrot.slane %v837, %v2272
    %v2274 = vlaneseq
    %v2275 = vshrl.u32 %v2274, 7
    %v2276 = vsub.s32 1, %v2275
    %v2277 = vrot.slane %v837, %v2276
    %v2280 = vadd.f32 %v1791, %v2273
    %v2281 = vadd.f32 %v1793, %v2277
    %v2282 = vadd.f32 %v1795, %v2273
    %v2283 = vadd.f32 %v1797, %v2277
    %v2284 = vadd.f32 %v1801, %v2273
    %v2285 = vadd.f32 %v1803, %v2277
    %v2286 = vadd.f32 %v1805, %v2273
    %v2287 = vadd.f32 %v1807, %v2277
    %v2288 = vadd.f32 %v1811, %v2273
    %v2289 = vadd.f32 %v1813, %v2277
    %v2290 = vadd.f32 %v1815, %v2273
    %v2291 = vadd.f32 %v1817, %v2277
    %v2292 = vadd.f32 %v1821, %v2273
    %v2293 = vadd.f32 %v1823, %v2277
    %v2294 = vadd.f32 %v1825, %v2273
    %v2295 = vadd.f32 %v1827, %v2277
    %v2296 = vadd.f32 %v1831, %v2273
    %v2297 = vadd.f32 %v1833, %v2277
    %v2298 = vadd.f32 %v1835, %v2273
    %v2299 = vadd.f32 %v1837, %v2277
    %v2300 = vadd.f32 %v1841, %v2273
    %v2301 = vadd.f32 %v1843, %v2277
    %v2302 = vadd.f32 %v1845, %v2273
    %v2303 = vadd.f32 %v1847, %v2277
    %v2304 = vadd.f32 %v1851, %v2273
    %v2305 = vadd.f32 %v1853, %v2277
    %v2306 = vadd.f32 %v1855, %v2273
    %v2307 = vadd.f32 %v1857, %v2277
    %v2308 = vadd.f32 %v1861, %v2273
    %v2309 = vadd.f32 %v1863, %v2277
    %v2310 = vadd.f32 %v1865, %v2273
    %v2311 = vadd.f32 %v1867, %v2277
    %v2312 = vtanh.pop %v2280
    %v2313 = vtanh.pop %v2281
    %v2314 = vtanh.pop %v2282
    %v2315 = vtanh.pop %v2283
    %v2316 = vtanh.pop %v2284
    %v2317 = vtanh.pop %v2285
    %v2318 = vtanh.pop %v2286
    %v2319 = vtanh.pop %v2287
    %v2320 = vtanh.pop %v2288
    %v2321 = vtanh.pop %v2289
    %v2322 = vtanh.pop %v2290
    %v2323 = vtanh.pop %v2291
    %v2324 = vtanh.pop %v2292
    %v2325 = vtanh.pop %v2293
    %v2326 = vtanh.pop %v2294
    %v2327 = vtanh.pop %v2295
    %v2328 = vtanh.pop %v2296
    %v2329 = vtanh.pop %v2297
    %v2330 = vtanh.pop %v2298
    %v2331 = vtanh.pop %v2299
    %v2332 = vtanh.pop %v2300
    %v2333 = vtanh.pop %v2301
    %v2334 = vtanh.pop %v2302
    %v2335 = vtanh.pop %v2303
    %v2336 = vtanh.pop %v2304
    %v2337 = vtanh.pop %v2305
    %v2338 = vtanh.pop %v2306
    %v2339 = vtanh.pop %v2307
    %v2340 = vtanh.pop %v2308
    %v2341 = vtanh.pop %v2309
    %v2342 = vtanh.pop %v2310
    %v2343 = vtanh.pop %v2311
    %v2344 = vmul.f32 %v2312, %v2312
    %v2345 = vmul.f32 %v2313, %v2313
    %v2346 = vmul.f32 %v2314, %v2314
    %v2347 = vmul.f32 %v2315, %v2315
    %v2348 = vmul.f32 %v2316, %v2316
    %v2349 = vmul.f32 %v2317, %v2317
    %v2350 = vmul.f32 %v2318, %v2318
    %v2351 = vmul.f32 %v2319, %v2319
    %v2352 = vmul.f32 %v2320, %v2320
    %v2353 = vmul.f32 %v2321, %v2321
    %v2354 = vmul.f32 %v2322, %v2322
    %v2355 = vmul.f32 %v2323, %v2323
    %v2356 = vmul.f32 %v2324, %v2324
    %v2357 = vmul.f32 %v2325, %v2325
    %v2358 = vmul.f32 %v2326, %v2326
    %v2359 = vmul.f32 %v2327, %v2327
    %v2360 = vmul.f32 %v2328, %v2328
    %v2361 = vmul.f32 %v2329, %v2329
    %v2362 = vmul.f32 %v2330, %v2330
    %v2363 = vmul.f32 %v2331, %v2331
    %v2364 = vmul.f32 %v2332, %v2332
    %v2365 = vmul.f32 %v2333, %v2333
    %v2366 = vmul.f32 %v2334, %v2334
    %v2367 = vmul.f32 %v2335, %v2335
    %v2368 = vmul.f32 %v2336, %v2336
    %v2369 = vmul.f32 %v2337, %v2337
    %v2370 = vmul.f32 %v2338, %v2338
    %v2371 = vmul.f32 %v2339, %v2339
    %v2372 = vmul.f32 %v2340, %v2340
    %v2373 = vmul.f32 %v2341, %v2341
    %v2374 = vmul.f32 %v2342, %v2342
    %v2375 = vmul.f32 %v2343, %v2343
    %v2376 = vsub.f32 1.0, %v2344
    %v2377 = vsub.f32 1.0, %v2345
    %v2378 = vsub.f32 1.0, %v2346
    %v2379 = vsub.f32 1.0, %v2347
    %v2380 = vsub.f32 1.0, %v2348
    %v2381 = vsub.f32 1.0, %v2349
    %v2382 = vsub.f32 1.0, %v2350
    %v2383 = vsub.f32 1.0, %v2351
    %v2384 = vsub.f32 1.0, %v2352
    %v2385 = vsub.f32 1.0, %v2353
    %v2386 = vsub.f32 1.0, %v2354
    %v2387 = vsub.f32 1.0, %v2355
    %v2388 = vsub.f32 1.0, %v2356
    %v2389 = vsub.f32 1.0, %v2357
    %v2390 = vsub.f32 1.0, %v2358
    %v2391 = vsub.f32 1.0, %v2359
    %v2392 = vsub.f32 1.0, %v2360
    %v2393 = vsub.f32 1.0, %v2361
    %v2394 = vsub.f32 1.0, %v2362
    %v2395 = vsub.f32 1.0, %v2363
    %v2396 = vsub.f32 1.0, %v2364
    %v2397 = vsub.f32 1.0, %v2365
    %v2398 = vsub.f32 1.0, %v2366
    %v2399 = vsub.f32 1.0, %v2367
    %v2400 = vsub.f32 1.0, %v2368
    %v2401 = vsub.f32 1.0, %v2369
    %v2402 = vsub.f32 1.0, %v2370
    %v2403 = vsub.f32 1.0, %v2371
    %v2404 = vsub.f32 1.0, %v2372
    %v2405 = vsub.f32 1.0, %v2373
    %v2406 = vsub.f32 1.0, %v2374
    %v2407 = vsub.f32 1.0, %v2375
    %v2408 = vmul.f32 %v2312, -2.0
    %v2409 = vmul.f32 %v2313, -2.0
    %v2410 = vmul.f32 %v2314, -2.0
    %v2411 = vmul.f32 %v2315, -2.0
    %v2412 = vmul.f32 %v2316, -2.0
    %v2413 = vmul.f32 %v2317, -2.0
    %v2414 = vmul.f32 %v2318, -2.0
    %v2415 = vmul.f32 %v2319, -2.0
    %v2416 = vmul.f32 %v2320, -2.0
    %v2417 = vmul.f32 %v2321, -2.0
    %v2418 = vmul.f32 %v2322, -2.0
    %v2419 = vmul.f32 %v2323, -2.0
    %v2420 = vmul.f32 %v2324, -2.0
    %v2421 = vmul.f32 %v2325, -2.0
    %v2422 = vmul.f32 %v2326, -2.0
    %v2423 = vmul.f32 %v2327, -2.0
    %v2424 = vmul.f32 %v2328, -2.0
    %v2425 = vmul.f32 %v2329, -2.0
    %v2426 = vmul.f32 %v2330, -2.0
    %v2427 = vmul.f32 %v2331, -2.0
    %v2428 = vmul.f32 %v2332, -2.0
    %v2429 = vmul.f32 %v2333, -2.0
    %v2430 = vmul.f32 %v2334, -2.0
    %v2431 = vmul.f32 %v2335, -2.0
    %v2432 = vmul.f32 %v2336, -2.0
    %v2433 = vmul.f32 %v2337, -2.0
    %v2434 = vmul.f32 %v2338, -2.0
    %v2435 = vmul.f32 %v2339, -2.0
    %v2436 = vmul.f32 %v2340, -2.0
    %v2437 = vmul.f32 %v2341, -2.0
    %v2438 = vmul.f32 %v2342, -2.0
    %v2439 = vmul.f32 %v2343, -2.0
    %v2440 = vmul.f32 %v2408, %v2376
    %v2441 = vmul.f32 %v2409, %v2377
    %v2442 = vmul.f32 %v2410, %v2378
    %v2443 = vmul.f32 %v2411, %v2379
    %v2444 = vmul.f32 %v2412, %v2380
    %v2445 = vmul.f32 %v2413, %v2381
    %v2446 = vmul.f32 %v2414, %v2382
    %v2447 = vmul.f32 %v2415, %v2383
    %v2448 = vmul.f32 %v2416, %v2384
    %v2449 = vmul.f32 %v2417, %v2385
    %v2450 = vmul.f32 %v2418, %v2386
    %v2451 = vmul.f32 %v2419, %v2387
    %v2452 = vmul.f32 %v2420, %v2388
    %v2453 = vmul.f32 %v2421, %v2389
    %v2454 = vmul.f32 %v2422, %v2390
    %v2455 = vmul.f32 %v2423, %v2391
    %v2456 = vmul.f32 %v2424, %v2392
    %v2457 = vmul.f32 %v2425, %v2393
    %v2458 = vmul.f32 %v2426, %v2394
    %v2459 = vmul.f32 %v2427, %v2395
    %v2460 = vmul.f32 %v2428, %v2396
    %v2461 = vmul.f32 %v2429, %v2397
    %v2462 = vmul.f32 %v2430, %v2398
    %v2463 = vmul.f32 %v2431, %v2399
    %v2464 = vmul.f32 %v2432, %v2400
    %v2465 = vmul.f32 %v2433, %v2401
    %v2466 = vmul.f32 %v2434, %v2402
    %v2467 = vmul.f32 %v2435, %v2403
    %v2468 = vmul.f32 %v2436, %v2404
    %v2469 = vmul.f32 %v2437, %v2405
    %v2470 = vmul.f32 %v2438, %v2406
    %v2471 = vmul.f32 %v2439, %v2407
    %v2472 = vmul.f32 %v2376, %v1871
    %v2473 = vmul.f32 %v2377, %v1873
    %v2474 = vmul.f32 %v2378, %v1875
    %v2475 = vmul.f32 %v2379, %v1877
    %v2476 = vmul.f32 %v2380, %v1881
    %v2477 = vmul.f32 %v2381, %v1883
    %v2478 = vmul.f32 %v2382, %v1885
    %v2479 = vmul.f32 %v2383, %v1887
    %v2480 = vmul.f32 %v2384, %v1891
    %v2481 = vmul.f32 %v2385, %v1893
    %v2482 = vmul.f32 %v2386, %v1895
    %v2483 = vmul.f32 %v2387, %v1897
    %v2484 = vmul.f32 %v2388, %v1901
    %v2485 = vmul.f32 %v2389, %v1903
    %v2486 = vmul.f32 %v2390, %v1905
    %v2487 = vmul.f32 %v2391, %v1907
    %v2488 = vmul.f32 %v2392, %v1911
    %v2489 = vmul.f32 %v2393, %v1913
    %v2490 = vmul.f32 %v2394, %v1915
    %v2491 = vmul.f32 %v2395, %v1917
    %v2492 = vmul.f32 %v2396, %v1921
    %v2493 = vmul.f32 %v2397, %v1923
    %v2494 = vmul.f32 %v2398, %v1925
    %v2495 = vmul.f32 %v2399, %v1927
    %v2496 = vmul.f32 %v2400, %v1931
    %v2497 = vmul.f32 %v2401, %v1933
    %v2498 = vmul.f32 %v2402, %v1935
    %v2499 = vmul.f32 %v2403, %v1937
    %v2500 = vmul.f32 %v2404, %v1941
    %v2501 = vmul.f32 %v2405, %v1943
    %v2502 = vmul.f32 %v2406, %v1945
    %v2503 = vmul.f32 %v2407, %v1947
    %v2504 = vmul.f32 %v2376, %v1951
    %v2505 = vmul.f32 %v2377, %v1953
    %v2506 = vmul.f32 %v2378, %v1955
    %v2507 = vmul.f32 %v2379, %v1957
    %v2508 = vmul.f32 %v2380, %v1961
    %v2509 = vmul.f32 %v2381, %v1963
    %v2510 = vmul.f32 %v2382, %v1965
    %v2511 = vmul.f32 %v2383, %v1967
    %v2512 = vmul.f32 %v2384, %v1971
    %v2513 = vmul.f32 %v2385, %v1973
    %v2514 = vmul.f32 %v2386, %v1975
    %v2515 = vmul.f32 %v2387, %v1977
    %v2516 = vmul.f32 %v2388, %v1981
    %v2517 = vmul.f32 %v2389, %v1983
    %v2518 = vmul.f32 %v2390, %v1985
    %v2519 = vmul.f32 %v2391, %v1987
    %v2520 = vmul.f32 %v2392, %v1991
    %v2521 = vmul.f32 %v2393, %v1993
    %v2522 = vmul.f32 %v2394, %v1995
    %v2523 = vmul.f32 %v2395, %v1997
    %v2524 = vmul.f32 %v2396, %v2001
    %v2525 = vmul.f32 %v2397, %v2003
    %v2526 = vmul.f32 %v2398, %v2005
    %v2527 = vmul.f32 %v2399, %v2007
    %v2528 = vmul.f32 %v2400, %v2011
    %v2529 = vmul.f32 %v2401, %v2013
    %v2530 = vmul.f32 %v2402, %v2015
    %v2531 = vmul.f32 %v2403, %v2017
    %v2532 = vmul.f32 %v2404, %v2021
    %v2533 = vmul.f32 %v2405, %v2023
    %v2534 = vmul.f32 %v2406, %v2025
    %v2535 = vmul.f32 %v2407, %v2027
    %v2536 = vmul.f32 %v2376, %v2031
    %v2537 = vmul.f32 %v2377, %v2033
    %v2538 = vmul.f32 %v2378, %v2035
    %v2539 = vmul.f32 %v2379, %v2037
    %v2540 = vmul.f32 %v2380, %v2041
    %v2541 = vmul.f32 %v2381, %v2043
    %v2542 = vmul.f32 %v2382, %v2045
    %v2543 = vmul.f32 %v2383, %v2047
    %v2544 = vmul.f32 %v2384, %v2051
    %v2545 = vmul.f32 %v2385, %v2053
    %v2546 = vmul.f32 %v2386, %v2055
    %v2547 = vmul.f32 %v2387, %v2057
    %v2548 = vmul.f32 %v2388, %v2061
    %v2549 = vmul.f32 %v2389, %v2063
    %v2550 = vmul.f32 %v2390, %v2065
    %v2551 = vmul.f32 %v2391, %v2067
    %v2552 = vmul.f32 %v2392, %v2071
    %v2553 = vmul.f32 %v2393, %v2073
    %v2554 = vmul.f32 %v2394, %v2075
    %v2555 = vmul.f32 %v2395, %v2077
    %v2556 = vmul.f32 %v2396, %v2081
    %v2557 = vmul.f32 %v2397, %v2083
    %v2558 = vmul.f32 %v2398, %v2085
    %v2559 = vmul.f32 %v2399, %v2087
    %v2560 = vmul.f32 %v2400, %v2091
    %v2561 = vmul.f32 %v2401, %v2093
    %v2562 = vmul.f32 %v2402, %v2095
    %v2563 = vmul.f32 %v2403, %v2097
    %v2564 = vmul.f32 %v2404, %v2101
    %v2565 = vmul.f32 %v2405, %v2103
    %v2566 = vmul.f32 %v2406, %v2105
    %v2567 = vmul.f32 %v2407, %v2107
    %v2568 = vmul.f32 %v2440, %v1871
    %v2569 = vmul.f32 %v2441, %v1873
    %v2570 = vmul.f32 %v2442, %v1875
    %v2571 = vmul.f32 %v2443, %v1877
    %v2572 = vmul.f32 %v2444, %v1881
    %v2573 = vmul.f32 %v2445, %v1883
    %v2574 = vmul.f32 %v2446, %v1885
    %v2575 = vmul.f32 %v2447, %v1887
    %v2576 = vmul.f32 %v2448, %v1891
    %v2577 = vmul.f32 %v2449, %v1893
    %v2578 = vmul.f32 %v2450, %v1895
    %v2579 = vmul.f32 %v2451, %v1897
    %v2580 = vmul.f32 %v2452, %v1901
    %v2581 = vmul.f32 %v2453, %v1903
    %v2582 = vmul.f32 %v2454, %v1905
    %v2583 = vmul.f32 %v2455, %v1907
    %v2584 = vmul.f32 %v2456, %v1911
    %v2585 = vmul.f32 %v2457, %v1913
    %v2586 = vmul.f32 %v2458, %v1915
    %v2587 = vmul.f32 %v2459, %v1917
    %v2588 = vmul.f32 %v2460, %v1921
    %v2589 = vmul.f32 %v2461, %v1923
    %v2590 = vmul.f32 %v2462, %v1925
    %v2591 = vmul.f32 %v2463, %v1927
    %v2592 = vmul.f32 %v2464, %v1931
    %v2593 = vmul.f32 %v2465, %v1933
    %v2594 = vmul.f32 %v2466, %v1935
    %v2595 = vmul.f32 %v2467, %v1937
    %v2596 = vmul.f32 %v2468, %v1941
    %v2597 = vmul.f32 %v2469, %v1943
    %v2598 = vmul.f32 %v2470, %v1945
    %v2599 = vmul.f32 %v2471, %v1947
    %v2600 = vmul.f32 %v2568, %v1871
    %v2601 = vmul.f32 %v2569, %v1873
    %v2602 = vmul.f32 %v2570, %v1875
    %v2603 = vmul.f32 %v2571, %v1877
    %v2604 = vmul.f32 %v2572, %v1881
    %v2605 = vmul.f32 %v2573, %v1883
    %v2606 = vmul.f32 %v2574, %v1885
    %v2607 = vmul.f32 %v2575, %v1887
    %v2608 = vmul.f32 %v2576, %v1891
    %v2609 = vmul.f32 %v2577, %v1893
    %v2610 = vmul.f32 %v2578, %v1895
    %v2611 = vmul.f32 %v2579, %v1897
    %v2612 = vmul.f32 %v2580, %v1901
    %v2613 = vmul.f32 %v2581, %v1903
    %v2614 = vmul.f32 %v2582, %v1905
    %v2615 = vmul.f32 %v2583, %v1907
    %v2616 = vmul.f32 %v2584, %v1911
    %v2617 = vmul.f32 %v2585, %v1913
    %v2618 = vmul.f32 %v2586, %v1915
    %v2619 = vmul.f32 %v2587, %v1917
    %v2620 = vmul.f32 %v2588, %v1921
    %v2621 = vmul.f32 %v2589, %v1923
    %v2622 = vmul.f32 %v2590, %v1925
    %v2623 = vmul.f32 %v2591, %v1927
    %v2624 = vmul.f32 %v2592, %v1931
    %v2625 = vmul.f32 %v2593, %v1933
    %v2626 = vmul.f32 %v2594, %v1935
    %v2627 = vmul.f32 %v2595, %v1937
    %v2628 = vmul.f32 %v2596, %v1941
    %v2629 = vmul.f32 %v2597, %v1943
    %v2630 = vmul.f32 %v2598, %v1945
    %v2631 = vmul.f32 %v2599, %v1947
    %v2632 = vadd.f32 %v2536, %v2600
    %v2633 = vadd.f32 %v2537, %v2601
    %v2634 = vadd.f32 %v2538, %v2602
    %v2635 = vadd.f32 %v2539, %v2603
    %v2636 = vadd.f32 %v2540, %v2604
    %v2637 = vadd.f32 %v2541, %v2605
    %v2638 = vadd.f32 %v2542, %v2606
    %v2639 = vadd.f32 %v2543, %v2607
    %v2640 = vadd.f32 %v2544, %v2608
    %v2641 = vadd.f32 %v2545, %v2609
    %v2642 = vadd.f32 %v2546, %v2610
    %v2643 = vadd.f32 %v2547, %v2611
    %v2644 = vadd.f32 %v2548, %v2612
    %v2645 = vadd.f32 %v2549, %v2613
    %v2646 = vadd.f32 %v2550, %v2614
    %v2647 = vadd.f32 %v2551, %v2615
    %v2648 = vadd.f32 %v2552, %v2616
    %v2649 = vadd.f32 %v2553, %v2617
    %v2650 = vadd.f32 %v2554, %v2618
    %v2651 = vadd.f32 %v2555, %v2619
    %v2652 = vadd.f32 %v2556, %v2620
    %v2653 = vadd.f32 %v2557, %v2621
    %v2654 = vadd.f32 %v2558, %v2622
    %v2655 = vadd.f32 %v2559, %v2623
    %v2656 = vadd.f32 %v2560, %v2624
    %v2657 = vadd.f32 %v2561, %v2625
    %v2658 = vadd.f32 %v2562, %v2626
    %v2659 = vadd.f32 %v2563, %v2627
    %v2660 = vadd.f32 %v2564, %v2628
    %v2661 = vadd.f32 %v2565, %v2629
    %v2662 = vadd.f32 %v2566, %v2630
    %v2663 = vadd.f32 %v2567, %v2631
    %v2664 = vmul.f32 %v2376, %v2111
    %v2665 = vmul.f32 %v2377, %v2113
    %v2666 = vmul.f32 %v2378, %v2115
    %v2667 = vmul.f32 %v2379, %v2117
    %v2668 = vmul.f32 %v2380, %v2121
    %v2669 = vmul.f32 %v2381, %v2123
    %v2670 = vmul.f32 %v2382, %v2125
    %v2671 = vmul.f32 %v2383, %v2127
    %v2672 = vmul.f32 %v2384, %v2131
    %v2673 = vmul.f32 %v2385, %v2133
    %v2674 = vmul.f32 %v2386, %v2135
    %v2675 = vmul.f32 %v2387, %v2137
    %v2676 = vmul.f32 %v2388, %v2141
    %v2677 = vmul.f32 %v2389, %v2143
    %v2678 = vmul.f32 %v2390, %v2145
    %v2679 = vmul.f32 %v2391, %v2147
    %v2680 = vmul.f32 %v2392, %v2151
    %v2681 = vmul.f32 %v2393, %v2153
    %v2682 = vmul.f32 %v2394, %v2155
    %v2683 = vmul.f32 %v2395, %v2157
    %v2684 = vmul.f32 %v2396, %v2161
    %v2685 = vmul.f32 %v2397, %v2163
    %v2686 = vmul.f32 %v2398, %v2165
    %v2687 = vmul.f32 %v2399, %v2167
    %v2688 = vmul.f32 %v2400, %v2171
    %v2689 = vmul.f32 %v2401, %v2173
    %v2690 = vmul.f32 %v2402, %v2175
    %v2691 = vmul.f32 %v2403, %v2177
    %v2692 = vmul.f32 %v2404, %v2181
    %v2693 = vmul.f32 %v2405, %v2183
    %v2694 = vmul.f32 %v2406, %v2185
    %v2695 = vmul.f32 %v2407, %v2187
    %v2696 = vmul.f32 %v2568, %v1951
    %v2697 = vmul.f32 %v2569, %v1953
    %v2698 = vmul.f32 %v2570, %v1955
    %v2699 = vmul.f32 %v2571, %v1957
    %v2700 = vmul.f32 %v2572, %v1961
    %v2701 = vmul.f32 %v2573, %v1963
    %v2702 = vmul.f32 %v2574, %v1965
    %v2703 = vmul.f32 %v2575, %v1967
    %v2704 = vmul.f32 %v2576, %v1971
    %v2705 = vmul.f32 %v2577, %v1973
    %v2706 = vmul.f32 %v2578, %v1975
    %v2707 = vmul.f32 %v2579, %v1977
    %v2708 = vmul.f32 %v2580, %v1981
    %v2709 = vmul.f32 %v2581, %v1983
    %v2710 = vmul.f32 %v2582, %v1985
    %v2711 = vmul.f32 %v2583, %v1987
    %v2712 = vmul.f32 %v2584, %v1991
    %v2713 = vmul.f32 %v2585, %v1993
    %v2714 = vmul.f32 %v2586, %v1995
    %v2715 = vmul.f32 %v2587, %v1997
    %v2716 = vmul.f32 %v2588, %v2001
    %v2717 = vmul.f32 %v2589, %v2003
    %v2718 = vmul.f32 %v2590, %v2005
    %v2719 = vmul.f32 %v2591, %v2007
    %v2720 = vmul.f32 %v2592, %v2011
    %v2721 = vmul.f32 %v2593, %v2013
    %v2722 = vmul.f32 %v2594, %v2015
    %v2723 = vmul.f32 %v2595, %v2017
    %v2724 = vmul.f32 %v2596, %v2021
    %v2725 = vmul.f32 %v2597, %v2023
    %v2726 = vmul.f32 %v2598, %v2025
    %v2727 = vmul.f32 %v2599, %v2027
    %v2728 = vadd.f32 %v2664, %v2696
    %v2729 = vadd.f32 %v2665, %v2697
    %v2730 = vadd.f32 %v2666, %v2698
    %v2731 = vadd.f32 %v2667, %v2699
    %v2732 = vadd.f32 %v2668, %v2700
    %v2733 = vadd.f32 %v2669, %v2701
    %v2734 = vadd.f32 %v2670, %v2702
    %v2735 = vadd.f32 %v2671, %v2703
    %v2736 = vadd.f32 %v2672, %v2704
    %v2737 = vadd.f32 %v2673, %v2705
    %v2738 = vadd.f32 %v2674, %v2706
    %v2739 = vadd.f32 %v2675, %v2707
    %v2740 = vadd.f32 %v2676, %v2708
    %v2741 = vadd.f32 %v2677, %v2709
    %v2742 = vadd.f32 %v2678, %v2710
    %v2743 = vadd.f32 %v2679, %v2711
    %v2744 = vadd.f32 %v2680, %v2712
    %v2745 = vadd.f32 %v2681, %v2713
    %v2746 = vadd.f32 %v2682, %v2714
    %v2747 = vadd.f32 %v2683, %v2715
    %v2748 = vadd.f32 %v2684, %v2716
    %v2749 = vadd.f32 %v2685, %v2717
    %v2750 = vadd.f32 %v2686, %v2718
    %v2751 = vadd.f32 %v2687, %v2719
    %v2752 = vadd.f32 %v2688, %v2720
    %v2753 = vadd.f32 %v2689, %v2721
    %v2754 = vadd.f32 %v2690, %v2722
    %v2755 = vadd.f32 %v2691, %v2723
    %v2756 = vadd.f32 %v2692, %v2724
    %v2757 = vadd.f32 %v2693, %v2725
    %v2758 = vadd.f32 %v2694, %v2726
    %v2759 = vadd.f32 %v2695, %v2727
    %v2760 = vmul.f32 %v2376, %v2191
    %v2761 = vmul.f32 %v2377, %v2193
    %v2762 = vmul.f32 %v2378, %v2195
    %v2763 = vmul.f32 %v2379, %v2197
    %v2764 = vmul.f32 %v2380, %v2201
    %v2765 = vmul.f32 %v2381, %v2203
    %v2766 = vmul.f32 %v2382, %v2205
    %v2767 = vmul.f32 %v2383, %v2207
    %v2768 = vmul.f32 %v2384, %v2211
    %v2769 = vmul.f32 %v2385, %v2213
    %v2770 = vmul.f32 %v2386, %v2215
    %v2771 = vmul.f32 %v2387, %v2217
    %v2772 = vmul.f32 %v2388, %v2221
    %v2773 = vmul.f32 %v2389, %v2223
    %v2774 = vmul.f32 %v2390, %v2225
    %v2775 = vmul.f32 %v2391, %v2227
    %v2776 = vmul.f32 %v2392, %v2231
    %v2777 = vmul.f32 %v2393, %v2233
    %v2778 = vmul.f32 %v2394, %v2235
    %v2779 = vmul.f32 %v2395, %v2237
    %v2780 = vmul.f32 %v2396, %v2241
    %v2781 = vmul.f32 %v2397, %v2243
    %v2782 = vmul.f32 %v2398, %v2245
    %v2783 = vmul.f32 %v2399, %v2247
    %v2784 = vmul.f32 %v2400, %v2251
    %v2785 = vmul.f32 %v2401, %v2253
    %v2786 = vmul.f32 %v2402, %v2255
    %v2787 = vmul.f32 %v2403, %v2257
    %v2788 = vmul.f32 %v2404, %v2261
    %v2789 = vmul.f32 %v2405, %v2263
    %v2790 = vmul.f32 %v2406, %v2265
    %v2791 = vmul.f32 %v2407, %v2267
    %v2792 = vmul.f32 %v2440, %v1951
    %v2793 = vmul.f32 %v2441, %v1953
    %v2794 = vmul.f32 %v2442, %v1955
    %v2795 = vmul.f32 %v2443, %v1957
    %v2796 = vmul.f32 %v2444, %v1961
    %v2797 = vmul.f32 %v2445, %v1963
    %v2798 = vmul.f32 %v2446, %v1965
    %v2799 = vmul.f32 %v2447, %v1967
    %v2800 = vmul.f32 %v2448, %v1971
    %v2801 = vmul.f32 %v2449, %v1973
    %v2802 = vmul.f32 %v2450, %v1975
    %v2803 = vmul.f32 %v2451, %v1977
    %v2804 = vmul.f32 %v2452, %v1981
    %v2805 = vmul.f32 %v2453, %v1983
    %v2806 = vmul.f32 %v2454, %v1985
    %v2807 = vmul.f32 %v2455, %v1987
    %v2808 = vmul.f32 %v2456, %v1991
    %v2809 = vmul.f32 %v2457, %v1993
    %v2810 = vmul.f32 %v2458, %v1995
    %v2811 = vmul.f32 %v2459, %v1997
    %v2812 = vmul.f32 %v2460, %v2001
    %v2813 = vmul.f32 %v2461, %v2003
    %v2814 = vmul.f32 %v2462, %v2005
    %v2815 = vmul.f32 %v2463, %v2007
    %v2816 = vmul.f32 %v2464, %v2011
    %v2817 = vmul.f32 %v2465, %v2013
    %v2818 = vmul.f32 %v2466, %v2015
    %v2819 = vmul.f32 %v2467, %v2017
    %v2820 = vmul.f32 %v2468, %v2021
    %v2821 = vmul.f32 %v2469, %v2023
    %v2822 = vmul.f32 %v2470, %v2025
    %v2823 = vmul.f32 %v2471, %v2027
    %v2824 = vmul.f32 %v2792, %v1951
    %v2825 = vmul.f32 %v2793, %v1953
    %v2826 = vmul.f32 %v2794, %v1955
    %v2827 = vmul.f32 %v2795, %v1957
    %v2828 = vmul.f32 %v2796, %v1961
    %v2829 = vmul.f32 %v2797, %v1963
    %v2830 = vmul.f32 %v2798, %v1965
    %v2831 = vmul.f32 %v2799, %v1967
    %v2832 = vmul.f32 %v2800, %v1971
    %v2833 = vmul.f32 %v2801, %v1973
    %v2834 = vmul.f32 %v2802, %v1975
    %v2835 = vmul.f32 %v2803, %v1977
    %v2836 = vmul.f32 %v2804, %v1981
    %v2837 = vmul.f32 %v2805, %v1983
    %v2838 = vmul.f32 %v2806, %v1985
    %v2839 = vmul.f32 %v2807, %v1987
    %v2840 = vmul.f32 %v2808, %v1991
    %v2841 = vmul.f32 %v2809, %v1993
    %v2842 = vmul.f32 %v2810, %v1995
    %v2843 = vmul.f32 %v2811, %v1997
    %v2844 = vmul.f32 %v2812, %v2001
    %v2845 = vmul.f32 %v2813, %v2003
    %v2846 = vmul.f32 %v2814, %v2005
    %v2847 = vmul.f32 %v2815, %v2007
    %v2848 = vmul.f32 %v2816, %v2011
    %v2849 = vmul.f32 %v2817, %v2013
    %v2850 = vmul.f32 %v2818, %v2015
    %v2851 = vmul.f32 %v2819, %v2017
    %v2852 = vmul.f32 %v2820, %v2021
    %v2853 = vmul.f32 %v2821, %v2023
    %v2854 = vmul.f32 %v2822, %v2025
    %v2855 = vmul.f32 %v2823, %v2027
    %v2856 = vadd.f32 %v2760, %v2824
    %v2857 = vadd.f32 %v2761, %v2825
    %v2858 = vadd.f32 %v2762, %v2826
    %v2859 = vadd.f32 %v2763, %v2827
    %v2860 = vadd.f32 %v2764, %v2828
    %v2861 = vadd.f32 %v2765, %v2829
    %v2862 = vadd.f32 %v2766, %v2830
    %v2863 = vadd.f32 %v2767, %v2831
    %v2864 = vadd.f32 %v2768, %v2832
    %v2865 = vadd.f32 %v2769, %v2833
    %v2866 = vadd.f32 %v2770, %v2834
    %v2867 = vadd.f32 %v2771, %v2835
    %v2868 = vadd.f32 %v2772, %v2836
    %v2869 = vadd.f32 %v2773, %v2837
    %v2870 = vadd.f32 %v2774, %v2838
    %v2871 = vadd.f32 %v2775, %v2839
    %v2872 = vadd.f32 %v2776, %v2840
    %v2873 = vadd.f32 %v2777, %v2841
    %v2874 = vadd.f32 %v2778, %v2842
    %v2875 = vadd.f32 %v2779, %v2843
    %v2876 = vadd.f32 %v2780, %v2844
    %v2877 = vadd.f32 %v2781, %v2845
    %v2878 = vadd.f32 %v2782, %v2846
    %v2879 = vadd.f32 %v2783, %v2847
    %v2880 = vadd.f32 %v2784, %v2848
    %v2881 = vadd.f32 %v2785, %v2849
    %v2882 = vadd.f32 %v2786, %v2850
    %v2883 = vadd.f32 %v2787, %v2851
    %v2884 = vadd.f32 %v2788, %v2852
    %v2885 = vadd.f32 %v2789, %v2853
    %v2886 = vadd.f32 %v2790, %v2854
    %v2887 = vadd.f32 %v2791, %v2855
    %v2888 = vpack.c.bf16 %v2314, %v2312
    %v2889 = vpack.c.bf16 %v2315, %v2313
    %v2890 = vpack.c.bf16 %v2318, %v2316
    %v2891 = vpack.c.bf16 %v2319, %v2317
    %v2892 = vpack.c.bf16 %v2322, %v2320
    %v2893 = vpack.c.bf16 %v2323, %v2321
    %v2894 = vpack.c.bf16 %v2326, %v2324
    %v2895 = vpack.c.bf16 %v2327, %v2325
    %v2896 = vpack.c.bf16 %v2330, %v2328
    %v2897 = vpack.c.bf16 %v2331, %v2329
    %v2898 = vpack.c.bf16 %v2334, %v2332
    %v2899 = vpack.c.bf16 %v2335, %v2333
    %v2900 = vpack.c.bf16 %v2338, %v2336
    %v2901 = vpack.c.bf16 %v2339, %v2337
    %v2902 = vpack.c.bf16 %v2342, %v2340
    %v2903 = vpack.c.bf16 %v2343, %v2341
    %v2904 = vpack.c.bf16 %v2474, %v2472
    %v2905 = vpack.c.bf16 %v2475, %v2473
    %v2906 = vpack.c.bf16 %v2478, %v2476
    %v2907 = vpack.c.bf16 %v2479, %v2477
    %v2908 = vpack.c.bf16 %v2482, %v2480
    %v2909 = vpack.c.bf16 %v2483, %v2481
    %v2910 = vpack.c.bf16 %v2486, %v2484
    %v2911 = vpack.c.bf16 %v2487, %v2485
    %v2912 = vpack.c.bf16 %v2490, %v2488
    %v2913 = vpack.c.bf16 %v2491, %v2489
    %v2914 = vpack.c.bf16 %v2494, %v2492
    %v2915 = vpack.c.bf16 %v2495, %v2493
    %v2916 = vpack.c.bf16 %v2498, %v2496
    %v2917 = vpack.c.bf16 %v2499, %v2497
    %v2918 = vpack.c.bf16 %v2502, %v2500
    %v2919 = vpack.c.bf16 %v2503, %v2501
    %v2920 = vpack.c.bf16 %v2506, %v2504
    %v2921 = vpack.c.bf16 %v2507, %v2505
    %v2922 = vpack.c.bf16 %v2510, %v2508
    %v2923 = vpack.c.bf16 %v2511, %v2509
    %v2924 = vpack.c.bf16 %v2514, %v2512
    %v2925 = vpack.c.bf16 %v2515, %v2513
    %v2926 = vpack.c.bf16 %v2518, %v2516
    %v2927 = vpack.c.bf16 %v2519, %v2517
    %v2928 = vpack.c.bf16 %v2522, %v2520
    %v2929 = vpack.c.bf16 %v2523, %v2521
    %v2930 = vpack.c.bf16 %v2526, %v2524
    %v2931 = vpack.c.bf16 %v2527, %v2525
    %v2932 = vpack.c.bf16 %v2530, %v2528
    %v2933 = vpack.c.bf16 %v2531, %v2529
    %v2934 = vpack.c.bf16 %v2534, %v2532
    %v2935 = vpack.c.bf16 %v2535, %v2533
    %v2936 = vpack.c.bf16 %v2634, %v2632
    %v2937 = vpack.c.bf16 %v2635, %v2633
    %v2938 = vpack.c.bf16 %v2638, %v2636
    %v2939 = vpack.c.bf16 %v2639, %v2637
    %v2940 = vpack.c.bf16 %v2642, %v2640
    %v2941 = vpack.c.bf16 %v2643, %v2641
    %v2942 = vpack.c.bf16 %v2646, %v2644
    %v2943 = vpack.c.bf16 %v2647, %v2645
    %v2944 = vpack.c.bf16 %v2650, %v2648
    %v2945 = vpack.c.bf16 %v2651, %v2649
    %v2946 = vpack.c.bf16 %v2654, %v2652
    %v2947 = vpack.c.bf16 %v2655, %v2653
    %v2948 = vpack.c.bf16 %v2658, %v2656
    %v2949 = vpack.c.bf16 %v2659, %v2657
    %v2950 = vpack.c.bf16 %v2662, %v2660
    %v2951 = vpack.c.bf16 %v2663, %v2661
    %v2952 = vpack.c.bf16 %v2730, %v2728
    %v2953 = vpack.c.bf16 %v2731, %v2729
    %v2954 = vpack.c.bf16 %v2734, %v2732
    %v2955 = vpack.c.bf16 %v2735, %v2733
    %v2956 = vpack.c.bf16 %v2738, %v2736
    %v2957 = vpack.c.bf16 %v2739, %v2737
    %v2958 = vpack.c.bf16 %v2742, %v2740
    %v2959 = vpack.c.bf16 %v2743, %v2741
    %v2960 = vpack.c.bf16 %v2746, %v2744
    %v2961 = vpack.c.bf16 %v2747, %v2745
    %v2962 = vpack.c.bf16 %v2750, %v2748
    %v2963 = vpack.c.bf16 %v2751, %v2749
    %v2964 = vpack.c.bf16 %v2754, %v2752
    %v2965 = vpack.c.bf16 %v2755, %v2753
    %v2966 = vpack.c.bf16 %v2758, %v2756
    %v2967 = vpack.c.bf16 %v2759, %v2757
    %v2968 = vpack.c.bf16 %v2858, %v2856
    %v2969 = vpack.c.bf16 %v2859, %v2857
    %v2970 = vpack.c.bf16 %v2862, %v2860
    %v2971 = vpack.c.bf16 %v2863, %v2861
    %v2972 = vpack.c.bf16 %v2866, %v2864
    %v2973 = vpack.c.bf16 %v2867, %v2865
    %v2974 = vpack.c.bf16 %v2870, %v2868
    %v2975 = vpack.c.bf16 %v2871, %v2869
    %v2976 = vpack.c.bf16 %v2874, %v2872
    %v2977 = vpack.c.bf16 %v2875, %v2873
    %v2978 = vpack.c.bf16 %v2878, %v2876
    %v2979 = vpack.c.bf16 %v2879, %v2877
    %v2980 = vpack.c.bf16 %v2882, %v2880
    %v2981 = vpack.c.bf16 %v2883, %v2881
    %v2982 = vpack.c.bf16 %v2886, %v2884
    %v2983 = vpack.c.bf16 %v2887, %v2885
    %v2984 = vld [vmem:[%s10] sm:$0xf]
    %v2985 = vld [vmem:[%s10 + $0x4] sm:$0xf]
    %v2986 = vld [vmem:[%s10 + $0x8] sm:$0xf]
    %v2987 = vld [vmem:[%s10 + $0xc] sm:$0xf]
    %v2988 = vld [vmem:[%s10 + $0x10] sm:$0xf]
    %v2989 = vld [vmem:[%s10 + $0x14] sm:$0xf]
    %v2990 = vld [vmem:[%s10 + $0x18] sm:$0xf]
    %v2991 = vld [vmem:[%s10 + $0x1c] sm:$0xf]
    %v2992 = vld [vmem:[%s10 + $0x20] sm:$0xf]
    %v2993 = vld [vmem:[%s10 + $0x24] sm:$0xf]
    %v2994 = vld [vmem:[%s10 + $0x28] sm:$0xf]
    %v2995 = vld [vmem:[%s10 + $0x2c] sm:$0xf]
    %v2996 = vld [vmem:[%s10 + $0x30] sm:$0xf]
    %v2997 = vld [vmem:[%s10 + $0x34] sm:$0xf]
    %v2998 = vld [vmem:[%s10 + $0x38] sm:$0xf]
    %v2999 = vld [vmem:[%s10 + $0x3c] sm:$0xf]
    %v3000 = vld [vmem:[%s10 + $0x40] sm:$0xf]
    %v3001 = vld [vmem:[%s10 + $0x44] sm:$0xf]
    %v3002 = vld [vmem:[%s10 + $0x48] sm:$0xf]
    %v3003 = vld [vmem:[%s10 + $0x4c] sm:$0xf]
    %v3004 = vld [vmem:[%s10 + $0x50] sm:$0xf]
    %v3005 = vld [vmem:[%s10 + $0x54] sm:$0xf]
    %v3006 = vld [vmem:[%s10 + $0x58] sm:$0xf]
    %v3007 = vld [vmem:[%s10 + $0x5c] sm:$0xf]
    %v3008 = vld [vmem:[%s10 + $0x60] sm:$0xf]
    %v3009 = vld [vmem:[%s10 + $0x64] sm:$0xf]
    %v3010 = vld [vmem:[%s10 + $0x68] sm:$0xf]
    %v3011 = vld [vmem:[%s10 + $0x6c] sm:$0xf]
    %v3012 = vld [vmem:[%s10 + $0x70] sm:$0xf]
    %v3013 = vld [vmem:[%s10 + $0x74] sm:$0xf]
    %v3014 = vld [vmem:[%s10 + $0x78] sm:$0xf]
    %v3015 = vld [vmem:[%s10 + $0x7c] sm:$0xf]
    %v3048 = vunpack.c.l.b16 %v2984
    %v3049 = vunpack.c.l.b16 %v2985
    %v3050 = vunpack.c.l.b16 %v2986
    %v3051 = vunpack.c.l.b16 %v2987
    %v3052 = vunpack.c.l.b16 %v2988
    %v3053 = vunpack.c.l.b16 %v2989
    %v3054 = vunpack.c.l.b16 %v2990
    %v3055 = vunpack.c.l.b16 %v2991
    %v3056 = vunpack.c.l.b16 %v2992
    %v3057 = vunpack.c.l.b16 %v2993
    %v3058 = vunpack.c.l.b16 %v2994
    %v3059 = vunpack.c.l.b16 %v2995
    %v3060 = vunpack.c.l.b16 %v2996
    %v3061 = vunpack.c.l.b16 %v2997
    %v3062 = vunpack.c.l.b16 %v2998
    %v3063 = vunpack.c.l.b16 %v2999
    %v3064 = vunpack.c.l.b16 %v3000
    %v3065 = vunpack.c.l.b16 %v3001
    %v3066 = vunpack.c.l.b16 %v3002
    %v3067 = vunpack.c.l.b16 %v3003
    %v3068 = vunpack.c.l.b16 %v3004
    %v3069 = vunpack.c.l.b16 %v3005
    %v3070 = vunpack.c.l.b16 %v3006
    %v3071 = vunpack.c.l.b16 %v3007
    %v3072 = vunpack.c.l.b16 %v3008
    %v3073 = vunpack.c.l.b16 %v3009
    %v3074 = vunpack.c.l.b16 %v3010
    %v3075 = vunpack.c.l.b16 %v3011
    %v3076 = vunpack.c.l.b16 %v3012
    %v3077 = vunpack.c.l.b16 %v3013
    %v3078 = vunpack.c.l.b16 %v3014
    %v3079 = vunpack.c.l.b16 %v3015
    %v3080 = vpack.c.b16 %v3049, %v3048
    %v3081 = vpack.c.b16 %v3051, %v3050
    %v3082 = vpack.c.b16 %v3053, %v3052
    %v3083 = vpack.c.b16 %v3055, %v3054
    %v3084 = vpack.c.b16 %v3057, %v3056
    %v3085 = vpack.c.b16 %v3059, %v3058
    %v3086 = vpack.c.b16 %v3061, %v3060
    %v3087 = vpack.c.b16 %v3063, %v3062
    %v3088 = vpack.c.b16 %v3065, %v3064
    %v3089 = vpack.c.b16 %v3067, %v3066
    %v3090 = vpack.c.b16 %v3069, %v3068
    %v3091 = vpack.c.b16 %v3071, %v3070
    %v3092 = vpack.c.b16 %v3073, %v3072
    %v3093 = vpack.c.b16 %v3075, %v3074
    %v3094 = vpack.c.b16 %v3077, %v3076
    %v3095 = vpack.c.b16 %v3079, %v3078
    %3112 = vmatprep.subr.bf16.mxu0 0
    %3113 = vmatpush1.bf16.msra.mxu0 %v3080
    %3114 = vmatprep.subr.bf16.mxu0 0
    %3115 = vmatpush1.bf16.msra.mxu0 %v3081
    %3116 = vmatprep.subr.bf16.mxu0 0
    %3117 = vmatpush1.bf16.msra.mxu0 %v3082
    %3118 = vmatprep.subr.bf16.mxu0 0
    %3119 = vmatpush1.bf16.msra.mxu0 %v3083
    %3120 = vmatprep.subr.bf16.mxu0 0
    %3121 = vmatpush1.bf16.msra.mxu0 %v3084
    %3122 = vmatprep.subr.bf16.mxu0 0
    %3123 = vmatpush1.bf16.msra.mxu0 %v3085
    %3124 = vmatprep.subr.bf16.mxu0 0
    %3125 = vmatpush1.bf16.msra.mxu0 %v3086
    %3126 = vmatprep.subr.bf16.mxu0 0
    %3127 = vmatpush1.bf16.msra.mxu0 %v3087
    %3128 = vmatprep.subr.bf16.mxu0 0
    %3129 = vmatpush1.bf16.msra.mxu0 %v3088
    %3130 = vmatprep.subr.bf16.mxu0 0
    %3131 = vmatpush1.bf16.msra.mxu0 %v3089
    %3132 = vmatprep.subr.bf16.mxu0 0
    %3133 = vmatpush1.bf16.msra.mxu0 %v3090
    %3134 = vmatprep.subr.bf16.mxu0 0
    %3135 = vmatpush1.bf16.msra.mxu0 %v3091
    %3136 = vmatprep.subr.bf16.mxu0 0
    %3137 = vmatpush1.bf16.msra.mxu0 %v3092
    %3138 = vmatprep.subr.bf16.mxu0 0
    %3139 = vmatpush1.bf16.msra.mxu0 %v3093
    %3140 = vmatprep.subr.bf16.mxu0 0
    %3141 = vmatpush1.bf16.msra.mxu0 %v3094
    %3142 = vmatprep.subr.bf16.mxu0 0
    %3143 = vmatpush1.bf16.msra.mxu0 %v3095
    %3144 = vmatprep.mubr.bf16.mxu0 %v2889
    %3145 = vmatmul.mubr.bf16.gmra.mrb[0].mxu0 %v2888
    %v3146 = vpop.f32.mrb[0].mxu0
    %v3147 = vadd.f32 0.0, %v3146
    %v3148 = vpop.f32.mrb[0].mxu0
    %v3149 = vpop.f32.mrb[0].mxu0
    %v3150 = vadd.f32 0.0, %v3149
    %v3151 = vpop.f32.mrb[0].mxu0
    %3152 = vmatprep.mubr.bf16.mxu0 %v2891
    %3153 = vmatmul.mubr.bf16.gmra.mrb[0].mxu0 %v2890
    %v3154 = vpop.f32.mrb[0].mxu0
    %v3155 = vadd.f32 0.0, %v3154
    %v3156 = vpop.f32.mrb[0].mxu0
    %v3157 = vpop.f32.mrb[0].mxu0
    %v3158 = vadd.f32 0.0, %v3157
    %v3159 = vpop.f32.mrb[0].mxu0
    %3160 = vmatprep.mubr.bf16.mxu0 %v2893
    %3161 = vmatmul.mubr.bf16.gmra.mrb[0].mxu0 %v2892
    %v3162 = vpop.f32.mrb[0].mxu0
    %v3163 = vadd.f32 0.0, %v3162
    %v3164 = vpop.f32.mrb[0].mxu0
    %v3165 = vpop.f32.mrb[0].mxu0
    %v3166 = vadd.f32 0.0, %v3165
    %v3167 = vpop.f32.mrb[0].mxu0
    %3168 = vmatprep.mubr.bf16.mxu0 %v2895
    %3169 = vmatmul.mubr.bf16.gmra.mrb[0].mxu0 %v2894
    %v3170 = vpop.f32.mrb[0].mxu0
    %v3171 = vadd.f32 0.0, %v3170
    %v3172 = vpop.f32.mrb[0].mxu0
    %v3173 = vpop.f32.mrb[0].mxu0
    %v3174 = vadd.f32 0.0, %v3173
    %v3175 = vpop.f32.mrb[0].mxu0
    %3176 = vmatprep.mubr.bf16.mxu0 %v2897
    %3177 = vmatmul.mubr.bf16.gmra.mrb[0].mxu0 %v2896
    %v3178 = vpop.f32.mrb[0].mxu0
    %v3179 = vadd.f32 0.0, %v3178
    %v3180 = vpop.f32.mrb[0].mxu0
    %v3181 = vpop.f32.mrb[0].mxu0
    %v3182 = vadd.f32 0.0, %v3181
    %v3183 = vpop.f32.mrb[0].mxu0
    %3184 = vmatprep.mubr.bf16.mxu0 %v2899
    %3185 = vmatmul.mubr.bf16.gmra.mrb[0].mxu0 %v2898
    %v3186 = vpop.f32.mrb[0].mxu0
    %v3187 = vadd.f32 0.0, %v3186
    %v3188 = vpop.f32.mrb[0].mxu0
    %v3189 = vpop.f32.mrb[0].mxu0
    %v3190 = vadd.f32 0.0, %v3189
    %v3191 = vpop.f32.mrb[0].mxu0
    %3192 = vmatprep.mubr.bf16.mxu0 %v2901
    %3193 = vmatmul.mubr.bf16.gmra.mrb[0].mxu0 %v2900
    %v3194 = vpop.f32.mrb[0].mxu0
    %v3195 = vadd.f32 0.0, %v3194
    %v3196 = vpop.f32.mrb[0].mxu0
    %v3197 = vpop.f32.mrb[0].mxu0
    %v3198 = vadd.f32 0.0, %v3197
    %v3199 = vpop.f32.mrb[0].mxu0
    %3200 = vmatprep.mubr.bf16.mxu0 %v2903
    %3201 = vmatmul.mubr.bf16.gmra.mrb[0].mxu0 %v2902
    %v3202 = vpop.f32.mrb[0].mxu0
    %v3203 = vadd.f32 0.0, %v3202
    %v3204 = vpop.f32.mrb[0].mxu0
    %v3205 = vpop.f32.mrb[0].mxu0
    %v3206 = vadd.f32 0.0, %v3205
    %v3207 = vpop.f32.mrb[0].mxu0
    %3208 = vmatprep.mubr.bf16.mxu0 %v2905
    %3209 = vmatmul.mubr.bf16.gmra.mrb[0].mxu0 %v2904
    %v3210 = vpop.f32.mrb[0].mxu0
    %v3211 = vadd.f32 0.0, %v3210
    %v3212 = vpop.f32.mrb[0].mxu0
    %v3213 = vpop.f32.mrb[0].mxu0
    %v3214 = vadd.f32 0.0, %v3213
    %v3215 = vpop.f32.mrb[0].mxu0
    %3216 = vmatprep.mubr.bf16.mxu0 %v2907
    %3217 = vmatmul.mubr.bf16.gmra.mrb[0].mxu0 %v2906
    %v3218 = vpop.f32.mrb[0].mxu0
    %v3219 = vadd.f32 0.0, %v3218
    %v3220 = vpop.f32.mrb[0].mxu0
    %v3221 = vpop.f32.mrb[0].mxu0
    %v3222 = vadd.f32 0.0, %v3221
    %v3223 = vpop.f32.mrb[0].mxu0
    %3224 = vmatprep.mubr.bf16.mxu0 %v2909
    %3225 = vmatmul.mubr.bf16.gmra.mrb[0].mxu0 %v2908
    %v3226 = vpop.f32.mrb[0].mxu0
    %v3227 = vadd.f32 0.0, %v3226
    %v3228 = vpop.f32.mrb[0].mxu0
    %v3229 = vpop.f32.mrb[0].mxu0
    %v3230 = vadd.f32 0.0, %v3229
    %v3231 = vpop.f32.mrb[0].mxu0
    %3232 = vmatprep.mubr.bf16.mxu0 %v2911
    %3233 = vmatmul.mubr.bf16.gmra.mrb[0].mxu0 %v2910
    %v3234 = vpop.f32.mrb[0].mxu0
    %v3235 = vadd.f32 0.0, %v3234
    %v3236 = vpop.f32.mrb[0].mxu0
    %v3237 = vpop.f32.mrb[0].mxu0
    %v3238 = vadd.f32 0.0, %v3237
    %v3239 = vpop.f32.mrb[0].mxu0
    %3240 = vmatprep.mubr.bf16.mxu0 %v2913
    %3241 = vmatmul.mubr.bf16.gmra.mrb[0].mxu0 %v2912
    %v3242 = vpop.f32.mrb[0].mxu0
    %v3243 = vadd.f32 0.0, %v3242
    %v3244 = vpop.f32.mrb[0].mxu0
    %v3245 = vpop.f32.mrb[0].mxu0
    %v3246 = vadd.f32 0.0, %v3245
    %v3247 = vpop.f32.mrb[0].mxu0
    %3248 = vmatprep.mubr.bf16.mxu0 %v2915
    %3249 = vmatmul.mubr.bf16.gmra.mrb[0].mxu0 %v2914
    %v3250 = vpop.f32.mrb[0].mxu0
    %v3251 = vadd.f32 0.0, %v3250
    %v3252 = vpop.f32.mrb[0].mxu0
    %v3253 = vpop.f32.mrb[0].mxu0
    %v3254 = vadd.f32 0.0, %v3253
    %v3255 = vpop.f32.mrb[0].mxu0
    %3256 = vmatprep.mubr.bf16.mxu0 %v2917
    %3257 = vmatmul.mubr.bf16.gmra.mrb[0].mxu0 %v2916
    %v3258 = vpop.f32.mrb[0].mxu0
    %v3259 = vadd.f32 0.0, %v3258
    %v3260 = vpop.f32.mrb[0].mxu0
    %v3261 = vpop.f32.mrb[0].mxu0
    %v3262 = vadd.f32 0.0, %v3261
    %v3263 = vpop.f32.mrb[0].mxu0
    %3264 = vmatprep.mubr.bf16.mxu0 %v2919
    %3265 = vmatmul.mubr.bf16.gmra.mrb[0].mxu0 %v2918
    %v3266 = vpop.f32.mrb[0].mxu0
    %v3267 = vadd.f32 0.0, %v3266
    %v3268 = vpop.f32.mrb[0].mxu0
    %v3269 = vpop.f32.mrb[0].mxu0
    %v3270 = vadd.f32 0.0, %v3269
    %v3271 = vpop.f32.mrb[0].mxu0
    %3272 = vmatprep.mubr.bf16.mxu0 %v2921
    %3273 = vmatmul.mubr.bf16.gmra.mrb[0].mxu0 %v2920
    %v3274 = vpop.f32.mrb[0].mxu0
    %v3275 = vadd.f32 0.0, %v3274
    %v3276 = vpop.f32.mrb[0].mxu0
    %v3277 = vpop.f32.mrb[0].mxu0
    %v3278 = vadd.f32 0.0, %v3277
    %v3279 = vpop.f32.mrb[0].mxu0
    %3280 = vmatprep.mubr.bf16.mxu0 %v2923
    %3281 = vmatmul.mubr.bf16.gmra.mrb[0].mxu0 %v2922
    %v3282 = vpop.f32.mrb[0].mxu0
    %v3283 = vadd.f32 0.0, %v3282
    %v3284 = vpop.f32.mrb[0].mxu0
    %v3285 = vpop.f32.mrb[0].mxu0
    %v3286 = vadd.f32 0.0, %v3285
    %v3287 = vpop.f32.mrb[0].mxu0
    %3288 = vmatprep.mubr.bf16.mxu0 %v2925
    %3289 = vmatmul.mubr.bf16.gmra.mrb[0].mxu0 %v2924
    %v3290 = vpop.f32.mrb[0].mxu0
    %v3291 = vadd.f32 0.0, %v3290
    %v3292 = vpop.f32.mrb[0].mxu0
    %v3293 = vpop.f32.mrb[0].mxu0
    %v3294 = vadd.f32 0.0, %v3293
    %v3295 = vpop.f32.mrb[0].mxu0
    %3296 = vmatprep.mubr.bf16.mxu0 %v2927
    %3297 = vmatmul.mubr.bf16.gmra.mrb[0].mxu0 %v2926
    %v3298 = vpop.f32.mrb[0].mxu0
    %v3299 = vadd.f32 0.0, %v3298
    %v3300 = vpop.f32.mrb[0].mxu0
    %v3301 = vpop.f32.mrb[0].mxu0
    %v3302 = vadd.f32 0.0, %v3301
    %v3303 = vpop.f32.mrb[0].mxu0
    %3304 = vmatprep.mubr.bf16.mxu0 %v2929
    %3305 = vmatmul.mubr.bf16.gmra.mrb[0].mxu0 %v2928
    %v3306 = vpop.f32.mrb[0].mxu0
    %v3307 = vadd.f32 0.0, %v3306
    %v3308 = vpop.f32.mrb[0].mxu0
    %v3309 = vpop.f32.mrb[0].mxu0
    %v3310 = vadd.f32 0.0, %v3309
    %v3311 = vpop.f32.mrb[0].mxu0
    %3312 = vmatprep.mubr.bf16.mxu0 %v2931
    %3313 = vmatmul.mubr.bf16.gmra.mrb[0].mxu0 %v2930
    %v3314 = vpop.f32.mrb[0].mxu0
    %v3315 = vadd.f32 0.0, %v3314
    %v3316 = vpop.f32.mrb[0].mxu0
    %v3317 = vpop.f32.mrb[0].mxu0
    %v3318 = vadd.f32 0.0, %v3317
    %v3319 = vpop.f32.mrb[0].mxu0
    %3320 = vmatprep.mubr.bf16.mxu0 %v2933
    %3321 = vmatmul.mubr.bf16.gmra.mrb[0].mxu0 %v2932
    %v3322 = vpop.f32.mrb[0].mxu0
    %v3323 = vadd.f32 0.0, %v3322
    %v3324 = vpop.f32.mrb[0].mxu0
    %v3325 = vpop.f32.mrb[0].mxu0
    %v3326 = vadd.f32 0.0, %v3325
    %v3327 = vpop.f32.mrb[0].mxu0
    %3328 = vmatprep.mubr.bf16.mxu0 %v2935
    %3329 = vmatmul.mubr.bf16.gmra.mrb[0].mxu0 %v2934
    %v3330 = vpop.f32.mrb[0].mxu0
    %v3331 = vadd.f32 0.0, %v3330
    %v3332 = vpop.f32.mrb[0].mxu0
    %v3333 = vpop.f32.mrb[0].mxu0
    %v3334 = vadd.f32 0.0, %v3333
    %v3335 = vpop.f32.mrb[0].mxu0
    %3336 = vmatprep.mubr.bf16.mxu0 %v2937
    %3337 = vmatmul.mubr.bf16.gmra.mrb[0].mxu0 %v2936
    %v3338 = vpop.f32.mrb[0].mxu0
    %v3339 = vadd.f32 0.0, %v3338
    %v3340 = vpop.f32.mrb[0].mxu0
    %v3341 = vpop.f32.mrb[0].mxu0
    %v3342 = vadd.f32 0.0, %v3341
    %v3343 = vpop.f32.mrb[0].mxu0
    %3344 = vmatprep.mubr.bf16.mxu0 %v2939
    %3345 = vmatmul.mubr.bf16.gmra.mrb[0].mxu0 %v2938
    %v3346 = vpop.f32.mrb[0].mxu0
    %v3347 = vadd.f32 0.0, %v3346
    %v3348 = vpop.f32.mrb[0].mxu0
    %v3349 = vpop.f32.mrb[0].mxu0
    %v3350 = vadd.f32 0.0, %v3349
    %v3351 = vpop.f32.mrb[0].mxu0
    %3352 = vmatprep.mubr.bf16.mxu0 %v2941
    %3353 = vmatmul.mubr.bf16.gmra.mrb[0].mxu0 %v2940
    %v3354 = vpop.f32.mrb[0].mxu0
    %v3355 = vadd.f32 0.0, %v3354
    %v3356 = vpop.f32.mrb[0].mxu0
    %v3357 = vpop.f32.mrb[0].mxu0
    %v3358 = vadd.f32 0.0, %v3357
    %v3359 = vpop.f32.mrb[0].mxu0
    %3360 = vmatprep.mubr.bf16.mxu0 %v2943
    %3361 = vmatmul.mubr.bf16.gmra.mrb[0].mxu0 %v2942
    %v3362 = vpop.f32.mrb[0].mxu0
    %v3363 = vadd.f32 0.0, %v3362
    %v3364 = vpop.f32.mrb[0].mxu0
    %v3365 = vpop.f32.mrb[0].mxu0
    %v3366 = vadd.f32 0.0, %v3365
    %v3367 = vpop.f32.mrb[0].mxu0
    %3368 = vmatprep.mubr.bf16.mxu0 %v2945
    %3369 = vmatmul.mubr.bf16.gmra.mrb[0].mxu0 %v2944
    %v3370 = vpop.f32.mrb[0].mxu0
    %v3371 = vadd.f32 0.0, %v3370
    %v3372 = vpop.f32.mrb[0].mxu0
    %v3373 = vpop.f32.mrb[0].mxu0
    %v3374 = vadd.f32 0.0, %v3373
    %v3375 = vpop.f32.mrb[0].mxu0
    %3376 = vmatprep.mubr.bf16.mxu0 %v2947
    %3377 = vmatmul.mubr.bf16.gmra.mrb[0].mxu0 %v2946
    %v3378 = vpop.f32.mrb[0].mxu0
    %v3379 = vadd.f32 0.0, %v3378
    %v3380 = vpop.f32.mrb[0].mxu0
    %v3381 = vpop.f32.mrb[0].mxu0
    %v3382 = vadd.f32 0.0, %v3381
    %v3383 = vpop.f32.mrb[0].mxu0
    %3384 = vmatprep.mubr.bf16.mxu0 %v2949
    %3385 = vmatmul.mubr.bf16.gmra.mrb[0].mxu0 %v2948
    %v3386 = vpop.f32.mrb[0].mxu0
    %v3387 = vadd.f32 0.0, %v3386
    %v3388 = vpop.f32.mrb[0].mxu0
    %v3389 = vpop.f32.mrb[0].mxu0
    %v3390 = vadd.f32 0.0, %v3389
    %v3391 = vpop.f32.mrb[0].mxu0
    %3392 = vmatprep.mubr.bf16.mxu0 %v2951
    %3393 = vmatmul.mubr.bf16.gmra.mrb[0].mxu0 %v2950
    %v3394 = vpop.f32.mrb[0].mxu0
    %v3395 = vadd.f32 0.0, %v3394
    %v3396 = vpop.f32.mrb[0].mxu0
    %v3397 = vpop.f32.mrb[0].mxu0
    %v3398 = vadd.f32 0.0, %v3397
    %v3399 = vpop.f32.mrb[0].mxu0
    %3400 = vmatprep.mubr.bf16.mxu0 %v2953
    %3401 = vmatmul.mubr.bf16.gmra.mrb[0].mxu0 %v2952
    %v3402 = vpop.f32.mrb[0].mxu0
    %v3403 = vadd.f32 0.0, %v3402
    %v3404 = vpop.f32.mrb[0].mxu0
    %v3405 = vpop.f32.mrb[0].mxu0
    %v3406 = vadd.f32 0.0, %v3405
    %v3407 = vpop.f32.mrb[0].mxu0
    %3408 = vmatprep.mubr.bf16.mxu0 %v2955
    %3409 = vmatmul.mubr.bf16.gmra.mrb[0].mxu0 %v2954
    %v3410 = vpop.f32.mrb[0].mxu0
    %v3411 = vadd.f32 0.0, %v3410
    %v3412 = vpop.f32.mrb[0].mxu0
    %v3413 = vpop.f32.mrb[0].mxu0
    %v3414 = vadd.f32 0.0, %v3413
    %v3415 = vpop.f32.mrb[0].mxu0
    %3416 = vmatprep.mubr.bf16.mxu0 %v2957
    %3417 = vmatmul.mubr.bf16.gmra.mrb[0].mxu0 %v2956
    %v3418 = vpop.f32.mrb[0].mxu0
    %v3419 = vadd.f32 0.0, %v3418
    %v3420 = vpop.f32.mrb[0].mxu0
    %v3421 = vpop.f32.mrb[0].mxu0
    %v3422 = vadd.f32 0.0, %v3421
    %v3423 = vpop.f32.mrb[0].mxu0
    %3424 = vmatprep.mubr.bf16.mxu0 %v2959
    %3425 = vmatmul.mubr.bf16.gmra.mrb[0].mxu0 %v2958
    %v3426 = vpop.f32.mrb[0].mxu0
    %v3427 = vadd.f32 0.0, %v3426
    %v3428 = vpop.f32.mrb[0].mxu0
    %v3429 = vpop.f32.mrb[0].mxu0
    %v3430 = vadd.f32 0.0, %v3429
    %v3431 = vpop.f32.mrb[0].mxu0
    %3432 = vmatprep.mubr.bf16.mxu0 %v2961
    %3433 = vmatmul.mubr.bf16.gmra.mrb[0].mxu0 %v2960
    %v3434 = vpop.f32.mrb[0].mxu0
    %v3435 = vadd.f32 0.0, %v3434
    %v3436 = vpop.f32.mrb[0].mxu0
    %v3437 = vpop.f32.mrb[0].mxu0
    %v3438 = vadd.f32 0.0, %v3437
    %v3439 = vpop.f32.mrb[0].mxu0
    %3440 = vmatprep.mubr.bf16.mxu0 %v2963
    %3441 = vmatmul.mubr.bf16.gmra.mrb[0].mxu0 %v2962
    %v3442 = vpop.f32.mrb[0].mxu0
    %v3443 = vadd.f32 0.0, %v3442
    %v3444 = vpop.f32.mrb[0].mxu0
    %v3445 = vpop.f32.mrb[0].mxu0
    %v3446 = vadd.f32 0.0, %v3445
    %v3447 = vpop.f32.mrb[0].mxu0
    %3448 = vmatprep.mubr.bf16.mxu0 %v2965
    %3449 = vmatmul.mubr.bf16.gmra.mrb[0].mxu0 %v2964
    %v3450 = vpop.f32.mrb[0].mxu0
    %v3451 = vadd.f32 0.0, %v3450
    %v3452 = vpop.f32.mrb[0].mxu0
    %v3453 = vpop.f32.mrb[0].mxu0
    %v3454 = vadd.f32 0.0, %v3453
    %v3455 = vpop.f32.mrb[0].mxu0
    %3456 = vmatprep.mubr.bf16.mxu0 %v2967
    %3457 = vmatmul.mubr.bf16.gmra.mrb[0].mxu0 %v2966
    %v3458 = vpop.f32.mrb[0].mxu0
    %v3459 = vadd.f32 0.0, %v3458
    %v3460 = vpop.f32.mrb[0].mxu0
    %v3461 = vpop.f32.mrb[0].mxu0
    %v3462 = vadd.f32 0.0, %v3461
    %v3463 = vpop.f32.mrb[0].mxu0
    %3464 = vmatprep.mubr.bf16.mxu0 %v2969
    %3465 = vmatmul.mubr.bf16.gmra.mrb[0].mxu0 %v2968
    %v3466 = vpop.f32.mrb[0].mxu0
    %v3467 = vadd.f32 0.0, %v3466
    %v3468 = vpop.f32.mrb[0].mxu0
    %v3469 = vpop.f32.mrb[0].mxu0
    %v3470 = vadd.f32 0.0, %v3469
    %v3471 = vpop.f32.mrb[0].mxu0
    %3472 = vmatprep.mubr.bf16.mxu0 %v2971
    %3473 = vmatmul.mubr.bf16.gmra.mrb[0].mxu0 %v2970
    %v3474 = vpop.f32.mrb[0].mxu0
    %v3475 = vadd.f32 0.0, %v3474
    %v3476 = vpop.f32.mrb[0].mxu0
    %v3477 = vpop.f32.mrb[0].mxu0
    %v3478 = vadd.f32 0.0, %v3477
    %v3479 = vpop.f32.mrb[0].mxu0
    %3480 = vmatprep.mubr.bf16.mxu0 %v2973
    %3481 = vmatmul.mubr.bf16.gmra.mrb[0].mxu0 %v2972
    %v3482 = vpop.f32.mrb[0].mxu0
    %v3483 = vadd.f32 0.0, %v3482
    %v3484 = vpop.f32.mrb[0].mxu0
    %v3485 = vpop.f32.mrb[0].mxu0
    %v3486 = vadd.f32 0.0, %v3485
    %v3487 = vpop.f32.mrb[0].mxu0
    %3488 = vmatprep.mubr.bf16.mxu0 %v2975
    %3489 = vmatmul.mubr.bf16.gmra.mrb[0].mxu0 %v2974
    %v3490 = vpop.f32.mrb[0].mxu0
    %v3491 = vadd.f32 0.0, %v3490
    %v3492 = vpop.f32.mrb[0].mxu0
    %v3493 = vpop.f32.mrb[0].mxu0
    %v3494 = vadd.f32 0.0, %v3493
    %v3495 = vpop.f32.mrb[0].mxu0
    %3496 = vmatprep.mubr.bf16.mxu0 %v2977
    %3497 = vmatmul.mubr.bf16.gmra.mrb[0].mxu0 %v2976
    %v3498 = vpop.f32.mrb[0].mxu0
    %v3499 = vadd.f32 0.0, %v3498
    %v3500 = vpop.f32.mrb[0].mxu0
    %v3501 = vpop.f32.mrb[0].mxu0
    %v3502 = vadd.f32 0.0, %v3501
    %v3503 = vpop.f32.mrb[0].mxu0
    %3504 = vmatprep.mubr.bf16.mxu0 %v2979
    %3505 = vmatmul.mubr.bf16.gmra.mrb[0].mxu0 %v2978
    %v3506 = vpop.f32.mrb[0].mxu0
    %v3507 = vadd.f32 0.0, %v3506
    %v3508 = vpop.f32.mrb[0].mxu0
    %v3509 = vpop.f32.mrb[0].mxu0
    %v3510 = vadd.f32 0.0, %v3509
    %v3511 = vpop.f32.mrb[0].mxu0
    %3512 = vmatprep.mubr.bf16.mxu0 %v2981
    %3513 = vmatmul.mubr.bf16.gmra.mrb[0].mxu0 %v2980
    %v3514 = vpop.f32.mrb[0].mxu0
    %v3515 = vadd.f32 0.0, %v3514
    %v3516 = vpop.f32.mrb[0].mxu0
    %v3517 = vpop.f32.mrb[0].mxu0
    %v3518 = vadd.f32 0.0, %v3517
    %v3519 = vpop.f32.mrb[0].mxu0
    %3520 = vmatprep.mubr.bf16.mxu0 %v2983
    %3521 = vmatmul.mubr.bf16.gmra.mrb[0].mxu0 %v2982
    %v3522 = vpop.f32.mrb[0].mxu0
    %v3523 = vadd.f32 0.0, %v3522
    %v3524 = vpop.f32.mrb[0].mxu0
    %v3525 = vpop.f32.mrb[0].mxu0
    %v3526 = vadd.f32 0.0, %v3525
    %v3527 = vpop.f32.mrb[0].mxu0
    %3528 = vdwg.mxu0
    %vm3529 = vcmp.lt.s32.totalorder %v54, 16
    %v3530 = vsel %vm3529, %v829, 0.0
    %vm3531 = vcmp.ge.s32.totalorder %v54, 16
    %v3532 = vsel %vm3531, %v829, 0.0
    %v3534 = vrot.slane %v3532, 6
    %v3536 = vsel %vm924, %v3530, %v3534
    %v3538 = vsel %vm676, %v3536, 0
    %v3541 = vsel %vm676, %v3147, 0
    %v3544 = vsel %vm676, %v3150, 0
    %v3547 = vsel %vm676, %v3155, 0
    %v3550 = vsel %vm676, %v3158, 0
    %v3553 = vsel %vm676, %v3163, 0
    %v3556 = vsel %vm676, %v3166, 0
    %v3559 = vsel %vm676, %v3171, 0
    %v3562 = vsel %vm676, %v3174, 0
    %v3565 = vsel %vm676, %v3179, 0
    %v3568 = vsel %vm676, %v3182, 0
    %v3571 = vsel %vm676, %v3187, 0
    %v3574 = vsel %vm676, %v3190, 0
    %v3577 = vsel %vm676, %v3195, 0
    %v3580 = vsel %vm676, %v3198, 0
    %v3583 = vsel %vm676, %v3203, 0
    %v3586 = vsel %vm676, %v3206, 0
    %v3589 = vsel %vm676, %v3211, 0
    %v3592 = vsel %vm676, %v3214, 0
    %v3595 = vsel %vm676, %v3219, 0
    %v3598 = vsel %vm676, %v3222, 0
    %v3601 = vsel %vm676, %v3227, 0
    %v3604 = vsel %vm676, %v3230, 0
    %v3607 = vsel %vm676, %v3235, 0
    %v3610 = vsel %vm676, %v3238, 0
    %v3613 = vsel %vm676, %v3243, 0
    %v3616 = vsel %vm676, %v3246, 0
    %v3619 = vsel %vm676, %v3251, 0
    %v3622 = vsel %vm676, %v3254, 0
    %v3625 = vsel %vm676, %v3259, 0
    %v3628 = vsel %vm676, %v3262, 0
    %v3631 = vsel %vm676, %v3267, 0
    %v3634 = vsel %vm676, %v3270, 0
    %v3637 = vsel %vm676, %v3275, 0
    %v3640 = vsel %vm676, %v3278, 0
    %v3643 = vsel %vm676, %v3283, 0
    %v3646 = vsel %vm676, %v3286, 0
    %v3649 = vsel %vm676, %v3291, 0
    %v3652 = vsel %vm676, %v3294, 0
    %v3655 = vsel %vm676, %v3299, 0
    %v3658 = vsel %vm676, %v3302, 0
    %v3661 = vsel %vm676, %v3307, 0
    %v3664 = vsel %vm676, %v3310, 0
    %v3667 = vsel %vm676, %v3315, 0
    %v3670 = vsel %vm676, %v3318, 0
    %v3673 = vsel %vm676, %v3323, 0
    %v3676 = vsel %vm676, %v3326, 0
    %v3679 = vsel %vm676, %v3331, 0
    %v3682 = vsel %vm676, %v3334, 0
    %v3685 = vsel %vm676, %v3339, 0
    %v3688 = vsel %vm676, %v3342, 0
    %v3691 = vsel %vm676, %v3347, 0
    %v3694 = vsel %vm676, %v3350, 0
    %v3697 = vsel %vm676, %v3355, 0
    %v3700 = vsel %vm676, %v3358, 0
    %v3703 = vsel %vm676, %v3363, 0
    %v3706 = vsel %vm676, %v3366, 0
    %v3709 = vsel %vm676, %v3371, 0
    %v3712 = vsel %vm676, %v3374, 0
    %v3715 = vsel %vm676, %v3379, 0
    %v3718 = vsel %vm676, %v3382, 0
    %v3721 = vsel %vm676, %v3387, 0
    %v3724 = vsel %vm676, %v3390, 0
    %v3727 = vsel %vm676, %v3395, 0
    %v3730 = vsel %vm676, %v3398, 0
    %v3733 = vsel %vm676, %v3403, 0
    %v3736 = vsel %vm676, %v3406, 0
    %v3739 = vsel %vm676, %v3411, 0
    %v3742 = vsel %vm676, %v3414, 0
    %v3745 = vsel %vm676, %v3419, 0
    %v3748 = vsel %vm676, %v3422, 0
    %v3751 = vsel %vm676, %v3427, 0
    %v3754 = vsel %vm676, %v3430, 0
    %v3757 = vsel %vm676, %v3435, 0
    %v3760 = vsel %vm676, %v3438, 0
    %v3763 = vsel %vm676, %v3443, 0
    %v3766 = vsel %vm676, %v3446, 0
    %v3769 = vsel %vm676, %v3451, 0
    %v3772 = vsel %vm676, %v3454, 0
    %v3775 = vsel %vm676, %v3459, 0
    %v3778 = vsel %vm676, %v3462, 0
    %v3781 = vsel %vm676, %v3467, 0
    %v3784 = vsel %vm676, %v3470, 0
    %v3787 = vsel %vm676, %v3475, 0
    %v3790 = vsel %vm676, %v3478, 0
    %v3793 = vsel %vm676, %v3483, 0
    %v3796 = vsel %vm676, %v3486, 0
    %v3799 = vsel %vm676, %v3491, 0
    %v3802 = vsel %vm676, %v3494, 0
    %v3805 = vsel %vm676, %v3499, 0
    %v3808 = vsel %vm676, %v3502, 0
    %v3811 = vsel %vm676, %v3507, 0
    %v3814 = vsel %vm676, %v3510, 0
    %v3817 = vsel %vm676, %v3515, 0
    %v3820 = vsel %vm676, %v3518, 0
    %v3823 = vsel %vm676, %v3523, 0
    %v3826 = vsel %vm676, %v3526, 0
    %3828 = vmatprep.subr.mxu0 0.0
    %3829 = vmatpush1.xpose.msra.mxu0 %v3541
    %3830 = vmatprep.subr.mxu0 0.0
    %3831 = vmatpush1.xpose.msra.mxu0 %v3544
    %3832 = vmatprep.subr.mxu0 0.0
    %3833 = vmatpush1.xpose.msra.mxu0 %v3547
    %3834 = vmatprep.subr.mxu0 0.0
    %3835 = vmatpush1.xpose.msra.mxu0 %v3550
    %3836 = vmatprep.subr.mxu0 0.0
    %3837 = vmatpush1.xpose.msra.mxu0 %v3553
    %3838 = vmatprep.subr.mxu0 0.0
    %3839 = vmatpush1.xpose.msra.mxu0 %v3556
    %3840 = vmatprep.subr.mxu0 0.0
    %3841 = vmatpush1.xpose.msra.mxu0 %v3559
    %3842 = vmatprep.subr.mxu0 0.0
    %3843 = vmatpush1.xpose.msra.mxu0 %v3562
    %3844 = vmatprep.subr.mxu0 0.0
    %3845 = vmatpush1.xpose.msra.mxu0 %v3565
    %3846 = vmatprep.subr.mxu0 0.0
    %3847 = vmatpush1.xpose.msra.mxu0 %v3568
    %3848 = vmatprep.subr.mxu0 0.0
    %3849 = vmatpush1.xpose.msra.mxu0 %v3571
    %3850 = vmatprep.subr.mxu0 0.0
    %3851 = vmatpush1.xpose.msra.mxu0 %v3574
    %3852 = vmatprep.subr.mxu0 0.0
    %3853 = vmatpush1.xpose.msra.mxu0 %v3577
    %3854 = vmatprep.subr.mxu0 0.0
    %3855 = vmatpush1.xpose.msra.mxu0 %v3580
    %3856 = vmatprep.subr.mxu0 0.0
    %3857 = vmatpush1.xpose.msra.mxu0 %v3583
    %3858 = vmatprep.subr.mxu0 0.0
    %3859 = vmatpush1.xpose.msra.mxu0 %v3586
    %3860 = vmatprep.subr.mxu0 0.0
    %3861 = vmatpush1.xpose.msra.mxu0 %v3589
    %3862 = vmatprep.subr.mxu0 0.0
    %3863 = vmatpush1.xpose.msra.mxu0 %v3592
    %3864 = vmatprep.subr.mxu0 0.0
    %3865 = vmatpush1.xpose.msra.mxu0 %v3595
    %3866 = vmatprep.subr.mxu0 0.0
    %3867 = vmatpush1.xpose.msra.mxu0 %v3598
    %3868 = vmatprep.subr.mxu0 0.0
    %3869 = vmatpush1.xpose.msra.mxu0 %v3601
    %3870 = vmatprep.subr.mxu0 0.0
    %3871 = vmatpush1.xpose.msra.mxu0 %v3604
    %3872 = vmatprep.subr.mxu0 0.0
    %3873 = vmatpush1.xpose.msra.mxu0 %v3607
    %3874 = vmatprep.subr.mxu0 0.0
    %3875 = vmatpush1.xpose.msra.mxu0 %v3610
    %3876 = vmatprep.subr.mxu0 0.0
    %3877 = vmatpush1.xpose.msra.mxu0 %v3613
    %3878 = vmatprep.subr.mxu0 0.0
    %3879 = vmatpush1.xpose.msra.mxu0 %v3616
    %3880 = vmatprep.subr.mxu0 0.0
    %3881 = vmatpush1.xpose.msra.mxu0 %v3619
    %3882 = vmatprep.subr.mxu0 0.0
    %3883 = vmatpush1.xpose.msra.mxu0 %v3622
    %3884 = vmatprep.subr.mxu0 0.0
    %3885 = vmatpush1.xpose.msra.mxu0 %v3625
    %3886 = vmatprep.subr.mxu0 0.0
    %3887 = vmatpush1.xpose.msra.mxu0 %v3628
    %3888 = vmatprep.subr.mxu0 0.0
    %3889 = vmatpush1.xpose.msra.mxu0 %v3631
    %3890 = vmatprep.subr.mxu0 0.0
    %3891 = vmatpush1.xpose.msra.mxu0 %v3634
    %3892 = vmatprep.mubr.f32.mxu0 0.0
    %3893 = vmatmul.mubr.f32.gmra.mrb[0].mxu0 %v3538
    %v3894 = vpop.f32.mrb[0].mxu0
    %v3895 = vadd.f32 0.0, %v3894
    %v3896 = vpop.f32.mrb[0].mxu0
    %v3897 = vadd.f32 0.0, %v3896
    %3898 = vdwg.mxu0
    %3899 = vmatprep.subr.mxu0 0.0
    %3900 = vmatpush1.xpose.msra.mxu0 %v3637
    %3901 = vmatprep.subr.mxu0 0.0
    %3902 = vmatpush1.xpose.msra.mxu0 %v3640
    %3903 = vmatprep.subr.mxu0 0.0
    %3904 = vmatpush1.xpose.msra.mxu0 %v3643
    %3905 = vmatprep.subr.mxu0 0.0
    %3906 = vmatpush1.xpose.msra.mxu0 %v3646
    %3907 = vmatprep.subr.mxu0 0.0
    %3908 = vmatpush1.xpose.msra.mxu0 %v3649
    %3909 = vmatprep.subr.mxu0 0.0
    %3910 = vmatpush1.xpose.msra.mxu0 %v3652
    %3911 = vmatprep.subr.mxu0 0.0
    %3912 = vmatpush1.xpose.msra.mxu0 %v3655
    %3913 = vmatprep.subr.mxu0 0.0
    %3914 = vmatpush1.xpose.msra.mxu0 %v3658
    %3915 = vmatprep.subr.mxu0 0.0
    %3916 = vmatpush1.xpose.msra.mxu0 %v3661
    %3917 = vmatprep.subr.mxu0 0.0
    %3918 = vmatpush1.xpose.msra.mxu0 %v3664
    %3919 = vmatprep.subr.mxu0 0.0
    %3920 = vmatpush1.xpose.msra.mxu0 %v3667
    %3921 = vmatprep.subr.mxu0 0.0
    %3922 = vmatpush1.xpose.msra.mxu0 %v3670
    %3923 = vmatprep.subr.mxu0 0.0
    %3924 = vmatpush1.xpose.msra.mxu0 %v3673
    %3925 = vmatprep.subr.mxu0 0.0
    %3926 = vmatpush1.xpose.msra.mxu0 %v3676
    %3927 = vmatprep.subr.mxu0 0.0
    %3928 = vmatpush1.xpose.msra.mxu0 %v3679
    %3929 = vmatprep.subr.mxu0 0.0
    %3930 = vmatpush1.xpose.msra.mxu0 %v3682
    %3931 = vmatprep.subr.mxu0 0.0
    %3932 = vmatpush1.xpose.msra.mxu0 %v3685
    %3933 = vmatprep.subr.mxu0 0.0
    %3934 = vmatpush1.xpose.msra.mxu0 %v3688
    %3935 = vmatprep.subr.mxu0 0.0
    %3936 = vmatpush1.xpose.msra.mxu0 %v3691
    %3937 = vmatprep.subr.mxu0 0.0
    %3938 = vmatpush1.xpose.msra.mxu0 %v3694
    %3939 = vmatprep.subr.mxu0 0.0
    %3940 = vmatpush1.xpose.msra.mxu0 %v3697
    %3941 = vmatprep.subr.mxu0 0.0
    %3942 = vmatpush1.xpose.msra.mxu0 %v3700
    %3943 = vmatprep.subr.mxu0 0.0
    %3944 = vmatpush1.xpose.msra.mxu0 %v3703
    %3945 = vmatprep.subr.mxu0 0.0
    %3946 = vmatpush1.xpose.msra.mxu0 %v3706
    %3947 = vmatprep.subr.mxu0 0.0
    %3948 = vmatpush1.xpose.msra.mxu0 %v3709
    %3949 = vmatprep.subr.mxu0 0.0
    %3950 = vmatpush1.xpose.msra.mxu0 %v3712
    %3951 = vmatprep.subr.mxu0 0.0
    %3952 = vmatpush1.xpose.msra.mxu0 %v3715
    %3953 = vmatprep.subr.mxu0 0.0
    %3954 = vmatpush1.xpose.msra.mxu0 %v3718
    %3955 = vmatprep.subr.mxu0 0.0
    %3956 = vmatpush1.xpose.msra.mxu0 %v3721
    %3957 = vmatprep.subr.mxu0 0.0
    %3958 = vmatpush1.xpose.msra.mxu0 %v3724
    %3959 = vmatprep.subr.mxu0 0.0
    %3960 = vmatpush1.xpose.msra.mxu0 %v3727
    %3961 = vmatprep.subr.mxu0 0.0
    %3962 = vmatpush1.xpose.msra.mxu0 %v3730
    %3963 = vmatprep.mubr.f32.mxu0 0.0
    %3964 = vmatmul.mubr.f32.gmra.mrb[0].mxu0 %v3538
    %v3965 = vpop.f32.mrb[0].mxu0
    %v3966 = vadd.f32 0.0, %v3965
    %v3967 = vpop.f32.mrb[0].mxu0
    %v3968 = vadd.f32 0.0, %v3967
    %3969 = vdwg.mxu0
    %3970 = vmatprep.subr.mxu0 0.0
    %3971 = vmatpush1.xpose.msra.mxu0 %v3733
    %3972 = vmatprep.subr.mxu0 0.0
    %3973 = vmatpush1.xpose.msra.mxu0 %v3736
    %3974 = vmatprep.subr.mxu0 0.0
    %3975 = vmatpush1.xpose.msra.mxu0 %v3739
    %3976 = vmatprep.subr.mxu0 0.0
    %3977 = vmatpush1.xpose.msra.mxu0 %v3742
    %3978 = vmatprep.subr.mxu0 0.0
    %3979 = vmatpush1.xpose.msra.mxu0 %v3745
    %3980 = vmatprep.subr.mxu0 0.0
    %3981 = vmatpush1.xpose.msra.mxu0 %v3748
    %3982 = vmatprep.subr.mxu0 0.0
    %3983 = vmatpush1.xpose.msra.mxu0 %v3751
    %3984 = vmatprep.subr.mxu0 0.0
    %3985 = vmatpush1.xpose.msra.mxu0 %v3754
    %3986 = vmatprep.subr.mxu0 0.0
    %3987 = vmatpush1.xpose.msra.mxu0 %v3757
    %3988 = vmatprep.subr.mxu0 0.0
    %3989 = vmatpush1.xpose.msra.mxu0 %v3760
    %3990 = vmatprep.subr.mxu0 0.0
    %3991 = vmatpush1.xpose.msra.mxu0 %v3763
    %3992 = vmatprep.subr.mxu0 0.0
    %3993 = vmatpush1.xpose.msra.mxu0 %v3766
    %3994 = vmatprep.subr.mxu0 0.0
    %3995 = vmatpush1.xpose.msra.mxu0 %v3769
    %3996 = vmatprep.subr.mxu0 0.0
    %3997 = vmatpush1.xpose.msra.mxu0 %v3772
    %3998 = vmatprep.subr.mxu0 0.0
    %3999 = vmatpush1.xpose.msra.mxu0 %v3775
    %4000 = vmatprep.subr.mxu0 0.0
    %4001 = vmatpush1.xpose.msra.mxu0 %v3778
    %4002 = vmatprep.subr.mxu0 0.0
    %4003 = vmatpush1.xpose.msra.mxu0 %v3781
    %4004 = vmatprep.subr.mxu0 0.0
    %4005 = vmatpush1.xpose.msra.mxu0 %v3784
    %4006 = vmatprep.subr.mxu0 0.0
    %4007 = vmatpush1.xpose.msra.mxu0 %v3787
    %4008 = vmatprep.subr.mxu0 0.0
    %4009 = vmatpush1.xpose.msra.mxu0 %v3790
    %4010 = vmatprep.subr.mxu0 0.0
    %4011 = vmatpush1.xpose.msra.mxu0 %v3793
    %4012 = vmatprep.subr.mxu0 0.0
    %4013 = vmatpush1.xpose.msra.mxu0 %v3796
    %4014 = vmatprep.subr.mxu0 0.0
    %4015 = vmatpush1.xpose.msra.mxu0 %v3799
    %4016 = vmatprep.subr.mxu0 0.0
    %4017 = vmatpush1.xpose.msra.mxu0 %v3802
    %4018 = vmatprep.subr.mxu0 0.0
    %4019 = vmatpush1.xpose.msra.mxu0 %v3805
    %4020 = vmatprep.subr.mxu0 0.0
    %4021 = vmatpush1.xpose.msra.mxu0 %v3808
    %4022 = vmatprep.subr.mxu0 0.0
    %4023 = vmatpush1.xpose.msra.mxu0 %v3811
    %4024 = vmatprep.subr.mxu0 0.0
    %4025 = vmatpush1.xpose.msra.mxu0 %v3814
    %4026 = vmatprep.subr.mxu0 0.0
    %4027 = vmatpush1.xpose.msra.mxu0 %v3817
    %4028 = vmatprep.subr.mxu0 0.0
    %4029 = vmatpush1.xpose.msra.mxu0 %v3820
    %4030 = vmatprep.subr.mxu0 0.0
    %4031 = vmatpush1.xpose.msra.mxu0 %v3823
    %4032 = vmatprep.subr.mxu0 0.0
    %4033 = vmatpush1.xpose.msra.mxu0 %v3826
    %4034 = vmatprep.mubr.f32.mxu0 0.0
    %4035 = vmatmul.mubr.f32.gmra.mrb[0].mxu0 %v3538
    %v4036 = vpop.f32.mrb[0].mxu0
    %v4037 = vadd.f32 0.0, %v4036
    %v4038 = vpop.f32.mrb[0].mxu0
    %v4039 = vadd.f32 0.0, %v4038
    %4040 = vdwg.mxu0
    %v4041 = vlaneseq
    %v4042 = vshrl.u32 %v4041, 7
    %v4043 = vsub.s32 0, %v4042
    %v4044 = vrot.slane %v458, %v4043
    %v4045 = vmul.f32 %v3536, %v4044
    %vm4046 = vcmask 257024
    %v4047 = vsel %vm4046, %v4045, 0.0
    %4048 = vadd.xlane.f32.xlu0 %v4047
    %v4049 = vpop.xlane.xlu0 %4048
    %v4050 = vadd.f32 %v3895, %v4049
    %v4051 = vld [vmem:[%s1 + $0x4] sm:$0x1]
    %v4052 = vsub.f32 0.0, %v4051
    %v4053 = vmul.f32 %v4052, 0.16666667
    %v4054 = vmul.f32 %v4053, 1.442695
    %v4055 = vpow.pop %v4054
    %v4056 = vsub.f32 1.0, %v4055
    %v4057 = vmul.f32 %v4055, 0.16666667
    %v4058 = vsub.f32 0.0, %v4055
    %v4059 = vmul.f32 %v4058, 0.027777778
    %v4060 = vlaneseq
    %v4061 = vshrl.u32 %v4060, 7
    %v4062 = vsub.s32 0, %v4061
    %v4063 = vrot.slane %v4059, %v4062
    %v4064 = vmul.f32 %v4063, %v4050
    %v4065 = vmul.f32 %v4057, 2.0
    %v4066 = vlaneseq
    %v4067 = vshrl.u32 %v4066, 7
    %v4068 = vsub.s32 0, %v4067
    %v4069 = vrot.slane %v4065, %v4068
    %v4070 = vmul.f32 %v4069, %v3897
    %v4071 = vadd.f32 %v4064, %v4070
    %v4072 = vlaneseq
    %v4073 = vshrl.u32 %v4072, 7
    %v4074 = vsub.s32 0, %v4073
    %v4075 = vrot.slane %v4056, %v4074
    %v4076 = vmul.f32 %v4075, %v3968
    %v4077 = vadd.f32 %v4071, %v4076
    %v4078 = vlaneseq
    %v4079 = vshrl.u32 %v4078, 7
    %v4080 = vsub.s32 0, %v4079
    %v4081 = vrot.slane %v4057, %v4080
    %v4082 = vmul.f32 %v4081, %v3966
    %v4083 = vmul.f32 %v4075, %v4037
    %v4084 = vadd.f32 %v4082, %v4083
    %v4085 = vmul.f32 %v4075, %v4039
    %v4086 = vmul.f32 %v4081, %v4050
    %v4087 = vmul.f32 %v4075, %v3897
    %v4088 = vadd.f32 %v4086, %v4087
    %v4089 = vmul.f32 %v4075, %v3966
    %v4090 = vmul.f32 %v4084, 0.65
    %v4092 = vrot.slane %v4090, 2
    %v4094 = vadd.f32 %v4077, %v4092
    %v4095 = vmul.f32 %v4085, 0.35
    %v4096 = vadd.f32 %v4094, %v4095
    %v4097 = vmul.f32 %v4096, 1.0989012
    %v4098 = vrot.slane %v4090, 6
    %v4100 = vadd.f32 %v4085, %v4098
    %v4101 = vmul.f32 %v4077, 0.35
    %v4102 = vadd.f32 %v4100, %v4101
    %v4103 = vmul.f32 %v4102, 1.0989012
    %v4104 = vmul.f32 %v4089, 0.3
    %v4106 = vrot.slane %v4104, 2
    %v4108 = vadd.f32 %v4088, %v4106
    %v4109 = vmul.f32 %v4108, 1.0989012
    %v4110 = vld [vmem:[%s1] sm:$0x3]
    %v4111 = vadd.f32 %v4109, %v4110
    %v4113 = vrot.slane %v4088, 2
    %v4115 = vadd.f32 %v4089, %v4113
    %v4116 = vmul.f32 %v4115, 0.3846154
    %v4117 = vld [vmem:[%s1 + $0x2] sm:$0x3]
    %v4118 = vadd.f32 %v4116, %v4117
    %vm4119 = vcmp.lt.s32.totalorder %v54, 8
    %vm4120 = vcmp.ge.s32.totalorder %v54, 8
    %vm4121 = vcmp.lt.s32.totalorder %v54, 109
    %vm4122 = vmand %vm4120, %vm4121
    %v4123 = vmul.f32 %v4097, %v4097
    %v4124 = vmul.f32 %v4103, %v4103
    %v4126 = vrot.slane %v4124, 2
    %v4128 = vadd.f32 %v4123, %v4126
    %v4129 = vsel %vm4119, 1, 0
    %vm4130 = vcmp.eq.s32.totalorder %v4129, 1
    %v4131 = vsel %vm4130, %v4128, 0.0
    %v4132 = vsel %vm924, %v4131, 0.0
    %4133 = vadd.xlane.f32.xlu0 %v4132
    %v4134 = vpop.xlane.xlu0 %4133
    %v4135 = vrot.slane %v4134, 4
    %v4136 = vadd.f32 %v4134, %v4135
    %v4137 = vrot.slane %v4136, 2
    %v4138 = vadd.f32 %v4136, %v4137
    %v4139 = vrot.slane %v4138, 1
    %v4140 = vadd.f32 %v4138, %v4139
    %s4141 = vtos %v4140
    %v4142 = vstv %s4141
    %v4143 = vmul.f32 %v4111, %v4111
    %v4144 = vmul.f32 %v4118, %v4118
    %v4145 = vadd.f32 %v4143, %v4144
    %v4146 = vsel %vm4122, 1, 0
    %vm4147 = vcmp.eq.s32.totalorder %v4146, 1
    %v4148 = vsel %vm4147, %v4145, 0.0
    %v4149 = vsel %vm924, %v4148, 0.0
    %4150 = vadd.xlane.f32.xlu0 %v4149
    %v4151 = vpop.xlane.xlu0 %4150
    %v4152 = vrot.slane %v4151, 4
    %v4153 = vadd.f32 %v4151, %v4152
    %v4154 = vrot.slane %v4153, 2
    %v4155 = vadd.f32 %v4153, %v4154
    %v4156 = vrot.slane %v4155, 1
    %v4157 = vadd.f32 %v4155, %v4156
    %s4158 = vtos %v4157
    %v4159 = vstv %s4158
    %v4160 = vmul.f32 %v4142, 0.0625
    %v4161 = vmul.f32 %v4159, 0.004950495
    %v4162 = vadd.f32 %v4160, %v4161
    %vm4163 = vcmask 0
    %4164 = vst.msk [vmem:[#allocation5] sm:$0x1] %vm4163, %v4162
    // Predicated region
    $region50: #{tpu_custom_call.1} parent=1 // pred_check
      _
    $region51: #{tpu_custom_call.1} parent=1 // pred_check_branch
      %4166 = sbr.rel (0) target = $region53
    $region52: #{tpu_custom_call.1} parent=1 // pred_region
      %s4168 = ssub.s32 16, 16
      %4169 = vsyncadd [#allocation3], %s4168
      %s4171 = sshll.u32 [#allocation5], 4
      %s4172 = int_to_ptr.vmem [resolvable:$true] %s4171
      %4174 = dma.vmem_to_hbm [thread:$0]  %s4172, 16, %s11, [#allocation3]
    $region53: #{tpu_custom_call.1} parent=1 // pred_fallthru
      _
    // Predicated region
    $region54: #{tpu_custom_call.1} parent=1 // pred_check
      _
    $region55: #{tpu_custom_call.1} parent=1 // pred_check_branch
      %4176 = sbr.rel (0) target = $region57
    $region56: #{tpu_custom_call.1} parent=1 // pred_region
      %4177 = dma.done [#allocation3], 16
    $region57: #{tpu_custom_call.1} parent=1 // pred_fallthru
      _
    %4178 = vsyncpa [#allocation3], 1
    %4179 = vsyncpa [#allocation4], 1

</llo_original>
